<compile_context>
chip_gen: v7x
topology: tpu7x:2x2x1
jax: 0.10.0
libtpu: 0.0.40
codegen_flags: <defaults>
</compile_context>

<pallas_src>
import functools

import jax
import jax.numpy as jnp
import numpy as np
from jax.experimental import pallas as pl
from jax.experimental.pallas import tpu as pltpu


def _round_up(x, m):
    return ((x + m - 1) // m) * m


def _cdiv(a, b):
    return (a + b - 1) // b


def _ensemble_kernel(slab_ref, mask_ref, wconv_ref, bconv_ref, wfc_ref,
                     bfc_ref, out_ref, feat_ref, *, n_real_classes, batch,
                     n_h_tiles, h_tile, width, hw):
    """grid = (net, h_tile, batch); net parallel, (h_tile, batch) accumulate."""
    t = pl.program_id(1)
    b = pl.program_id(2)
    wp2 = width + 2
    rows = h_tile * wp2                      # over-computed width (W+2) rows
    hpad = wconv_ref.shape[-1]

    @pl.when((t == 0) & (b == 0))
    def _():
        feat_ref[...] = jnp.zeros_like(feat_ref)

    # In-kernel im2col: the slab holds the zero-padded image rows of this
    # (batch, h-tile), flattened as (slab_rows, C).  For tap (dy, dx) the
    # needed inputs of all output positions form ONE contiguous row window at
    # static offset dy*(W+2)+dx, so the 3x3 'same' conv is nine accumulating
    # (rows, C) @ (C, hpad) MXU matmuls -- no (rows, 9C) patch tensor in HBM.
    conv = jnp.zeros((rows, hpad), jnp.float32)
    for k in range(9):
        dy, dx = divmod(k, 3)
        off = dy * wp2 + dx
        xk = slab_ref[0, 0, off:off + rows, :]            # (rows, C) bf16
        conv = conv + jnp.dot(xk, wconv_ref[0, k],
                              preferred_element_type=jnp.float32)
    conv = jnp.maximum(conv + bconv_ref[0], 0.0)          # bias + ReLU (f32)

    # Partial global-average pool as an MXU matmul against a (1, rows)
    # validity mask (1.0 where x < W and y < H, 0.0 on the over-computed /
    # padded positions).  Accumulated per batch row in VMEM scratch.
    pooled = jnp.dot(mask_ref[0], conv, preferred_element_type=jnp.float32)
    feat_ref[pl.ds(b, 1), :] = feat_ref[pl.ds(b, 1), :] + pooled

    @pl.when((t == n_h_tiles - 1) & (b == batch - 1))
    def _():
        feat = feat_ref[...] * jnp.float32(1.0 / hw)      # exact mean scale
        logits = jnp.dot(feat, wfc_ref[0],
                         preferred_element_type=jnp.float32) + bfc_ref[0]
        if n_real_classes == 2:
            # Sigmoid path; padded class lanes carry a finite -30 bias so
            # exp(-logits) stays finite and sigmoid(-30) ~ 0.
            probs = pl.reciprocal(1.0 + jnp.exp(-logits), approx=True)
        else:
            # Softmax over padded class lanes; -1e30 bias -> exp exactly 0.
            m = jnp.max(logits, axis=-1, keepdims=True)
            e = jnp.exp(logits - m)
            probs = e * pl.reciprocal(jnp.sum(e, axis=-1, keepdims=True),
                                      approx=True)
        out_ref[0] = probs.astype(out_ref.dtype)


def ensemble_forward(xs, wconv, bconv, wfc, bfc, *, n_classes,
                     conv_dtype=jnp.bfloat16, vmem_fraction=0.4,
                     h_tile_override=None):
    """EnsembleNet.forward.

    xs:    length-N list of (B, C, H, W) arrays; entries may be None
           (missing input -> that member is skipped, as in the module).
    wconv: (N, 9*C, hidden)        bconv: (N, hidden)
    wfc:   (N, hidden, n_classes)  bfc:   (N, n_classes)
    """
    present = [i for i, x in enumerate(xs) if x is not None]
    if not present:
        # Mirrors sum([]) / len([]) blowing up in the torch module.
        raise ValueError("EnsembleNet.forward needs at least one present input")
    for i in present:
        if xs[i].shape != xs[present[0]].shape:
            raise ValueError("all present inputs must share one shape here")

    batch, chan, height, width = xs[present[0]].shape
    hw = height * width
    hidden = wconv.shape[-1]
    hpad = _round_up(hidden, 128)
    cpad = _round_up(n_classes, 128)
    wp2 = width + 2
    num_present = len(present)

    # ---- VMEM-aware h-tile sizing (per-chip via get_tpu_info) --------------
    lanes = lambda n: _round_up(max(int(n), 1), 128)   # minor dim lane padding
    subl = lambda n: _round_up(max(int(n), 1), 8)
    in_item = jnp.dtype(conv_dtype).itemsize
    try:
        vmem_cap = int(pltpu.get_tpu_info().vmem_capacity_bytes)
    except Exception:
        vmem_cap = 64 * 1024 * 1024        # v7x per-TensorCore floor
    budget = int(vmem_cap * vmem_fraction)

    fixed_bytes = (
        2 * 9 * subl(chan) * lanes(hpad) * in_item     # conv taps (x2 buffers)
        + 2 * subl(hpad) * lanes(cpad) * 4             # fc weights (x2)
        + 2 * subl(1) * lanes(cpad) * 4                # fc bias (x2)
        + 2 * subl(1) * lanes(hpad) * 4                # conv bias (x2)
        + 2 * subl(batch) * lanes(cpad) * 4            # output block (x2)
        + subl(batch) * lanes(hpad) * 4                # feature accumulator
        + 1 * 1024 * 1024)                             # Mosaic scratch headroom
    per_row_bytes = wp2 * (
        2 * lanes(chan) * in_item        # slab tile, double buffered
        + 2 * lanes(chan) * in_item      # in-flight shifted tap slices
        + lanes(hpad) * 4                # f32 conv accumulator
        + 2 * 4)                         # pooling mask row (x2 buffers)

    h_tile = max(1, min((budget - fixed_bytes) // per_row_bytes, height))
    if h_tile_override is not None:
        h_tile = max(1, min(int(h_tile_override), height))
    n_ht = _cdiv(height, h_tile)
    h_tile = _cdiv(height, n_ht)                        # rebalance tiles
    rows = h_tile * wp2
    slab_rows = _round_up((h_tile + 2) * wp2 + 2, 8)    # +2 covers tap overshoot
    est_bytes = fixed_bytes + per_row_bytes * (h_tile + 2)
    vmem_limit = int(min(vmem_cap * 0.9,
                         max(2 * est_bytes, 32 * 1024 * 1024)))

    # ---- Flat zero-padded row slabs (halo rows duplicated per h-tile) ------
    hpad_rows = n_ht * h_tile
    slab_list = []
    for i in present:
        x_nhwc = jnp.transpose(xs[i], (0, 2, 3, 1)).astype(conv_dtype)
        xp = jnp.pad(x_nhwc,
                     ((0, 0), (1, 1 + hpad_rows - height), (1, 1), (0, 0)))
        tiles = []
        for t in range(n_ht):
            sl = xp[:, t * h_tile:t * h_tile + h_tile + 2]   # (B, ht+2, wp2, C)
            sl = sl.reshape(batch, (h_tile + 2) * wp2, chan)
            sl = jnp.pad(sl, ((0, 0), (0, slab_rows - (h_tile + 2) * wp2),
                              (0, 0)))
            tiles.append(sl)
        slab_list.append(jnp.stack(tiles, axis=1))           # (B, n_ht, S, C)
    slabs = jnp.stack(slab_list, axis=0)                      # (Np, B, n_ht, S, C)
    slabs = slabs.reshape(num_present, batch * n_ht, slab_rows, chan)

    # ---- Tiny per-tile pooling mask (replaces the old (B, B*HW) matrix) ----
    yy = np.arange(h_tile)[:, None]
    xx = np.arange(wp2)[None, :]
    mask_np = np.stack(
        [((xx < width) & (yy + t * h_tile < height)).astype(np.float32)
         .reshape(1, rows) for t in range(n_ht)], axis=0)
    pool_mask = jnp.asarray(mask_np)                           # (n_ht, 1, rows)

    # ---- Parameters for present members only, lane-padded ------------------
    wconv_p = jnp.stack([wconv[i] for i in present]).astype(conv_dtype)
    wconv_p = jnp.pad(wconv_p, ((0, 0), (0, 0), (0, hpad - hidden)))
    wconv_p = wconv_p.reshape(num_present, 9, chan, hpad)      # per-tap weights
    bconv_p = jnp.stack([bconv[i] for i in present]).astype(jnp.float32)
    bconv_p = jnp.pad(bconv_p, ((0, 0), (0, hpad - hidden)))[:, None, :]
    wfc_p = jnp.stack([wfc[i] for i in present]).astype(jnp.float32)
    wfc_p = jnp.pad(wfc_p, ((0, 0), (0, hpad - hidden), (0, cpad - n_classes)))
    pad_bias = -30.0 if n_classes == 2 else -1e30   # finite on sigmoid path
    bfc_p = jnp.stack([bfc[i] for i in present]).astype(jnp.float32)
    bfc_p = jnp.pad(bfc_p, ((0, 0), (0, cpad - n_classes)),
                    constant_values=pad_bias)[:, None, :]

    kernel = functools.partial(_ensemble_kernel,
                               n_real_classes=int(n_classes), batch=batch,
                               n_h_tiles=n_ht, h_tile=h_tile, width=width,
                               hw=hw)

    grid_spec = pltpu.PrefetchScalarGridSpec(
        num_scalar_prefetch=0,
        grid=(num_present, n_ht, batch),
        in_specs=[
            pl.BlockSpec((1, 1, slab_rows, chan),
                         lambda n, t, b: (n, b * n_ht + t, 0, 0)),
            pl.BlockSpec((1, 1, rows), lambda n, t, b: (t, 0, 0)),
            pl.BlockSpec((1, 9, chan, hpad), lambda n, t, b: (n, 0, 0, 0)),
            pl.BlockSpec((1, 1, hpad), lambda n, t, b: (n, 0, 0)),
            pl.BlockSpec((1, hpad, cpad), lambda n, t, b: (n, 0, 0)),
            pl.BlockSpec((1, 1, cpad), lambda n, t, b: (n, 0, 0)),
        ],
        out_specs=pl.BlockSpec((1, batch, cpad), lambda n, t, b: (n, 0, 0)),
        scratch_shapes=[pltpu.VMEM((batch, hpad), jnp.float32)],
    )

    per_net = pl.pallas_call(
        kernel,
        out_shape=jax.ShapeDtypeStruct((num_present, batch, cpad), jnp.float32),
        grid_spec=grid_spec,
        compiler_params=pltpu.CompilerParams(
            dimension_semantics=("parallel", "arbitrary", "arbitrary"),
            vmem_limit_bytes=vmem_limit),
    )(slabs, pool_mask, wconv_p, bconv_p, wfc_p, bfc_p)

    # Average the present members' activated predictions (== sum / len since
    # absent members were compacted away) and drop padded class lanes.
    return jnp.mean(per_net[:, :, :n_classes], axis=0)


# --------------------------- pure-JAX reference -----------------------------
def _im2col_3x3(x_nhwc):
    b, h, w, c = x_nhwc.shape
    xp = jnp.pad(x_nhwc, ((0, 0), (1, 1), (1, 1), (0, 0)))
    cols = []
    for dy in range(3):
        for dx in range(3):
            cols.append(xp[:, dy:dy + h, dx:dx + w, :])
    return jnp.concatenate(cols, axis=-1)


def reference_forward(xs, wconv, bconv, wfc, bfc, n_classes):
    """Pure-JAX f32 reference mirroring EnsembleNet.forward semantics."""
    preds = []
    for i, x in enumerate(xs):
        if x is None:
            continue
        xh = jnp.transpose(x, (0, 2, 3, 1))
        b, h, w, c = xh.shape
        p = _im2col_3x3(xh).reshape(b * h * w, 9 * c)
        conv = jnp.maximum(p @ wconv[i] + bconv[i][None, :], 0.0)
        feat = conv.reshape(b, h * w, -1).mean(axis=1)
        logits = feat @ wfc[i] + bfc[i][None, :]
        if n_classes == 2:
            preds.append(jax.nn.sigmoid(logits))
        else:
            preds.append(jax.nn.softmax(logits, axis=-1))
    return sum(preds) / len(preds)


if __name__ == "__main__":
    NUM_NETS = 3
    B, C, H, W = 2, 4, 16, 16
    HIDDEN = 32
    N_CLASSES = 3                                              # softmax branch

    key = jax.random.PRNGKey(0)
    kx, kwc, kbc, kwf, kbf = jax.random.split(key, 5)

    xs_all = jax.random.normal(kx, (NUM_NETS, B, C, H, W), dtype=jnp.float32)
    # Third member's input is missing (None), as the module supports.
    xs = [xs_all[0], xs_all[1], None]

    wconv = 0.1 * jax.random.normal(kwc, (NUM_NETS, 9 * C, HIDDEN),
                                    dtype=jnp.float32)
    bconv = 0.1 * jax.random.normal(kbc, (NUM_NETS, HIDDEN), dtype=jnp.float32)
    wfc = 0.1 * jax.random.normal(kwf, (NUM_NETS, HIDDEN, N_CLASSES),
                                  dtype=jnp.float32)
    bfc = 0.1 * jax.random.normal(kbf, (NUM_NETS, N_CLASSES),
                                  dtype=jnp.float32)

    # Softmax branch, one missing input, auto h-tile (whole image per step).
    out = jax.block_until_ready(
        ensemble_forward(xs, wconv, bconv, wfc, bfc, n_classes=N_CLASSES))
    ref = reference_forward(xs, wconv, bconv, wfc, bfc, N_CLASSES)
    np.testing.assert_allclose(np.asarray(out), np.asarray(ref),
                               rtol=1e-2, atol=1e-2)

    # Same config with a forced small h-tile: exercises the multi-tile
    # reduction and the y < H masking of the last, partially valid tile.
    out_t = jax.block_until_ready(
        ensemble_forward(xs, wconv, bconv, wfc, bfc, n_classes=N_CLASSES,
                         h_tile_override=6))
    np.testing.assert_allclose(np.asarray(out_t), np.asarray(ref),
                               rtol=1e-2, atol=1e-2)

    # Sigmoid branch (n_classes == 2), all inputs present.
    wfc2 = 0.1 * jax.random.normal(kwf, (NUM_NETS, HIDDEN, 2),
                                   dtype=jnp.float32)
    bfc2 = 0.1 * jax.random.normal(kbf, (NUM_NETS, 2), dtype=jnp.float32)
    xs2 = [xs_all[i] for i in range(NUM_NETS)]
    out2 = jax.block_until_ready(
        ensemble_forward(xs2, wconv, bconv, wfc2, bfc2, n_classes=2))
    ref2 = reference_forward(xs2, wconv, bconv, wfc2, bfc2, 2)
    np.testing.assert_allclose(np.asarray(out2), np.asarray(ref2),
                               rtol=1e-2, atol=1e-2)

    print("KERNEL_OK")
</pallas_src>

<mosaic_0001>
module attributes {stable_mosaic.version = 11 : i64} {
  func.func @_ensemble_kernel(%arg0: i32, %arg1: i32, %arg2: i32, %arg3: memref<1x1x328x4xbf16, #tpu.memory_space<vmem>>, %arg4: memref<1x1x288xf32, #tpu.memory_space<vmem>>, %arg5: memref<1x9x4x128xbf16, #tpu.memory_space<vmem>>, %arg6: memref<1x1x128xf32, #tpu.memory_space<vmem>>, %arg7: memref<1x128x128xf32, #tpu.memory_space<vmem>>, %arg8: memref<1x1x128xf32, #tpu.memory_space<vmem>>, %arg9: memref<1x2x128xf32, #tpu.memory_space<vmem>>, %arg10: memref<2x128xf32, #tpu.memory_space<vmem>>) attributes {dimension_semantics = [#tpu.dimension_semantics<parallel>, #tpu.dimension_semantics<arbitrary>, #tpu.dimension_semantics<arbitrary>], iteration_bounds = array<i64: 2, 1, 2>, scalar_prefetch = 0 : i64, scratch_operands = 1 : i64, tpu.core_type = #tpu.core_type<tc>, window_params = [{transform_indices = @transform_0, window_bounds = array<i64: 1, 1, 328, 4>}, {transform_indices = @transform_1, window_bounds = array<i64: 1, 1, 288>}, {transform_indices = @transform_2, window_bounds = array<i64: 1, 9, 4, 128>}, {transform_indices = @transform_3, window_bounds = array<i64: 1, 1, 128>}, {transform_indices = @transform_4, window_bounds = array<i64: 1, 128, 128>}, {transform_indices = @transform_5, window_bounds = array<i64: 1, 1, 128>}, {transform_indices = @transform_6, window_bounds = array<i64: 1, 2, 128>}]} {
    %c0_i32 = arith.constant 0 : i32
    %0 = arith.cmpi eq, %arg1, %c0_i32 : i32
    %c0_i32_0 = arith.constant 0 : i32
    %1 = arith.cmpi eq, %arg2, %c0_i32_0 : i32
    %2 = arith.andi %0, %1 : i1
    %3 = arith.extui %2 : i1 to i32
    %c0_i32_1 = arith.constant 0 : i32
    %4 = arith.cmpi ne, %3, %c0_i32_1 : i32
    scf.if %4 {
      %cst_80 = arith.constant 0.000000e+00 : f32
      %79 = vector.broadcast %cst_80 : f32 to vector<2x128xf32>
      %c0_81 = arith.constant 0 : index
      %c0_82 = arith.constant 0 : index
      %80 = vector.load %arg10[%c0_81, %c0_82] : memref<2x128xf32, #tpu.memory_space<vmem>>, vector<2x128xf32>
      tpu.vector_store %arg10[%c0_81, %c0_82], %79 {strides = array<i32>} : memref<2x128xf32, #tpu.memory_space<vmem>>, vector<2x128xf32>,
    } else {
    }
    %cst = arith.constant 0.000000e+00 : f32
    %5 = vector.broadcast %cst : f32 to vector<288x128xf32>
    %c0 = arith.constant 0 : index
    %c0_2 = arith.constant 0 : index
    %c0_3 = arith.constant 0 : index
    %c0_4 = arith.constant 0 : index
    %6 = vector.load %arg3[%c0, %c0_2, %c0_3, %c0_4] : memref<1x1x328x4xbf16, #tpu.memory_space<vmem>>, vector<1x1x288x4xbf16>
    %7 = vector.shape_cast %6 : vector<1x1x288x4xbf16> to vector<288x4xbf16>
    %c0_5 = arith.constant 0 : index
    %c0_6 = arith.constant 0 : index
    %c0_7 = arith.constant 0 : index
    %c0_8 = arith.constant 0 : index
    %8 = vector.load %arg5[%c0_5, %c0_6, %c0_7, %c0_8] : memref<1x9x4x128xbf16, #tpu.memory_space<vmem>>, vector<1x1x4x128xbf16>
    %9 = vector.shape_cast %8 : vector<1x1x4x128xbf16> to vector<4x128xbf16>
    %cst_9 = arith.constant dense<0.000000e+00> : vector<288x128xf32>
    %10 = tpu.matmul %7, %9, %cst_9 {dimension_numbers = #tpu.dot_dimension_numbers<[1], [0], [0], [1], [0, 0, 1, 1], [], []>} : vector<288x4xbf16>, vector<4x128xbf16>, vector<288x128xf32> -> vector<288x128xf32>
    %11 = arith.addf %5, %10 : vector<288x128xf32>
    %c0_10 = arith.constant 0 : index
    %c0_11 = arith.constant 0 : index
    %c1 = arith.constant 1 : index
    %c0_12 = arith.constant 0 : index
    %12 = vector.load %arg3[%c0_10, %c0_11, %c1, %c0_12] : memref<1x1x328x4xbf16, #tpu.memory_space<vmem>>, vector<1x1x288x4xbf16>
    %13 = vector.shape_cast %12 : vector<1x1x288x4xbf16> to vector<288x4xbf16>
    %c0_13 = arith.constant 0 : index
    %c1_14 = arith.constant 1 : index
    %c0_15 = arith.constant 0 : index
    %c0_16 = arith.constant 0 : index
    %14 = vector.load %arg5[%c0_13, %c1_14, %c0_15, %c0_16] : memref<1x9x4x128xbf16, #tpu.memory_space<vmem>>, vector<1x1x4x128xbf16>
    %15 = vector.shape_cast %14 : vector<1x1x4x128xbf16> to vector<4x128xbf16>
    %cst_17 = arith.constant dense<0.000000e+00> : vector<288x128xf32>
    %16 = tpu.matmul %13, %15, %cst_17 {dimension_numbers = #tpu.dot_dimension_numbers<[1], [0], [0], [1], [0, 0, 1, 1], [], []>} : vector<288x4xbf16>, vector<4x128xbf16>, vector<288x128xf32> -> vector<288x128xf32>
    %17 = arith.addf %11, %16 : vector<288x128xf32>
    %c0_18 = arith.constant 0 : index
    %c0_19 = arith.constant 0 : index
    %c2 = arith.constant 2 : index
    %c0_20 = arith.constant 0 : index
    %18 = vector.load %arg3[%c0_18, %c0_19, %c2, %c0_20] : memref<1x1x328x4xbf16, #tpu.memory_space<vmem>>, vector<1x1x288x4xbf16>
    %19 = vector.shape_cast %18 : vector<1x1x288x4xbf16> to vector<288x4xbf16>
    %c0_21 = arith.constant 0 : index
    %c2_22 = arith.constant 2 : index
    %c0_23 = arith.constant 0 : index
    %c0_24 = arith.constant 0 : index
    %20 = vector.load %arg5[%c0_21, %c2_22, %c0_23, %c0_24] : memref<1x9x4x128xbf16, #tpu.memory_space<vmem>>, vector<1x1x4x128xbf16>
    %21 = vector.shape_cast %20 : vector<1x1x4x128xbf16> to vector<4x128xbf16>
    %cst_25 = arith.constant dense<0.000000e+00> : vector<288x128xf32>
    %22 = tpu.matmul %19, %21, %cst_25 {dimension_numbers = #tpu.dot_dimension_numbers<[1], [0], [0], [1], [0, 0, 1, 1], [], []>} : vector<288x4xbf16>, vector<4x128xbf16>, vector<288x128xf32> -> vector<288x128xf32>
    %23 = arith.addf %17, %22 : vector<288x128xf32>
    %c0_26 = arith.constant 0 : index
    %c0_27 = arith.constant 0 : index
    %c18 = arith.constant 18 : index
    %c0_28 = arith.constant 0 : index
    %24 = vector.load %arg3[%c0_26, %c0_27, %c18, %c0_28] : memref<1x1x328x4xbf16, #tpu.memory_space<vmem>>, vector<1x1x288x4xbf16>
    %25 = vector.shape_cast %24 : vector<1x1x288x4xbf16> to vector<288x4xbf16>
    %c0_29 = arith.constant 0 : index
    %c3 = arith.constant 3 : index
    %c0_30 = arith.constant 0 : index
    %c0_31 = arith.constant 0 : index
    %26 = vector.load %arg5[%c0_29, %c3, %c0_30, %c0_31] : memref<1x9x4x128xbf16, #tpu.memory_space<vmem>>, vector<1x1x4x128xbf16>
    %27 = vector.shape_cast %26 : vector<1x1x4x128xbf16> to vector<4x128xbf16>
    %cst_32 = arith.constant dense<0.000000e+00> : vector<288x128xf32>
    %28 = tpu.matmul %25, %27, %cst_32 {dimension_numbers = #tpu.dot_dimension_numbers<[1], [0], [0], [1], [0, 0, 1, 1], [], []>} : vector<288x4xbf16>, vector<4x128xbf16>, vector<288x128xf32> -> vector<288x128xf32>
    %29 = arith.addf %23, %28 : vector<288x128xf32>
    %c0_33 = arith.constant 0 : index
    %c0_34 = arith.constant 0 : index
    %c19 = arith.constant 19 : index
    %c0_35 = arith.constant 0 : index
    %30 = vector.load %arg3[%c0_33, %c0_34, %c19, %c0_35] : memref<1x1x328x4xbf16, #tpu.memory_space<vmem>>, vector<1x1x288x4xbf16>
    %31 = vector.shape_cast %30 : vector<1x1x288x4xbf16> to vector<288x4xbf16>
    %c0_36 = arith.constant 0 : index
    %c4 = arith.constant 4 : index
    %c0_37 = arith.constant 0 : index
    %c0_38 = arith.constant 0 : index
    %32 = vector.load %arg5[%c0_36, %c4, %c0_37, %c0_38] : memref<1x9x4x128xbf16, #tpu.memory_space<vmem>>, vector<1x1x4x128xbf16>
    %33 = vector.shape_cast %32 : vector<1x1x4x128xbf16> to vector<4x128xbf16>
    %cst_39 = arith.constant dense<0.000000e+00> : vector<288x128xf32>
    %34 = tpu.matmul %31, %33, %cst_39 {dimension_numbers = #tpu.dot_dimension_numbers<[1], [0], [0], [1], [0, 0, 1, 1], [], []>} : vector<288x4xbf16>, vector<4x128xbf16>, vector<288x128xf32> -> vector<288x128xf32>
    %35 = arith.addf %29, %34 : vector<288x128xf32>
    %c0_40 = arith.constant 0 : index
    %c0_41 = arith.constant 0 : index
    %c20 = arith.constant 20 : index
    %c0_42 = arith.constant 0 : index
    %36 = vector.load %arg3[%c0_40, %c0_41, %c20, %c0_42] : memref<1x1x328x4xbf16, #tpu.memory_space<vmem>>, vector<1x1x288x4xbf16>
    %37 = vector.shape_cast %36 : vector<1x1x288x4xbf16> to vector<288x4xbf16>
    %c0_43 = arith.constant 0 : index
    %c5 = arith.constant 5 : index
    %c0_44 = arith.constant 0 : index
    %c0_45 = arith.constant 0 : index
    %38 = vector.load %arg5[%c0_43, %c5, %c0_44, %c0_45] : memref<1x9x4x128xbf16, #tpu.memory_space<vmem>>, vector<1x1x4x128xbf16>
    %39 = vector.shape_cast %38 : vector<1x1x4x128xbf16> to vector<4x128xbf16>
    %cst_46 = arith.constant dense<0.000000e+00> : vector<288x128xf32>
    %40 = tpu.matmul %37, %39, %cst_46 {dimension_numbers = #tpu.dot_dimension_numbers<[1], [0], [0], [1], [0, 0, 1, 1], [], []>} : vector<288x4xbf16>, vector<4x128xbf16>, vector<288x128xf32> -> vector<288x128xf32>
    %41 = arith.addf %35, %40 : vector<288x128xf32>
    %c0_47 = arith.constant 0 : index
    %c0_48 = arith.constant 0 : index
    %c36 = arith.constant 36 : index
    %c0_49 = arith.constant 0 : index
    %42 = vector.load %arg3[%c0_47, %c0_48, %c36, %c0_49] : memref<1x1x328x4xbf16, #tpu.memory_space<vmem>>, vector<1x1x288x4xbf16>
    %43 = vector.shape_cast %42 : vector<1x1x288x4xbf16> to vector<288x4xbf16>
    %c0_50 = arith.constant 0 : index
    %c6 = arith.constant 6 : index
    %c0_51 = arith.constant 0 : index
    %c0_52 = arith.constant 0 : index
    %44 = vector.load %arg5[%c0_50, %c6, %c0_51, %c0_52] : memref<1x9x4x128xbf16, #tpu.memory_space<vmem>>, vector<1x1x4x128xbf16>
    %45 = vector.shape_cast %44 : vector<1x1x4x128xbf16> to vector<4x128xbf16>
    %cst_53 = arith.constant dense<0.000000e+00> : vector<288x128xf32>
    %46 = tpu.matmul %43, %45, %cst_53 {dimension_numbers = #tpu.dot_dimension_numbers<[1], [0], [0], [1], [0, 0, 1, 1], [], []>} : vector<288x4xbf16>, vector<4x128xbf16>, vector<288x128xf32> -> vector<288x128xf32>
    %47 = arith.addf %41, %46 : vector<288x128xf32>
    %c0_54 = arith.constant 0 : index
    %c0_55 = arith.constant 0 : index
    %c37 = arith.constant 37 : index
    %c0_56 = arith.constant 0 : index
    %48 = vector.load %arg3[%c0_54, %c0_55, %c37, %c0_56] : memref<1x1x328x4xbf16, #tpu.memory_space<vmem>>, vector<1x1x288x4xbf16>
    %49 = vector.shape_cast %48 : vector<1x1x288x4xbf16> to vector<288x4xbf16>
    %c0_57 = arith.constant 0 : index
    %c7 = arith.constant 7 : index
    %c0_58 = arith.constant 0 : index
    %c0_59 = arith.constant 0 : index
    %50 = vector.load %arg5[%c0_57, %c7, %c0_58, %c0_59] : memref<1x9x4x128xbf16, #tpu.memory_space<vmem>>, vector<1x1x4x128xbf16>
    %51 = vector.shape_cast %50 : vector<1x1x4x128xbf16> to vector<4x128xbf16>
    %cst_60 = arith.constant dense<0.000000e+00> : vector<288x128xf32>
    %52 = tpu.matmul %49, %51, %cst_60 {dimension_numbers = #tpu.dot_dimension_numbers<[1], [0], [0], [1], [0, 0, 1, 1], [], []>} : vector<288x4xbf16>, vector<4x128xbf16>, vector<288x128xf32> -> vector<288x128xf32>
    %53 = arith.addf %47, %52 : vector<288x128xf32>
    %c0_61 = arith.constant 0 : index
    %c0_62 = arith.constant 0 : index
    %c38 = arith.constant 38 : index
    %c0_63 = arith.constant 0 : index
    %54 = vector.load %arg3[%c0_61, %c0_62, %c38, %c0_63] : memref<1x1x328x4xbf16, #tpu.memory_space<vmem>>, vector<1x1x288x4xbf16>
    %55 = vector.shape_cast %54 : vector<1x1x288x4xbf16> to vector<288x4xbf16>
    %c0_64 = arith.constant 0 : index
    %c8 = arith.constant 8 : index
    %c0_65 = arith.constant 0 : index
    %c0_66 = arith.constant 0 : index
    %56 = vector.load %arg5[%c0_64, %c8, %c0_65, %c0_66] : memref<1x9x4x128xbf16, #tpu.memory_space<vmem>>, vector<1x1x4x128xbf16>
    %57 = vector.shape_cast %56 : vector<1x1x4x128xbf16> to vector<4x128xbf16>
    %cst_67 = arith.constant dense<0.000000e+00> : vector<288x128xf32>
    %58 = tpu.matmul %55, %57, %cst_67 {dimension_numbers = #tpu.dot_dimension_numbers<[1], [0], [0], [1], [0, 0, 1, 1], [], []>} : vector<288x4xbf16>, vector<4x128xbf16>, vector<288x128xf32> -> vector<288x128xf32>
    %59 = arith.addf %53, %58 : vector<288x128xf32>
    %c0_68 = arith.constant 0 : index
    %c0_69 = arith.constant 0 : index
    %c0_70 = arith.constant 0 : index
    %60 = vector.load %arg6[%c0_68, %c0_69, %c0_70] : memref<1x1x128xf32, #tpu.memory_space<vmem>>, vector<1x1x128xf32>
    %61 = vector.shape_cast %60 : vector<1x1x128xf32> to vector<1x128xf32>
    %62 = vector.broadcast %61 : vector<1x128xf32> to vector<288x128xf32>
    %63 = arith.addf %59, %62 : vector<288x128xf32>
    %cst_71 = arith.constant 0.000000e+00 : f32
    %64 = vector.broadcast %cst_71 : f32 to vector<288x128xf32>
    %65 = arith.maximumf %63, %64 : vector<288x128xf32>
    %c0_72 = arith.constant 0 : index
    %c0_73 = arith.constant 0 : index
    %c0_74 = arith.constant 0 : index
    %66 = vector.load %arg4[%c0_72, %c0_73, %c0_74] : memref<1x1x288xf32, #tpu.memory_space<vmem>>, vector<1x1x288xf32>
    %67 = vector.shape_cast %66 : vector<1x1x288xf32> to vector<1x288xf32>
    %cst_75 = arith.constant dense<0.000000e+00> : vector<1x128xf32>
    %68 = tpu.matmul %67, %65, %cst_75 {dimension_numbers = #tpu.dot_dimension_numbers<[1], [0], [0], [1], [0, 0, 1, 1], [], []>} : vector<1x288xf32>, vector<288x128xf32>, vector<1x128xf32> -> vector<1x128xf32>
    %69 = arith.index_cast %arg2 : i32 to index
    %c0_76 = arith.constant 0 : index
    %70 = vector.load %arg10[%69, %c0_76] : memref<2x128xf32, #tpu.memory_space<vmem>>, vector<1x128xf32>
    %71 = arith.addf %70, %68 : vector<1x128xf32>
    %72 = arith.index_cast %arg2 : i32 to index
    %c0_77 = arith.constant 0 : index
    %73 = vector.load %arg10[%72, %c0_77] : memref<2x128xf32, #tpu.memory_space<vmem>>, vector<1x128xf32>
    tpu.vector_store %arg10[%72, %c0_77], %71 {strides = array<i32>} : memref<2x128xf32, #tpu.memory_space<vmem>>, vector<1x128xf32>,
    %c0_i32_78 = arith.constant 0 : i32
    %74 = arith.cmpi eq, %arg1, %c0_i32_78 : i32
    %c1_i32 = arith.constant 1 : i32
    %75 = arith.cmpi eq, %arg2, %c1_i32 : i32
    %76 = arith.andi %74, %75 : i1
    %77 = arith.extui %76 : i1 to i32
    %c0_i32_79 = arith.constant 0 : i32
    %78 = arith.cmpi ne, %77, %c0_i32_79 : i32
    scf.if %78 {
      %c0_80 = arith.constant 0 : index
      %c0_81 = arith.constant 0 : index
      %79 = vector.load %arg10[%c0_80, %c0_81] : memref<2x128xf32, #tpu.memory_space<vmem>>, vector<2x128xf32>
      %cst_82 = arith.constant 3.906250e-03 : f32
      %80 = vector.broadcast %cst_82 : f32 to vector<2x128xf32>
      %81 = arith.mulf %79, %80 : vector<2x128xf32>
      %c0_83 = arith.constant 0 : index
      %c0_84 = arith.constant 0 : index
      %c0_85 = arith.constant 0 : index
      %82 = vector.load %arg7[%c0_83, %c0_84, %c0_85] : memref<1x128x128xf32, #tpu.memory_space<vmem>>, vector<1x128x128xf32>
      %83 = vector.shape_cast %82 : vector<1x128x128xf32> to vector<128x128xf32>
      %cst_86 = arith.constant dense<0.000000e+00> : vector<2x128xf32>
      %84 = tpu.matmul %81, %83, %cst_86 {dimension_numbers = #tpu.dot_dimension_numbers<[1], [0], [0], [1], [0, 0, 1, 1], [], []>} : vector<2x128xf32>, vector<128x128xf32>, vector<2x128xf32> -> vector<2x128xf32>
      %c0_87 = arith.constant 0 : index
      %c0_88 = arith.constant 0 : index
      %c0_89 = arith.constant 0 : index
      %85 = vector.load %arg8[%c0_87, %c0_88, %c0_89] : memref<1x1x128xf32, #tpu.memory_space<vmem>>, vector<1x1x128xf32>
      %86 = vector.shape_cast %85 : vector<1x1x128xf32> to vector<1x128xf32>
      %87 = vector.broadcast %86 : vector<1x128xf32> to vector<2x128xf32>
      %88 = arith.addf %84, %87 : vector<2x128xf32>
      %cst_90 = arith.constant dense<0xFF800000> : vector<2xf32>
      %89 = vector.multi_reduction <maximumf>, %88, %cst_90 [1] : vector<2x128xf32> to vector<2xf32>
      %90 = vector.shape_cast %89 : vector<2xf32> to vector<2x1xf32>
      %91 = vector.broadcast %90 : vector<2x1xf32> to vector<2x128xf32>
      %92 = arith.subf %88, %91 : vector<2x128xf32>
      %93 = math.exp %92 : vector<2x128xf32>
      %cst_91 = arith.constant dense<0.000000e+00> : vector<2xf32>
      %94 = vector.multi_reduction <add>, %93, %cst_91 [1] : vector<2x128xf32> to vector<2xf32>
      %95 = vector.shape_cast %94 : vector<2xf32> to vector<2x1xf32>
      %96 = tpu.reciprocal %95 {approx = true} : vector<2x1xf32> -> vector<2x1xf32>
      %97 = vector.broadcast %96 : vector<2x1xf32> to vector<2x128xf32>
      %98 = arith.mulf %93, %97 : vector<2x128xf32>
      %c0_92 = arith.constant 0 : index
      %c0_93 = arith.constant 0 : index
      %c0_94 = arith.constant 0 : index
      %99 = vector.load %arg9[%c0_92, %c0_93, %c0_94] : memref<1x2x128xf32, #tpu.memory_space<vmem>>, vector<1x2x128xf32>
      %100 = vector.shape_cast %99 : vector<1x2x128xf32> to vector<2x128xf32>
      %101 = vector.shape_cast %98 : vector<2x128xf32> to vector<1x2x128xf32>
      tpu.vector_store %arg9[%c0_92, %c0_93, %c0_94], %101 {strides = array<i32>} : memref<1x2x128xf32, #tpu.memory_space<vmem>>, vector<1x2x128xf32>,
    } else {
    }
    return
  }
  func.func @transform_0(%arg0: i32, %arg1: i32, %arg2: i32) -> (i32, i32, i32, i32) {
    %c1_i32 = arith.constant 1 : i32
    %0 = arith.muli %arg2, %c1_i32 : i32
    %1 = arith.addi %0, %arg1 : i32
    %c0_i32 = arith.constant 0 : i32
    %c0_i32_0 = arith.constant 0 : i32
    %c0_i32_1 = arith.constant 0 : i32
    return %arg0, %1, %c0_i32, %c0_i32_0 : i32, i32, i32, i32
  }
  func.func @transform_1(%arg0: i32, %arg1: i32, %arg2: i32) -> (i32, i32, i32) {
    %c0_i32 = arith.constant 0 : i32
    %c0_i32_0 = arith.constant 0 : i32
    %c0_i32_1 = arith.constant 0 : i32
    return %arg1, %c0_i32, %c0_i32_0 : i32, i32, i32
  }
  func.func @transform_2(%arg0: i32, %arg1: i32, %arg2: i32) -> (i32, i32, i32, i32) {
    %c0_i32 = arith.constant 0 : i32
    %c0_i32_0 = arith.constant 0 : i32
    %c0_i32_1 = arith.constant 0 : i32
    %c0_i32_2 = arith.constant 0 : i32
    return %arg0, %c0_i32, %c0_i32_0, %c0_i32_1 : i32, i32, i32, i32
  }
  func.func @transform_3(%arg0: i32, %arg1: i32, %arg2: i32) -> (i32, i32, i32) {
    %c0_i32 = arith.constant 0 : i32
    %c0_i32_0 = arith.constant 0 : i32
    %c0_i32_1 = arith.constant 0 : i32
    return %arg0, %c0_i32, %c0_i32_0 : i32, i32, i32
  }
  func.func @transform_4(%arg0: i32, %arg1: i32, %arg2: i32) -> (i32, i32, i32) {
    %c0_i32 = arith.constant 0 : i32
    %c0_i32_0 = arith.constant 0 : i32
    %c0_i32_1 = arith.constant 0 : i32
    return %arg0, %c0_i32, %c0_i32_0 : i32, i32, i32
  }
  func.func @transform_5(%arg0: i32, %arg1: i32, %arg2: i32) -> (i32, i32, i32) {
    %c0_i32 = arith.constant 0 : i32
    %c0_i32_0 = arith.constant 0 : i32
    %c0_i32_1 = arith.constant 0 : i32
    return %arg0, %c0_i32, %c0_i32_0 : i32, i32, i32
  }
  func.func @transform_6(%arg0: i32, %arg1: i32, %arg2: i32) -> (i32, i32, i32) {
    %c0_i32 = arith.constant 0 : i32
    %c0_i32_0 = arith.constant 0 : i32
    %c0_i32_1 = arith.constant 0 : i32
    return %arg0, %c0_i32, %c0_i32_0 : i32, i32, i32
  }
}

</mosaic_0001>

<llo_original>
// kernel: tpu_custom_call.1
$region0: #{tpu_custom_call.1}
  #allocation0 [shape = 'u32[]', space=smem, size = 0x4, offset = 0x4, fixed_abs, tag = 'smem constant byte address 0x4 - core index']
  #allocation1 [shape = 'u32[144,128]{1,0:T(1,128)}', space=vmem, size = 0x12000, scoped, tag = 'internal scratch']
  #allocation2 [shape = 'f32[2,128]{1,0:T(2,128)}', space=vmem, size = 0x400, scoped, tag = 'scratch operand']
  %s0 = inlined_call_operand.vmem [shape: bf16[2,2,328,4], index: 0, kind: input, shape index: {}]
  %s1 = inlined_call_operand.vmem [shape: f32[1,1,288], index: 1, kind: input, shape index: {}]
  %s2 = inlined_call_operand.vmem [shape: bf16[2,9,4,128], index: 2, kind: input, shape index: {}]
  %s3 = inlined_call_operand.vmem [shape: f32[2,1,128], index: 3, kind: input, shape index: {}]
  %s4 = inlined_call_operand.vmem [shape: f32[2,128,128], index: 4, kind: input, shape index: {}]
  %s5 = inlined_call_operand.vmem [shape: f32[2,1,128], index: 5, kind: input, shape index: {}]
  %s6 = inlined_call_operand.hbm [shape: f32[2,2,128], index: 6, kind: output, shape index: {}]
  %s7 = sld [smem:[#allocation0]]
  $region65: #{tpu_custom_call.1} parent=0
    _
  %s9 = ssub.s32 1, %s7
  %s10 = scalar_select 0, %s9, %s7
  $region1: #{tpu_custom_call.1} parent=0
    #allocation3 [shape = 'u8[2048]{0}', space=vmem, size = 0x800, scoped, tag = 'output window, operand 0']
    #allocation4 [shape = 's32[2]{0}', space=sflag, size = 0x8, scoped, tag = 'scoped memory for tpu_custom_call.1']
    %11 = vsyncpa [#allocation4], 0
    %s12 = scalar_lea.sflag [#allocation4], 1
    %13 = vsyncpa %s12, 0
    loop: start=0, step=1, limit=6
    $region2: #{tpu_custom_call.1} parent=1 // loop_pre_header
      _
    $region3: #{tpu_custom_call.1} parent=1 // loop_header
      %s15 = sphi 0, %s19
      %p16 = scmp.ge.s32.totalorder %s15, 6
      %s22 = sphi 0, %s41
      %s23 = sphi 0, %s37
      %s24 = sphi 0, %s33
      %s25 = sphi 0, %s22
      %s26 = sphi 0, %s23
      %s27 = sphi 0, %s24
      %s28 = sphi 0, %s25
      %s29 = sphi 0, %s26
      %s30 = sphi 0, %s27
      %s48 = sphi 0, %s50
      %s51 = sphi 0, %s48
      %s52 = sphi 0, %s51
      %s68 = sphi 0, %s52
      %s74 = sphi 0, %s76
      %s77 = sphi 0, %s74
      %s78 = sphi 0, %s77
      %s94 = sphi 0, %s78
      %s100 = sphi 0, %s102
      %s103 = sphi 0, %s100
      %s104 = sphi 0, %s103
      %s120 = sphi 0, %s104
      %s126 = sphi 0, %s128
      %s129 = sphi 0, %s126
      %s130 = sphi 0, %s129
      %s146 = sphi 0, %s130
      %s152 = sphi 0, %s154
      %s155 = sphi 0, %s152
      %s156 = sphi 0, %s155
      %s172 = sphi 0, %s156
      %s178 = sphi 0, %s180
      %s181 = sphi 0, %s178
      %s182 = sphi 0, %s181
      %s198 = sphi 0, %s182
      %s204 = sphi 0, %s206
      %s207 = sphi 0, %s204
      %s208 = sphi 0, %s207
      %s224 = sphi 0, %s208
    $region4: #{tpu_custom_call.1} parent=1 // loop_header_branch
      %18 = sbr.rel (%p16) target = $region8
    $region5: #{tpu_custom_call.1} parent=1 // loop_body
      %s20 = ssub.s32 %s15, 1
      %s21 = ssub.s32 %s15, 2
      %s31 = sadd.s32 1, %s24
      %p32 = scmp.ge.s32.totalorder %s31, 2
      %s33 = scalar_select %p32, 0, %s31
      %s34 = sadd.s32 1, %s23
      %s35 = scalar_select %p32, %s34, %s23
      %p36 = scmp.ge.s32.totalorder %s35, 1
      %s37 = scalar_select %p36, 0, %s35
      %s38 = sadd.s32 1, %s22
      %s39 = scalar_select %p36, %s38, %s22
      %p40 = scmp.ge.s32.totalorder %s39, 2
      %s41 = scalar_select %p40, 0, %s39
      %s42 = sadd.s32 %s24, %s23
      %s43 = sadd.s32 %s33, %s37
      %s44 = ssub.s32 %s22, %s41
      %s45 = ssub.s32 %s42, %s43
      %s46 = sor.u32 %s44, %s45
      %p47 = scmp.eq.s32.totalorder %s46, 0
      %s49 = sadd.s32 %s48, 1
      %s50 = scalar_select %p47, %s48, %s49
      %p53 = pneg %p47
      %p54 = scmp.eq.s32.totalorder %s15, 3
      %p55 = por %p53, %p54
      %p56 = scmp.ne.s32.totalorder %s48, %s51
      %p57 = scmp.eq.s32.totalorder %s15, 0
      %p58 = por %p56, %p57
      %p59 = scmp.ne.s32.totalorder %s48, %s51
      %p60 = scmp.eq.s32.totalorder %s20, 3
      %p61 = por %p59, %p60
      %p62 = scmp.ne.s32.totalorder %s51, %s52
      %p63 = scmp.eq.s32.totalorder %s20, 0
      %p64 = por %p62, %p63
      %p65 = scmp.ne.s32.totalorder %s51, %s52
      %p66 = scmp.eq.s32.totalorder %s21, 3
      %p67 = por %p65, %p66
      %p69 = scmp.ne.s32.totalorder %s52, %s68
      %p70 = scmp.eq.s32.totalorder %s21, 0
      %p71 = por %p69, %p70
      %s72 = ssub.s32 %s23, %s37
      %p73 = scmp.eq.s32.totalorder %s72, 0
      %s75 = sadd.s32 %s74, 1
      %s76 = scalar_select %p73, %s74, %s75
      %p79 = pneg %p73
      %p80 = scmp.eq.s32.totalorder %s15, 3
      %p81 = por %p79, %p80
      %p82 = scmp.ne.s32.totalorder %s74, %s77
      %p83 = scmp.eq.s32.totalorder %s15, 0
      %p84 = por %p82, %p83
      %p85 = scmp.ne.s32.totalorder %s74, %s77
      %p86 = scmp.eq.s32.totalorder %s20, 3
      %p87 = por %p85, %p86
      %p88 = scmp.ne.s32.totalorder %s77, %s78
      %p89 = scmp.eq.s32.totalorder %s20, 0
      %p90 = por %p88, %p89
      %p91 = scmp.ne.s32.totalorder %s77, %s78
      %p92 = scmp.eq.s32.totalorder %s21, 3
      %p93 = por %p91, %p92
      %p95 = scmp.ne.s32.totalorder %s78, %s94
      %p96 = scmp.eq.s32.totalorder %s21, 0
      %p97 = por %p95, %p96
      %s98 = ssub.s32 %s22, %s41
      %p99 = scmp.eq.s32.totalorder %s98, 0
      %s101 = sadd.s32 %s100, 1
      %s102 = scalar_select %p99, %s100, %s101
      %p105 = pneg %p99
      %p106 = scmp.eq.s32.totalorder %s15, 3
      %p107 = por %p105, %p106
      %p108 = scmp.ne.s32.totalorder %s100, %s103
      %p109 = scmp.eq.s32.totalorder %s15, 0
      %p110 = por %p108, %p109
      %p111 = scmp.ne.s32.totalorder %s100, %s103
      %p112 = scmp.eq.s32.totalorder %s20, 3
      %p113 = por %p111, %p112
      %p114 = scmp.ne.s32.totalorder %s103, %s104
      %p115 = scmp.eq.s32.totalorder %s20, 0
      %p116 = por %p114, %p115
      %p117 = scmp.ne.s32.totalorder %s103, %s104
      %p118 = scmp.eq.s32.totalorder %s21, 3
      %p119 = por %p117, %p118
      %p121 = scmp.ne.s32.totalorder %s104, %s120
      %p122 = scmp.eq.s32.totalorder %s21, 0
      %p123 = por %p121, %p122
      %s124 = ssub.s32 %s22, %s41
      %p125 = scmp.eq.s32.totalorder %s124, 0
      %s127 = sadd.s32 %s126, 1
      %s128 = scalar_select %p125, %s126, %s127
      %p131 = pneg %p125
      %p132 = scmp.eq.s32.totalorder %s15, 3
      %p133 = por %p131, %p132
      %p134 = scmp.ne.s32.totalorder %s126, %s129
      %p135 = scmp.eq.s32.totalorder %s15, 0
      %p136 = por %p134, %p135
      %p137 = scmp.ne.s32.totalorder %s126, %s129
      %p138 = scmp.eq.s32.totalorder %s20, 3
      %p139 = por %p137, %p138
      %p140 = scmp.ne.s32.totalorder %s129, %s130
      %p141 = scmp.eq.s32.totalorder %s20, 0
      %p142 = por %p140, %p141
      %p143 = scmp.ne.s32.totalorder %s129, %s130
      %p144 = scmp.eq.s32.totalorder %s21, 3
      %p145 = por %p143, %p144
      %p147 = scmp.ne.s32.totalorder %s130, %s146
      %p148 = scmp.eq.s32.totalorder %s21, 0
      %p149 = por %p147, %p148
      %s150 = ssub.s32 %s22, %s41
      %p151 = scmp.eq.s32.totalorder %s150, 0
      %s153 = sadd.s32 %s152, 1
      %s154 = scalar_select %p151, %s152, %s153
      %p157 = pneg %p151
      %p158 = scmp.eq.s32.totalorder %s15, 3
      %p159 = por %p157, %p158
      %p160 = scmp.ne.s32.totalorder %s152, %s155
      %p161 = scmp.eq.s32.totalorder %s15, 0
      %p162 = por %p160, %p161
      %p163 = scmp.ne.s32.totalorder %s152, %s155
      %p164 = scmp.eq.s32.totalorder %s20, 3
      %p165 = por %p163, %p164
      %p166 = scmp.ne.s32.totalorder %s155, %s156
      %p167 = scmp.eq.s32.totalorder %s20, 0
      %p168 = por %p166, %p167
      %p169 = scmp.ne.s32.totalorder %s155, %s156
      %p170 = scmp.eq.s32.totalorder %s21, 3
      %p171 = por %p169, %p170
      %p173 = scmp.ne.s32.totalorder %s156, %s172
      %p174 = scmp.eq.s32.totalorder %s21, 0
      %p175 = por %p173, %p174
      %s176 = ssub.s32 %s22, %s41
      %p177 = scmp.eq.s32.totalorder %s176, 0
      %s179 = sadd.s32 %s178, 1
      %s180 = scalar_select %p177, %s178, %s179
      %p183 = pneg %p177
      %p184 = scmp.eq.s32.totalorder %s15, 3
      %p185 = por %p183, %p184
      %p186 = scmp.ne.s32.totalorder %s178, %s181
      %p187 = scmp.eq.s32.totalorder %s15, 0
      %p188 = por %p186, %p187
      %p189 = scmp.ne.s32.totalorder %s178, %s181
      %p190 = scmp.eq.s32.totalorder %s20, 3
      %p191 = por %p189, %p190
      %p192 = scmp.ne.s32.totalorder %s181, %s182
      %p193 = scmp.eq.s32.totalorder %s20, 0
      %p194 = por %p192, %p193
      %p195 = scmp.ne.s32.totalorder %s181, %s182
      %p196 = scmp.eq.s32.totalorder %s21, 3
      %p197 = por %p195, %p196
      %p199 = scmp.ne.s32.totalorder %s182, %s198
      %p200 = scmp.eq.s32.totalorder %s21, 0
      %p201 = por %p199, %p200
      %s202 = ssub.s32 %s22, %s41
      %p203 = scmp.eq.s32.totalorder %s202, 0
      %s205 = sadd.s32 %s204, 1
      %s206 = scalar_select %p203, %s204, %s205
      %p209 = pneg %p203
      %p210 = scmp.eq.s32.totalorder %s15, 3
      %p211 = por %p209, %p210
      %p212 = scmp.ne.s32.totalorder %s204, %s207
      %p213 = scmp.eq.s32.totalorder %s15, 0
      %p214 = por %p212, %p213
      %p215 = scmp.ne.s32.totalorder %s204, %s207
      %p216 = scmp.eq.s32.totalorder %s20, 3
      %p217 = por %p215, %p216
      %p218 = scmp.ne.s32.totalorder %s207, %s208
      %p219 = scmp.eq.s32.totalorder %s20, 0
      %p220 = por %p218, %p219
      %p221 = scmp.ne.s32.totalorder %s207, %s208
      %p222 = scmp.eq.s32.totalorder %s21, 3
      %p223 = por %p221, %p222
      %p225 = scmp.ne.s32.totalorder %s208, %s224
      %p226 = scmp.eq.s32.totalorder %s21, 0
      %p227 = por %p225, %p226
      %p228 = scmp.le.s32.totalorder 1, %s15
      %p229 = scmp.lt.s32.totalorder %s15, 5
      %p230 = pnand %p228, %p229
      %p231 = pneg %p230
      // Predicated region
      $region9: #{tpu_custom_call.1} parent=5 // pred_check
        _
      $region10: #{tpu_custom_call.1} parent=5 // pred_check_branch
        %233 = sbr.rel (%p230) target = $region12
      $region11: #{tpu_custom_call.1} parent=5 // pred_region
        %s234 = ssub.s32 %s15, 1
        // Predicated region
        $region13: #{tpu_custom_call.1} parent=11 // pred_check
          %p235 = pneg %p90
        $region14: #{tpu_custom_call.1} parent=11 // pred_check_branch
          %237 = sbr.rel (%p235) target = $region16
        $region15: #{tpu_custom_call.1} parent=11 // pred_region
          %p238 = scmp.lt.s32.totalorder %s26, 0
          %s239 = scalar_select %p238, %s26, 0
          %s240 = smul.addr %s239, 3
          %s241 = scalar_lea.vmem %s1, %s240
        $region16: #{tpu_custom_call.1} parent=11 // pred_fallthru
          _
      $region12: #{tpu_custom_call.1} parent=5 // pred_fallthru
        _
      %p242 = scmp.lt.s32.totalorder %s15, 4
      // Predicated region
      $region17: #{tpu_custom_call.1} parent=5 // pred_check
        %p243 = pneg %p242
      $region18: #{tpu_custom_call.1} parent=5 // pred_check_branch
        %245 = sbr.rel (%p243) target = $region20
      $region19: #{tpu_custom_call.1} parent=5 // pred_region
        // Predicated region
        $region21: #{tpu_custom_call.1} parent=19 // pred_check
          %p246 = pneg %p58
        $region22: #{tpu_custom_call.1} parent=19 // pred_check_branch
          %248 = sbr.rel (%p246) target = $region24
        $region23: #{tpu_custom_call.1} parent=19 // pred_region
          %s249 = sadd.s32 %s24, %s23
          %p250 = scmp.lt.s32.totalorder %s22, 1
          %s251 = scalar_select %p250, %s22, 1
          %p252 = scmp.lt.s32.totalorder %s249, 1
          %s253 = scalar_select %p252, %s249, 1
          %s254 = smul.addr %s253, 41
          %s255 = smul.addr %s251, 82
          %s256 = sadd.s32 %s254, %s255
          %s257 = smul.addr %s256, 4
          %s258 = scalar_lea.vmem %s0, %s257
          %s259 = sadd.s32 %s24, %s23
        $region24: #{tpu_custom_call.1} parent=19 // pred_fallthru
          _
        // Predicated region
        $region25: #{tpu_custom_call.1} parent=19 // pred_check
          %p260 = pneg %p110
        $region26: #{tpu_custom_call.1} parent=19 // pred_check_branch
          %262 = sbr.rel (%p260) target = $region28
        $region27: #{tpu_custom_call.1} parent=19 // pred_region
          %p263 = scmp.lt.s32.totalorder %s22, 1
          %s264 = scalar_select %p263, %s22, 1
          %s265 = smul.addr %s264, 9
          %s266 = smul.addr %s265, 2
          %s267 = scalar_lea.vmem %s2, %s266
        $region28: #{tpu_custom_call.1} parent=19 // pred_fallthru
          _
        // Predicated region
        $region29: #{tpu_custom_call.1} parent=19 // pred_check
          %p268 = pneg %p136
        $region30: #{tpu_custom_call.1} parent=19 // pred_check_branch
          %270 = sbr.rel (%p268) target = $region32
        $region31: #{tpu_custom_call.1} parent=19 // pred_region
          %p271 = scmp.lt.s32.totalorder %s22, 1
          %s272 = scalar_select %p271, %s22, 1
          %s273 = scalar_lea.vmem %s3, %s272
        $region32: #{tpu_custom_call.1} parent=19 // pred_fallthru
          _
        // Predicated region
        $region33: #{tpu_custom_call.1} parent=19 // pred_check
          %p274 = pneg %p162
        $region34: #{tpu_custom_call.1} parent=19 // pred_check_branch
          %276 = sbr.rel (%p274) target = $region36
        $region35: #{tpu_custom_call.1} parent=19 // pred_region
          %p277 = scmp.lt.s32.totalorder %s22, 1
          %s278 = scalar_select %p277, %s22, 1
          %s279 = smul.addr %s278, 16
          %s280 = smul.addr %s279, 8
          %s281 = scalar_lea.vmem %s4, %s280
        $region36: #{tpu_custom_call.1} parent=19 // pred_fallthru
          _
        // Predicated region
        $region37: #{tpu_custom_call.1} parent=19 // pred_check
          %p282 = pneg %p188
        $region38: #{tpu_custom_call.1} parent=19 // pred_check_branch
          %284 = sbr.rel (%p282) target = $region40
        $region39: #{tpu_custom_call.1} parent=19 // pred_region
          %p285 = scmp.lt.s32.totalorder %s22, 1
          %s286 = scalar_select %p285, %s22, 1
          %s287 = scalar_lea.vmem %s5, %s286
        $region40: #{tpu_custom_call.1} parent=19 // pred_fallthru
          _
      $region20: #{tpu_custom_call.1} parent=5 // pred_fallthru
        _
      %p288 = scmp.le.s32.totalorder 1, %s15
      %p289 = scmp.lt.s32.totalorder %s15, 5
      %p290 = pnand %p288, %p289
      %p291 = pneg %p290
      // Predicated region
      $region41: #{tpu_custom_call.1} parent=5 // pred_check
        _
      $region42: #{tpu_custom_call.1} parent=5 // pred_check_branch
        %293 = sbr.rel (%p290) target = $region44
      $region43: #{tpu_custom_call.1} parent=5 // pred_region
        %s294 = ssub.s32 %s15, 1
        %s295 = sadd.s32 %s27, %s26
        %p296 = scmp.lt.s32.totalorder %s25, 1
        %s297 = scalar_select %p296, %s25, 1
        %p298 = scmp.lt.s32.totalorder %s295, 1
        %s299 = scalar_select %p298, %s295, 1
        %s300 = smul.addr %s299, 41
        %s301 = smul.addr %s297, 82
        %s302 = sadd.s32 %s300, %s301
        %s303 = smul.addr %s302, 4
        %s304 = scalar_lea.vmem %s0, %s303
        %p305 = pneg %p64
        %p306 = pneg %p61
        %p307 = scmp.lt.s32.totalorder %s26, 0
        %s308 = scalar_select %p307, %s26, 0
        %s309 = smul.addr %s308, 3
        %s310 = scalar_lea.vmem %s1, %s309
        %p311 = pneg %p90
        %p312 = pneg %p87
        %p313 = scmp.lt.s32.totalorder %s25, 1
        %s314 = scalar_select %p313, %s25, 1
        %s315 = smul.addr %s314, 9
        %s316 = smul.addr %s315, 2
        %s317 = scalar_lea.vmem %s2, %s316
        %p318 = pneg %p116
        %p319 = pneg %p113
        %p320 = scmp.lt.s32.totalorder %s25, 1
        %s321 = scalar_select %p320, %s25, 1
        %s322 = scalar_lea.vmem %s3, %s321
        %p323 = pneg %p142
        %p324 = pneg %p139
        %p325 = scmp.lt.s32.totalorder %s25, 1
        %s326 = scalar_select %p325, %s25, 1
        %s327 = smul.addr %s326, 16
        %s328 = smul.addr %s327, 8
        %s329 = scalar_lea.vmem %s4, %s328
        %p330 = pneg %p168
        %p331 = pneg %p165
        %p332 = scmp.lt.s32.totalorder %s25, 1
        %s333 = scalar_select %p332, %s25, 1
        %s334 = scalar_lea.vmem %s5, %s333
        %p335 = pneg %p194
        %p336 = pneg %p191
        %p337 = pneg %p220
        %p338 = pneg %p217
        %s339 = sand.u32 %s207, 1
        %s340 = scalar_lea.sflag [#allocation4], %s339
        %s341 = sand.u32 %s207, 1
        %s342 = smul.addr %s341, 2
        %s343 = scalar_lea.vmem [#allocation3], %s342
        %s344 = sadd.s32 %s27, %s26
        %p345 = scmp.lt.s32.totalorder %s25, 1
        %s346 = scalar_select %p345, %s25, 1
        %p347 = scmp.lt.s32.totalorder %s344, 1
        %s348 = scalar_select %p347, %s344, 1
        %s349 = smul.addr %s348, 41
        %s350 = smul.addr %s346, 82
        %s351 = sadd.s32 %s349, %s350
        %s352 = smul.addr %s351, 4
        %s353 = scalar_lea.vmem %s0, %s352
        %s354 = sadd.s32 %s27, %s26
        %p355 = scmp.lt.s32.totalorder %s26, 0
        %s356 = scalar_select %p355, %s26, 0
        %s357 = smul.addr %s356, 3
        %s358 = scalar_lea.vmem %s1, %s357
        %p359 = scmp.lt.s32.totalorder %s25, 1
        %s360 = scalar_select %p359, %s25, 1
        %s361 = smul.addr %s360, 9
        %s362 = smul.addr %s361, 2
        %s363 = scalar_lea.vmem %s2, %s362
        %p364 = scmp.lt.s32.totalorder %s25, 1
        %s365 = scalar_select %p364, %s25, 1
        %s366 = scalar_lea.vmem %s3, %s365
        %p367 = scmp.lt.s32.totalorder %s25, 1
        %s368 = scalar_select %p367, %s25, 1
        %s369 = smul.addr %s368, 16
        %s370 = smul.addr %s369, 8
        %s371 = scalar_lea.vmem %s4, %s370
        %p372 = scmp.lt.s32.totalorder %s25, 1
        %s373 = scalar_select %p372, %s25, 1
        %s374 = scalar_lea.vmem %s5, %s373
        %p376 = scmp.eq.s32.totalorder %s26, 0
        %p377 = scmp.eq.s32.totalorder %s27, 0
        %p378 = pnand %p376, %p377
        %p379 = pneg %p378
        // Predicated region
        $region45: #{tpu_custom_call.1} parent=43 // pred_check
          _
        $region46: #{tpu_custom_call.1} parent=43 // pred_check_branch
          %381 = sbr.rel (%p378) target = $region48
        $region47: #{tpu_custom_call.1} parent=43 // pred_region
          %382 = vst [vmem:[#allocation2] sm:$0x3] 0.0
        $region48: #{tpu_custom_call.1} parent=43 // pred_fallthru
          _
        %v383 = vld [vmem:[%s353] sm:$0xf]
        %v384 = vld [vmem:[%s353 + $0x4] sm:$0xf]
        %v385 = vld [vmem:[%s353 + $0x8] sm:$0xf]
        %v386 = vld [vmem:[%s353 + $0xc] sm:$0xf]
        %v387 = vld [vmem:[%s353 + $0x10] sm:$0xf]
        %v388 = vld [vmem:[%s353 + $0x14] sm:$0xf]
        %v389 = vld [vmem:[%s353 + $0x18] sm:$0xf]
        %v390 = vld [vmem:[%s353 + $0x1c] sm:$0xf]
        %v391 = vld [vmem:[%s353 + $0x20] sm:$0xf]
        %v392 = vld [vmem:[%s353 + $0x24] sm:$0xf]
        %v393 = vld [vmem:[%s353 + $0x28] sm:$0xf]
        %v394 = vld [vmem:[%s353 + $0x2c] sm:$0xf]
        %v395 = vld [vmem:[%s353 + $0x30] sm:$0xf]
        %v396 = vld [vmem:[%s353 + $0x34] sm:$0xf]
        %v397 = vld [vmem:[%s353 + $0x38] sm:$0xf]
        %v398 = vld [vmem:[%s353 + $0x3c] sm:$0xf]
        %v399 = vld [vmem:[%s353 + $0x40] sm:$0xf]
        %v400 = vld [vmem:[%s353 + $0x44] sm:$0xf]
        %v401 = vld [vmem:[%s353 + $0x48] sm:$0xf]
        %v402 = vld [vmem:[%s353 + $0x4c] sm:$0xf]
        %v403 = vld [vmem:[%s353 + $0x50] sm:$0xf]
        %v404 = vld [vmem:[%s353 + $0x54] sm:$0xf]
        %v405 = vld [vmem:[%s353 + $0x58] sm:$0xf]
        %v406 = vld [vmem:[%s353 + $0x5c] sm:$0xf]
        %v407 = vld [vmem:[%s353 + $0x60] sm:$0xf]
        %v408 = vld [vmem:[%s353 + $0x64] sm:$0xf]
        %v409 = vld [vmem:[%s353 + $0x68] sm:$0xf]
        %v410 = vld [vmem:[%s353 + $0x6c] sm:$0xf]
        %v411 = vld [vmem:[%s353 + $0x70] sm:$0xf]
        %v412 = vld [vmem:[%s353 + $0x74] sm:$0xf]
        %v413 = vld [vmem:[%s353 + $0x78] sm:$0xf]
        %v414 = vld [vmem:[%s353 + $0x7c] sm:$0xf]
        %v415 = vld [vmem:[%s353 + $0x80] sm:$0xf]
        %v416 = vld [vmem:[%s353 + $0x84] sm:$0xf]
        %v417 = vld [vmem:[%s353 + $0x88] sm:$0xf]
        %v418 = vld [vmem:[%s353 + $0x8c] sm:$0xf]
        %v419 = vld [vmem:[%s363] sm:$0x3]
        %v420 = vld [vmem:[%s353 + $0x90] sm:$0x1]
        %s421 = scalar_lea.vmem %s363, 2
        %v422 = vld [vmem:[%s421] sm:$0x3]
        %v460 = vunpack.c.l.b16 %v383
        %v461 = vunpack.c.l.b16 %v384
        %v462 = vunpack.c.l.b16 %v385
        %v463 = vunpack.c.l.b16 %v386
        %v464 = vunpack.c.l.b16 %v387
        %v465 = vunpack.c.l.b16 %v388
        %v466 = vunpack.c.l.b16 %v389
        %v467 = vunpack.c.l.b16 %v390
        %v468 = vunpack.c.l.b16 %v391
        %v469 = vunpack.c.l.b16 %v392
        %v470 = vunpack.c.l.b16 %v393
        %v471 = vunpack.c.l.b16 %v394
        %v472 = vunpack.c.l.b16 %v395
        %v473 = vunpack.c.l.b16 %v396
        %v474 = vunpack.c.l.b16 %v397
        %v475 = vunpack.c.l.b16 %v398
        %v476 = vunpack.c.l.b16 %v399
        %v477 = vunpack.c.l.b16 %v400
        %v478 = vunpack.c.l.b16 %v401
        %v479 = vunpack.c.l.b16 %v402
        %v480 = vunpack.c.l.b16 %v403
        %v481 = vunpack.c.l.b16 %v404
        %v482 = vunpack.c.l.b16 %v405
        %v483 = vunpack.c.l.b16 %v406
        %v484 = vunpack.c.l.b16 %v407
        %v485 = vunpack.c.l.b16 %v408
        %v486 = vunpack.c.l.b16 %v409
        %v487 = vunpack.c.l.b16 %v410
        %v488 = vunpack.c.l.b16 %v411
        %v489 = vunpack.c.l.b16 %v412
        %v490 = vunpack.c.l.b16 %v413
        %v491 = vunpack.c.l.b16 %v414
        %v492 = vunpack.c.l.b16 %v415
        %v493 = vunpack.c.l.b16 %v416
        %v494 = vunpack.c.l.b16 %v417
        %v495 = vunpack.c.l.b16 %v418
        %v496 = vunpack.c.l.b16 %v420
        %v497 = vpack.c.b16 %v461, %v460
        %v498 = vpack.c.b16 %v463, %v462
        %v499 = vpack.c.b16 %v465, %v464
        %v500 = vpack.c.b16 %v467, %v466
        %v501 = vpack.c.b16 %v469, %v468
        %v502 = vpack.c.b16 %v471, %v470
        %v503 = vpack.c.b16 %v473, %v472
        %v504 = vpack.c.b16 %v475, %v474
        %v505 = vpack.c.b16 %v477, %v476
        %v506 = vpack.c.b16 %v479, %v478
        %v507 = vpack.c.b16 %v481, %v480
        %v508 = vpack.c.b16 %v483, %v482
        %v509 = vpack.c.b16 %v485, %v484
        %v510 = vpack.c.b16 %v487, %v486
        %v511 = vpack.c.b16 %v489, %v488
        %v512 = vpack.c.b16 %v491, %v490
        %v513 = vpack.c.b16 %v493, %v492
        %v514 = vpack.c.b16 %v495, %v494
        %v515 = vpack.c.b16 %v496, %v496
        %vm516 = vsmask.f32 7424
        %v518 = vshrl.u32 %v497, 16
        %v520 = vshll.u32 %v497, 16
        %v522 = vrot.slane %v520, 1
        %v523 = vor.u32 %v518, %v522
        %v525 = vshll.u32 %v498, 16
        %v527 = vrot.slane %v525, 1
        %v528 = vsel %vm516, %v523, %v527
        %v529 = vshrl.u32 %v498, 16
        %v531 = vor.u32 %v529, %v527
        %v533 = vshll.u32 %v499, 16
        %v535 = vrot.slane %v533, 1
        %v536 = vsel %vm516, %v531, %v535
        %v537 = vshrl.u32 %v499, 16
        %v539 = vor.u32 %v537, %v535
        %v541 = vshll.u32 %v500, 16
        %v543 = vrot.slane %v541, 1
        %v544 = vsel %vm516, %v539, %v543
        %v545 = vshrl.u32 %v500, 16
        %v547 = vor.u32 %v545, %v543
        %v549 = vshll.u32 %v501, 16
        %v551 = vrot.slane %v549, 1
        %v552 = vsel %vm516, %v547, %v551
        %v553 = vshrl.u32 %v501, 16
        %v555 = vor.u32 %v553, %v551
        %v557 = vshll.u32 %v502, 16
        %v559 = vrot.slane %v557, 1
        %v560 = vsel %vm516, %v555, %v559
        %v561 = vshrl.u32 %v502, 16
        %v563 = vor.u32 %v561, %v559
        %v565 = vshll.u32 %v503, 16
        %v567 = vrot.slane %v565, 1
        %v568 = vsel %vm516, %v563, %v567
        %v569 = vshrl.u32 %v503, 16
        %v571 = vor.u32 %v569, %v567
        %v573 = vshll.u32 %v504, 16
        %v575 = vrot.slane %v573, 1
        %v576 = vsel %vm516, %v571, %v575
        %v577 = vshrl.u32 %v504, 16
        %v579 = vor.u32 %v577, %v575
        %v581 = vshll.u32 %v505, 16
        %v583 = vrot.slane %v581, 1
        %v584 = vsel %vm516, %v579, %v583
        %v585 = vshrl.u32 %v505, 16
        %v587 = vor.u32 %v585, %v583
        %v589 = vshll.u32 %v506, 16
        %v591 = vrot.slane %v589, 1
        %v592 = vsel %vm516, %v587, %v591
        %v593 = vshrl.u32 %v506, 16
        %v595 = vor.u32 %v593, %v591
        %v597 = vshll.u32 %v507, 16
        %v599 = vrot.slane %v597, 1
        %v600 = vsel %vm516, %v595, %v599
        %v601 = vshrl.u32 %v507, 16
        %v603 = vor.u32 %v601, %v599
        %v605 = vshll.u32 %v508, 16
        %v607 = vrot.slane %v605, 1
        %v608 = vsel %vm516, %v603, %v607
        %v609 = vshrl.u32 %v508, 16
        %v611 = vor.u32 %v609, %v607
        %v613 = vshll.u32 %v509, 16
        %v615 = vrot.slane %v613, 1
        %v616 = vsel %vm516, %v611, %v615
        %v617 = vshrl.u32 %v509, 16
        %v619 = vor.u32 %v617, %v615
        %v621 = vshll.u32 %v510, 16
        %v623 = vrot.slane %v621, 1
        %v624 = vsel %vm516, %v619, %v623
        %v625 = vshrl.u32 %v510, 16
        %v627 = vor.u32 %v625, %v623
        %v629 = vshll.u32 %v511, 16
        %v631 = vrot.slane %v629, 1
        %v632 = vsel %vm516, %v627, %v631
        %v633 = vshrl.u32 %v511, 16
        %v635 = vor.u32 %v633, %v631
        %v637 = vshll.u32 %v512, 16
        %v639 = vrot.slane %v637, 1
        %v640 = vsel %vm516, %v635, %v639
        %v641 = vshrl.u32 %v512, 16
        %v643 = vor.u32 %v641, %v639
        %v645 = vshll.u32 %v513, 16
        %v647 = vrot.slane %v645, 1
        %v648 = vsel %vm516, %v643, %v647
        %v649 = vshrl.u32 %v513, 16
        %v651 = vor.u32 %v649, %v647
        %v653 = vshll.u32 %v514, 16
        %v655 = vrot.slane %v653, 1
        %v656 = vsel %vm516, %v651, %v655
        %v657 = vshrl.u32 %v514, 16
        %v659 = vor.u32 %v657, %v655
        %v661 = vshll.u32 %v515, 16
        %v663 = vrot.slane %v661, 1
        %v664 = vsel %vm516, %v659, %v663
        %vm665 = vcmask 31744
        %v667 = vsel %vm665, %v528, 0
        %v670 = vsel %vm665, %v536, 0
        %v673 = vsel %vm665, %v544, 0
        %v676 = vsel %vm665, %v552, 0
        %v679 = vsel %vm665, %v560, 0
        %v682 = vsel %vm665, %v568, 0
        %v685 = vsel %vm665, %v576, 0
        %v688 = vsel %vm665, %v584, 0
        %v691 = vsel %vm665, %v592, 0
        %v694 = vsel %vm665, %v600, 0
        %v697 = vsel %vm665, %v608, 0
        %v700 = vsel %vm665, %v616, 0
        %v703 = vsel %vm665, %v624, 0
        %v706 = vsel %vm665, %v632, 0
        %v709 = vsel %vm665, %v640, 0
        %v712 = vsel %vm665, %v648, 0
        %v715 = vsel %vm665, %v656, 0
        %v718 = vsel %vm665, %v664, 0
        %vm720 = vcmask 1041408
        %v722 = vsel %vm720, %v422, 0
        %724 = vmatprep.subr.bf16.mxu0 0
        %725 = vmatpush1.bf16.msra.mxu0 %v722
        %726 = vmatprep.subr.bf16.mxu0 0
        %727 = vmatpush1.bf16.msra.mxu0 0
        %728 = vmatprep.subr.bf16.mxu0 0
        %729 = vmatpush1.bf16.msra.mxu0 0
        %730 = vmatprep.subr.bf16.mxu0 0
        %731 = vmatpush1.bf16.msra.mxu0 0
        %732 = vmatprep.subr.bf16.mxu0 0
        %733 = vmatpush1.bf16.msra.mxu0 0
        %734 = vmatprep.subr.bf16.mxu0 0
        %735 = vmatpush1.bf16.msra.mxu0 0
        %736 = vmatprep.subr.bf16.mxu0 0
        %737 = vmatpush1.bf16.msra.mxu0 0
        %738 = vmatprep.subr.bf16.mxu0 0
        %739 = vmatpush1.bf16.msra.mxu0 0
        %740 = vmatprep.subr.bf16.mxu0 0
        %741 = vmatpush1.bf16.msra.mxu0 0
        %742 = vmatprep.subr.bf16.mxu0 0
        %743 = vmatpush1.bf16.msra.mxu0 0
        %744 = vmatprep.subr.bf16.mxu0 0
        %745 = vmatpush1.bf16.msra.mxu0 0
        %746 = vmatprep.subr.bf16.mxu0 0
        %747 = vmatpush1.bf16.msra.mxu0 0
        %748 = vmatprep.subr.bf16.mxu0 0
        %749 = vmatpush1.bf16.msra.mxu0 0
        %750 = vmatprep.subr.bf16.mxu0 0
        %751 = vmatpush1.bf16.msra.mxu0 0
        %752 = vmatprep.subr.bf16.mxu0 0
        %753 = vmatpush1.bf16.msra.mxu0 0
        %754 = vmatprep.subr.bf16.mxu0 0
        %755 = vmatpush1.bf16.msra.mxu0 0
        %756 = vmatprep.mubr.bf16.mxu0 0
        %757 = vmatmul.mubr.bf16.gmra.mrb[0].mxu0 %v667
        %v758 = vpop.f32.mrb[0].mxu0
        %v759 = vadd.f32 0.0, %v758
        %v760 = vpop.f32.mrb[0].mxu0
        %v761 = vpop.f32.mrb[0].mxu0
        %v762 = vadd.f32 0.0, %v761
        %v763 = vpop.f32.mrb[0].mxu0
        %764 = vmatprep.mubr.bf16.mxu0 0
        %765 = vmatmul.mubr.bf16.gmra.mrb[0].mxu0 %v670
        %v766 = vpop.f32.mrb[0].mxu0
        %v767 = vadd.f32 0.0, %v766
        %v768 = vpop.f32.mrb[0].mxu0
        %v769 = vpop.f32.mrb[0].mxu0
        %v770 = vadd.f32 0.0, %v769
        %v771 = vpop.f32.mrb[0].mxu0
        %772 = vmatprep.mubr.bf16.mxu0 0
        %773 = vmatmul.mubr.bf16.gmra.mrb[0].mxu0 %v673
        %v774 = vpop.f32.mrb[0].mxu0
        %v775 = vadd.f32 0.0, %v774
        %v776 = vpop.f32.mrb[0].mxu0
        %v777 = vpop.f32.mrb[0].mxu0
        %v778 = vadd.f32 0.0, %v777
        %v779 = vpop.f32.mrb[0].mxu0
        %780 = vmatprep.mubr.bf16.mxu0 0
        %781 = vmatmul.mubr.bf16.gmra.mrb[0].mxu0 %v676
        %v782 = vpop.f32.mrb[0].mxu0
        %v783 = vadd.f32 0.0, %v782
        %v784 = vpop.f32.mrb[0].mxu0
        %v785 = vpop.f32.mrb[0].mxu0
        %v786 = vadd.f32 0.0, %v785
        %v787 = vpop.f32.mrb[0].mxu0
        %788 = vmatprep.mubr.bf16.mxu0 0
        %789 = vmatmul.mubr.bf16.gmra.mrb[0].mxu0 %v679
        %v790 = vpop.f32.mrb[0].mxu0
        %v791 = vadd.f32 0.0, %v790
        %v792 = vpop.f32.mrb[0].mxu0
        %v793 = vpop.f32.mrb[0].mxu0
        %v794 = vadd.f32 0.0, %v793
        %v795 = vpop.f32.mrb[0].mxu0
        %796 = vmatprep.mubr.bf16.mxu0 0
        %797 = vmatmul.mubr.bf16.gmra.mrb[0].mxu0 %v682
        %v798 = vpop.f32.mrb[0].mxu0
        %v799 = vadd.f32 0.0, %v798
        %v800 = vpop.f32.mrb[0].mxu0
        %v801 = vpop.f32.mrb[0].mxu0
        %v802 = vadd.f32 0.0, %v801
        %v803 = vpop.f32.mrb[0].mxu0
        %804 = vmatprep.mubr.bf16.mxu0 0
        %805 = vmatmul.mubr.bf16.gmra.mrb[0].mxu0 %v685
        %v806 = vpop.f32.mrb[0].mxu0
        %v807 = vadd.f32 0.0, %v806
        %v808 = vpop.f32.mrb[0].mxu0
        %v809 = vpop.f32.mrb[0].mxu0
        %v810 = vadd.f32 0.0, %v809
        %v811 = vpop.f32.mrb[0].mxu0
        %812 = vmatprep.mubr.bf16.mxu0 0
        %813 = vmatmul.mubr.bf16.gmra.mrb[0].mxu0 %v688
        %v814 = vpop.f32.mrb[0].mxu0
        %v815 = vadd.f32 0.0, %v814
        %v816 = vpop.f32.mrb[0].mxu0
        %v817 = vpop.f32.mrb[0].mxu0
        %v818 = vadd.f32 0.0, %v817
        %v819 = vpop.f32.mrb[0].mxu0
        %820 = vmatprep.mubr.bf16.mxu0 0
        %821 = vmatmul.mubr.bf16.gmra.mrb[0].mxu0 %v691
        %v822 = vpop.f32.mrb[0].mxu0
        %v823 = vadd.f32 0.0, %v822
        %v824 = vpop.f32.mrb[0].mxu0
        %v825 = vpop.f32.mrb[0].mxu0
        %v826 = vadd.f32 0.0, %v825
        %v827 = vpop.f32.mrb[0].mxu0
        %828 = vmatprep.mubr.bf16.mxu0 0
        %829 = vmatmul.mubr.bf16.gmra.mrb[0].mxu0 %v694
        %v830 = vpop.f32.mrb[0].mxu0
        %v831 = vadd.f32 0.0, %v830
        %v832 = vpop.f32.mrb[0].mxu0
        %v833 = vpop.f32.mrb[0].mxu0
        %v834 = vadd.f32 0.0, %v833
        %v835 = vpop.f32.mrb[0].mxu0
        %836 = vmatprep.mubr.bf16.mxu0 0
        %837 = vmatmul.mubr.bf16.gmra.mrb[0].mxu0 %v697
        %v838 = vpop.f32.mrb[0].mxu0
        %v839 = vadd.f32 0.0, %v838
        %v840 = vpop.f32.mrb[0].mxu0
        %v841 = vpop.f32.mrb[0].mxu0
        %v842 = vadd.f32 0.0, %v841
        %v843 = vpop.f32.mrb[0].mxu0
        %844 = vmatprep.mubr.bf16.mxu0 0
        %845 = vmatmul.mubr.bf16.gmra.mrb[0].mxu0 %v700
        %v846 = vpop.f32.mrb[0].mxu0
        %v847 = vadd.f32 0.0, %v846
        %v848 = vpop.f32.mrb[0].mxu0
        %v849 = vpop.f32.mrb[0].mxu0
        %v850 = vadd.f32 0.0, %v849
        %v851 = vpop.f32.mrb[0].mxu0
        %852 = vmatprep.mubr.bf16.mxu0 0
        %853 = vmatmul.mubr.bf16.gmra.mrb[0].mxu0 %v703
        %v854 = vpop.f32.mrb[0].mxu0
        %v855 = vadd.f32 0.0, %v854
        %v856 = vpop.f32.mrb[0].mxu0
        %v857 = vpop.f32.mrb[0].mxu0
        %v858 = vadd.f32 0.0, %v857
        %v859 = vpop.f32.mrb[0].mxu0
        %860 = vmatprep.mubr.bf16.mxu0 0
        %861 = vmatmul.mubr.bf16.gmra.mrb[0].mxu0 %v706
        %v862 = vpop.f32.mrb[0].mxu0
        %v863 = vadd.f32 0.0, %v862
        %v864 = vpop.f32.mrb[0].mxu0
        %v865 = vpop.f32.mrb[0].mxu0
        %v866 = vadd.f32 0.0, %v865
        %v867 = vpop.f32.mrb[0].mxu0
        %868 = vmatprep.mubr.bf16.mxu0 0
        %869 = vmatmul.mubr.bf16.gmra.mrb[0].mxu0 %v709
        %v870 = vpop.f32.mrb[0].mxu0
        %v871 = vadd.f32 0.0, %v870
        %v872 = vpop.f32.mrb[0].mxu0
        %v873 = vpop.f32.mrb[0].mxu0
        %v874 = vadd.f32 0.0, %v873
        %v875 = vpop.f32.mrb[0].mxu0
        %876 = vmatprep.mubr.bf16.mxu0 0
        %877 = vmatmul.mubr.bf16.gmra.mrb[0].mxu0 %v712
        %v878 = vpop.f32.mrb[0].mxu0
        %v879 = vadd.f32 0.0, %v878
        %v880 = vpop.f32.mrb[0].mxu0
        %v881 = vpop.f32.mrb[0].mxu0
        %v882 = vadd.f32 0.0, %v881
        %v883 = vpop.f32.mrb[0].mxu0
        %884 = vmatprep.mubr.bf16.mxu0 0
        %885 = vmatmul.mubr.bf16.gmra.mrb[0].mxu0 %v715
        %v886 = vpop.f32.mrb[0].mxu0
        %v887 = vadd.f32 0.0, %v886
        %v888 = vpop.f32.mrb[0].mxu0
        %v889 = vpop.f32.mrb[0].mxu0
        %v890 = vadd.f32 0.0, %v889
        %v891 = vpop.f32.mrb[0].mxu0
        %892 = vmatprep.mubr.bf16.mxu0 0
        %893 = vmatmul.mubr.bf16.gmra.mrb[0].mxu0 %v718
        %v894 = vpop.f32.mrb[0].mxu0
        %v895 = vadd.f32 0.0, %v894
        %v896 = vpop.f32.mrb[0].mxu0
        %v897 = vpop.f32.mrb[0].mxu0
        %v898 = vadd.f32 0.0, %v897
        %v899 = vpop.f32.mrb[0].mxu0
        %900 = vdwg.mxu0
        %v901 = vsel %vm665, %v497, 0
        %v903 = vsel %vm665, %v498, 0
        %v905 = vsel %vm665, %v499, 0
        %v907 = vsel %vm665, %v500, 0
        %v909 = vsel %vm665, %v501, 0
        %v911 = vsel %vm665, %v502, 0
        %v913 = vsel %vm665, %v503, 0
        %v915 = vsel %vm665, %v504, 0
        %v917 = vsel %vm665, %v505, 0
        %v919 = vsel %vm665, %v506, 0
        %v921 = vsel %vm665, %v507, 0
        %v923 = vsel %vm665, %v508, 0
        %v925 = vsel %vm665, %v509, 0
        %v927 = vsel %vm665, %v510, 0
        %v929 = vsel %vm665, %v511, 0
        %v931 = vsel %vm665, %v512, 0
        %v933 = vsel %vm665, %v513, 0
        %v935 = vsel %vm665, %v514, 0
        %v938 = vsel %vm720, %v419, 0
        %940 = vmatprep.subr.bf16.mxu0 0
        %941 = vmatpush1.bf16.msra.mxu0 %v938
        %942 = vmatprep.subr.bf16.mxu0 0
        %943 = vmatpush1.bf16.msra.mxu0 0
        %944 = vmatprep.subr.bf16.mxu0 0
        %945 = vmatpush1.bf16.msra.mxu0 0
        %946 = vmatprep.subr.bf16.mxu0 0
        %947 = vmatpush1.bf16.msra.mxu0 0
        %948 = vmatprep.subr.bf16.mxu0 0
        %949 = vmatpush1.bf16.msra.mxu0 0
        %950 = vmatprep.subr.bf16.mxu0 0
        %951 = vmatpush1.bf16.msra.mxu0 0
        %952 = vmatprep.subr.bf16.mxu0 0
        %953 = vmatpush1.bf16.msra.mxu0 0
        %954 = vmatprep.subr.bf16.mxu0 0
        %955 = vmatpush1.bf16.msra.mxu0 0
        %956 = vmatprep.subr.bf16.mxu0 0
        %957 = vmatpush1.bf16.msra.mxu0 0
        %958 = vmatprep.subr.bf16.mxu0 0
        %959 = vmatpush1.bf16.msra.mxu0 0
        %960 = vmatprep.subr.bf16.mxu0 0
        %961 = vmatpush1.bf16.msra.mxu0 0
        %962 = vmatprep.subr.bf16.mxu0 0
        %963 = vmatpush1.bf16.msra.mxu0 0
        %964 = vmatprep.subr.bf16.mxu0 0
        %965 = vmatpush1.bf16.msra.mxu0 0
        %966 = vmatprep.subr.bf16.mxu0 0
        %967 = vmatpush1.bf16.msra.mxu0 0
        %968 = vmatprep.subr.bf16.mxu0 0
        %969 = vmatpush1.bf16.msra.mxu0 0
        %970 = vmatprep.subr.bf16.mxu0 0
        %971 = vmatpush1.bf16.msra.mxu0 0
        %972 = vmatprep.mubr.bf16.mxu0 0
        %973 = vmatmul.mubr.bf16.gmra.mrb[0].mxu0 %v901
        %v974 = vpop.f32.mrb[0].mxu0
        %v975 = vadd.f32 %v759, %v974
        %v976 = vpop.f32.mrb[0].mxu0
        %v977 = vpop.f32.mrb[0].mxu0
        %v978 = vadd.f32 %v762, %v977
        %v979 = vpop.f32.mrb[0].mxu0
        %980 = vmatprep.mubr.bf16.mxu0 0
        %981 = vmatmul.mubr.bf16.gmra.mrb[0].mxu0 %v903
        %v982 = vpop.f32.mrb[0].mxu0
        %v983 = vadd.f32 %v767, %v982
        %v984 = vpop.f32.mrb[0].mxu0
        %v985 = vpop.f32.mrb[0].mxu0
        %v986 = vadd.f32 %v770, %v985
        %v987 = vpop.f32.mrb[0].mxu0
        %988 = vmatprep.mubr.bf16.mxu0 0
        %989 = vmatmul.mubr.bf16.gmra.mrb[0].mxu0 %v905
        %v990 = vpop.f32.mrb[0].mxu0
        %v991 = vadd.f32 %v775, %v990
        %v992 = vpop.f32.mrb[0].mxu0
        %v993 = vpop.f32.mrb[0].mxu0
        %v994 = vadd.f32 %v778, %v993
        %v995 = vpop.f32.mrb[0].mxu0
        %996 = vmatprep.mubr.bf16.mxu0 0
        %997 = vmatmul.mubr.bf16.gmra.mrb[0].mxu0 %v907
        %v998 = vpop.f32.mrb[0].mxu0
        %v999 = vadd.f32 %v783, %v998
        %v1000 = vpop.f32.mrb[0].mxu0
        %v1001 = vpop.f32.mrb[0].mxu0
        %v1002 = vadd.f32 %v786, %v1001
        %v1003 = vpop.f32.mrb[0].mxu0
        %1004 = vmatprep.mubr.bf16.mxu0 0
        %1005 = vmatmul.mubr.bf16.gmra.mrb[0].mxu0 %v909
        %v1006 = vpop.f32.mrb[0].mxu0
        %v1007 = vadd.f32 %v791, %v1006
        %v1008 = vpop.f32.mrb[0].mxu0
        %v1009 = vpop.f32.mrb[0].mxu0
        %v1010 = vadd.f32 %v794, %v1009
        %v1011 = vpop.f32.mrb[0].mxu0
        %1012 = vmatprep.mubr.bf16.mxu0 0
        %1013 = vmatmul.mubr.bf16.gmra.mrb[0].mxu0 %v911
        %v1014 = vpop.f32.mrb[0].mxu0
        %v1015 = vadd.f32 %v799, %v1014
        %v1016 = vpop.f32.mrb[0].mxu0
        %v1017 = vpop.f32.mrb[0].mxu0
        %v1018 = vadd.f32 %v802, %v1017
        %v1019 = vpop.f32.mrb[0].mxu0
        %1020 = vmatprep.mubr.bf16.mxu0 0
        %1021 = vmatmul.mubr.bf16.gmra.mrb[0].mxu0 %v913
        %v1022 = vpop.f32.mrb[0].mxu0
        %v1023 = vadd.f32 %v807, %v1022
        %v1024 = vpop.f32.mrb[0].mxu0
        %v1025 = vpop.f32.mrb[0].mxu0
        %v1026 = vadd.f32 %v810, %v1025
        %v1027 = vpop.f32.mrb[0].mxu0
        %1028 = vmatprep.mubr.bf16.mxu0 0
        %1029 = vmatmul.mubr.bf16.gmra.mrb[0].mxu0 %v915
        %v1030 = vpop.f32.mrb[0].mxu0
        %v1031 = vadd.f32 %v815, %v1030
        %v1032 = vpop.f32.mrb[0].mxu0
        %v1033 = vpop.f32.mrb[0].mxu0
        %v1034 = vadd.f32 %v818, %v1033
        %v1035 = vpop.f32.mrb[0].mxu0
        %1036 = vmatprep.mubr.bf16.mxu0 0
        %1037 = vmatmul.mubr.bf16.gmra.mrb[0].mxu0 %v917
        %v1038 = vpop.f32.mrb[0].mxu0
        %v1039 = vadd.f32 %v823, %v1038
        %v1040 = vpop.f32.mrb[0].mxu0
        %v1041 = vpop.f32.mrb[0].mxu0
        %v1042 = vadd.f32 %v826, %v1041
        %v1043 = vpop.f32.mrb[0].mxu0
        %1044 = vmatprep.mubr.bf16.mxu0 0
        %1045 = vmatmul.mubr.bf16.gmra.mrb[0].mxu0 %v919
        %v1046 = vpop.f32.mrb[0].mxu0
        %v1047 = vadd.f32 %v831, %v1046
        %v1048 = vpop.f32.mrb[0].mxu0
        %v1049 = vpop.f32.mrb[0].mxu0
        %v1050 = vadd.f32 %v834, %v1049
        %v1051 = vpop.f32.mrb[0].mxu0
        %1052 = vmatprep.mubr.bf16.mxu0 0
        %1053 = vmatmul.mubr.bf16.gmra.mrb[0].mxu0 %v921
        %v1054 = vpop.f32.mrb[0].mxu0
        %v1055 = vadd.f32 %v839, %v1054
        %v1056 = vpop.f32.mrb[0].mxu0
        %v1057 = vpop.f32.mrb[0].mxu0
        %v1058 = vadd.f32 %v842, %v1057
        %v1059 = vpop.f32.mrb[0].mxu0
        %1060 = vmatprep.mubr.bf16.mxu0 0
        %1061 = vmatmul.mubr.bf16.gmra.mrb[0].mxu0 %v923
        %v1062 = vpop.f32.mrb[0].mxu0
        %v1063 = vadd.f32 %v847, %v1062
        %v1064 = vpop.f32.mrb[0].mxu0
        %v1065 = vpop.f32.mrb[0].mxu0
        %v1066 = vadd.f32 %v850, %v1065
        %v1067 = vpop.f32.mrb[0].mxu0
        %1068 = vmatprep.mubr.bf16.mxu0 0
        %1069 = vmatmul.mubr.bf16.gmra.mrb[0].mxu0 %v925
        %v1070 = vpop.f32.mrb[0].mxu0
        %v1071 = vadd.f32 %v855, %v1070
        %v1072 = vpop.f32.mrb[0].mxu0
        %v1073 = vpop.f32.mrb[0].mxu0
        %v1074 = vadd.f32 %v858, %v1073
        %v1075 = vpop.f32.mrb[0].mxu0
        %1076 = vmatprep.mubr.bf16.mxu0 0
        %1077 = vmatmul.mubr.bf16.gmra.mrb[0].mxu0 %v927
        %v1078 = vpop.f32.mrb[0].mxu0
        %v1079 = vadd.f32 %v863, %v1078
        %v1080 = vpop.f32.mrb[0].mxu0
        %v1081 = vpop.f32.mrb[0].mxu0
        %v1082 = vadd.f32 %v866, %v1081
        %v1083 = vpop.f32.mrb[0].mxu0
        %1084 = vmatprep.mubr.bf16.mxu0 0
        %1085 = vmatmul.mubr.bf16.gmra.mrb[0].mxu0 %v929
        %v1086 = vpop.f32.mrb[0].mxu0
        %v1087 = vadd.f32 %v871, %v1086
        %v1088 = vpop.f32.mrb[0].mxu0
        %v1089 = vpop.f32.mrb[0].mxu0
        %v1090 = vadd.f32 %v874, %v1089
        %v1091 = vpop.f32.mrb[0].mxu0
        %1092 = vmatprep.mubr.bf16.mxu0 0
        %1093 = vmatmul.mubr.bf16.gmra.mrb[0].mxu0 %v931
        %v1094 = vpop.f32.mrb[0].mxu0
        %v1095 = vadd.f32 %v879, %v1094
        %v1096 = vpop.f32.mrb[0].mxu0
        %v1097 = vpop.f32.mrb[0].mxu0
        %v1098 = vadd.f32 %v882, %v1097
        %v1099 = vpop.f32.mrb[0].mxu0
        %1100 = vmatprep.mubr.bf16.mxu0 0
        %1101 = vmatmul.mubr.bf16.gmra.mrb[0].mxu0 %v933
        %v1102 = vpop.f32.mrb[0].mxu0
        %v1103 = vadd.f32 %v887, %v1102
        %v1104 = vpop.f32.mrb[0].mxu0
        %v1105 = vpop.f32.mrb[0].mxu0
        %v1106 = vadd.f32 %v890, %v1105
        %v1107 = vpop.f32.mrb[0].mxu0
        %1108 = vmatprep.mubr.bf16.mxu0 0
        %1109 = vmatmul.mubr.bf16.gmra.mrb[0].mxu0 %v935
        %v1110 = vpop.f32.mrb[0].mxu0
        %v1111 = vadd.f32 %v895, %v1110
        %v1112 = vpop.f32.mrb[0].mxu0
        %v1113 = vpop.f32.mrb[0].mxu0
        %v1114 = vadd.f32 %v898, %v1113
        %v1115 = vpop.f32.mrb[0].mxu0
        %1116 = vdwg.mxu0
        %v1117 = vld [vmem:[%s353] sm:$0xe]
        %s1118 = scalar_lea.vmem %s363, 4
        %v1119 = vld [vmem:[%s1118] sm:$0x3]
        %v1121 = vunpack.c.l.b16 %v1117
        %v1122 = vpack.c.b16 %v461, %v1121
        %vm1123 = vcmask 1046528
        %v1124 = vrot.slane %v1122, 1
        %v1125 = vrot.slane %v498, 1
        %v1126 = vsel %vm1123, %v1124, %v1125
        %v1127 = vrot.slane %v499, 1
        %v1128 = vsel %vm1123, %v1125, %v1127
        %v1129 = vrot.slane %v500, 1
        %v1130 = vsel %vm1123, %v1127, %v1129
        %v1131 = vrot.slane %v501, 1
        %v1132 = vsel %vm1123, %v1129, %v1131
        %v1133 = vrot.slane %v502, 1
        %v1134 = vsel %vm1123, %v1131, %v1133
        %v1135 = vrot.slane %v503, 1
        %v1136 = vsel %vm1123, %v1133, %v1135
        %v1137 = vrot.slane %v504, 1
        %v1138 = vsel %vm1123, %v1135, %v1137
        %v1139 = vrot.slane %v505, 1
        %v1140 = vsel %vm1123, %v1137, %v1139
        %v1141 = vrot.slane %v506, 1
        %v1142 = vsel %vm1123, %v1139, %v1141
        %v1143 = vrot.slane %v507, 1
        %v1144 = vsel %vm1123, %v1141, %v1143
        %v1145 = vrot.slane %v508, 1
        %v1146 = vsel %vm1123, %v1143, %v1145
        %v1147 = vrot.slane %v509, 1
        %v1148 = vsel %vm1123, %v1145, %v1147
        %v1149 = vrot.slane %v510, 1
        %v1150 = vsel %vm1123, %v1147, %v1149
        %v1151 = vrot.slane %v511, 1
        %v1152 = vsel %vm1123, %v1149, %v1151
        %v1153 = vrot.slane %v512, 1
        %v1154 = vsel %vm1123, %v1151, %v1153
        %v1155 = vrot.slane %v513, 1
        %v1156 = vsel %vm1123, %v1153, %v1155
        %v1157 = vrot.slane %v514, 1
        %v1158 = vsel %vm1123, %v1155, %v1157
        %v1159 = vrot.slane %v515, 1
        %v1160 = vsel %vm1123, %v1157, %v1159
        %v1162 = vsel %vm665, %v1126, 0
        %v1165 = vsel %vm665, %v1128, 0
        %v1168 = vsel %vm665, %v1130, 0
        %v1171 = vsel %vm665, %v1132, 0
        %v1174 = vsel %vm665, %v1134, 0
        %v1177 = vsel %vm665, %v1136, 0
        %v1180 = vsel %vm665, %v1138, 0
        %v1183 = vsel %vm665, %v1140, 0
        %v1186 = vsel %vm665, %v1142, 0
        %v1189 = vsel %vm665, %v1144, 0
        %v1192 = vsel %vm665, %v1146, 0
        %v1195 = vsel %vm665, %v1148, 0
        %v1198 = vsel %vm665, %v1150, 0
        %v1201 = vsel %vm665, %v1152, 0
        %v1204 = vsel %vm665, %v1154, 0
        %v1207 = vsel %vm665, %v1156, 0
        %v1210 = vsel %vm665, %v1158, 0
        %v1213 = vsel %vm665, %v1160, 0
        %v1216 = vsel %vm720, %v1119, 0
        %1218 = vmatprep.subr.bf16.mxu0 0
        %1219 = vmatpush1.bf16.msra.mxu0 %v1216
        %1220 = vmatprep.subr.bf16.mxu0 0
        %1221 = vmatpush1.bf16.msra.mxu0 0
        %1222 = vmatprep.subr.bf16.mxu0 0
        %1223 = vmatpush1.bf16.msra.mxu0 0
        %1224 = vmatprep.subr.bf16.mxu0 0
        %1225 = vmatpush1.bf16.msra.mxu0 0
        %1226 = vmatprep.subr.bf16.mxu0 0
        %1227 = vmatpush1.bf16.msra.mxu0 0
        %1228 = vmatprep.subr.bf16.mxu0 0
        %1229 = vmatpush1.bf16.msra.mxu0 0
        %1230 = vmatprep.subr.bf16.mxu0 0
        %1231 = vmatpush1.bf16.msra.mxu0 0
        %1232 = vmatprep.subr.bf16.mxu0 0
        %1233 = vmatpush1.bf16.msra.mxu0 0
        %1234 = vmatprep.subr.bf16.mxu0 0
        %1235 = vmatpush1.bf16.msra.mxu0 0
        %1236 = vmatprep.subr.bf16.mxu0 0
        %1237 = vmatpush1.bf16.msra.mxu0 0
        %1238 = vmatprep.subr.bf16.mxu0 0
        %1239 = vmatpush1.bf16.msra.mxu0 0
        %1240 = vmatprep.subr.bf16.mxu0 0
        %1241 = vmatpush1.bf16.msra.mxu0 0
        %1242 = vmatprep.subr.bf16.mxu0 0
        %1243 = vmatpush1.bf16.msra.mxu0 0
        %1244 = vmatprep.subr.bf16.mxu0 0
        %1245 = vmatpush1.bf16.msra.mxu0 0
        %1246 = vmatprep.subr.bf16.mxu0 0
        %1247 = vmatpush1.bf16.msra.mxu0 0
        %1248 = vmatprep.subr.bf16.mxu0 0
        %1249 = vmatpush1.bf16.msra.mxu0 0
        %1250 = vmatprep.mubr.bf16.mxu0 0
        %1251 = vmatmul.mubr.bf16.gmra.mrb[0].mxu0 %v1162
        %v1252 = vpop.f32.mrb[0].mxu0
        %v1253 = vadd.f32 0.0, %v1252
        %v1254 = vpop.f32.mrb[0].mxu0
        %v1255 = vpop.f32.mrb[0].mxu0
        %v1256 = vadd.f32 0.0, %v1255
        %v1257 = vpop.f32.mrb[0].mxu0
        %1258 = vmatprep.mubr.bf16.mxu0 0
        %1259 = vmatmul.mubr.bf16.gmra.mrb[0].mxu0 %v1165
        %v1260 = vpop.f32.mrb[0].mxu0
        %v1261 = vadd.f32 0.0, %v1260
        %v1262 = vpop.f32.mrb[0].mxu0
        %v1263 = vpop.f32.mrb[0].mxu0
        %v1264 = vadd.f32 0.0, %v1263
        %v1265 = vpop.f32.mrb[0].mxu0
        %1266 = vmatprep.mubr.bf16.mxu0 0
        %1267 = vmatmul.mubr.bf16.gmra.mrb[0].mxu0 %v1168
        %v1268 = vpop.f32.mrb[0].mxu0
        %v1269 = vadd.f32 0.0, %v1268
        %v1270 = vpop.f32.mrb[0].mxu0
        %v1271 = vpop.f32.mrb[0].mxu0
        %v1272 = vadd.f32 0.0, %v1271
        %v1273 = vpop.f32.mrb[0].mxu0
        %1274 = vmatprep.mubr.bf16.mxu0 0
        %1275 = vmatmul.mubr.bf16.gmra.mrb[0].mxu0 %v1171
        %v1276 = vpop.f32.mrb[0].mxu0
        %v1277 = vadd.f32 0.0, %v1276
        %v1278 = vpop.f32.mrb[0].mxu0
        %v1279 = vpop.f32.mrb[0].mxu0
        %v1280 = vadd.f32 0.0, %v1279
        %v1281 = vpop.f32.mrb[0].mxu0
        %1282 = vmatprep.mubr.bf16.mxu0 0
        %1283 = vmatmul.mubr.bf16.gmra.mrb[0].mxu0 %v1174
        %v1284 = vpop.f32.mrb[0].mxu0
        %v1285 = vadd.f32 0.0, %v1284
        %v1286 = vpop.f32.mrb[0].mxu0
        %v1287 = vpop.f32.mrb[0].mxu0
        %v1288 = vadd.f32 0.0, %v1287
        %v1289 = vpop.f32.mrb[0].mxu0
        %1290 = vmatprep.mubr.bf16.mxu0 0
        %1291 = vmatmul.mubr.bf16.gmra.mrb[0].mxu0 %v1177
        %v1292 = vpop.f32.mrb[0].mxu0
        %v1293 = vadd.f32 0.0, %v1292
        %v1294 = vpop.f32.mrb[0].mxu0
        %v1295 = vpop.f32.mrb[0].mxu0
        %v1296 = vadd.f32 0.0, %v1295
        %v1297 = vpop.f32.mrb[0].mxu0
        %1298 = vmatprep.mubr.bf16.mxu0 0
        %1299 = vmatmul.mubr.bf16.gmra.mrb[0].mxu0 %v1180
        %v1300 = vpop.f32.mrb[0].mxu0
        %v1301 = vadd.f32 0.0, %v1300
        %v1302 = vpop.f32.mrb[0].mxu0
        %v1303 = vpop.f32.mrb[0].mxu0
        %v1304 = vadd.f32 0.0, %v1303
        %v1305 = vpop.f32.mrb[0].mxu0
        %1306 = vmatprep.mubr.bf16.mxu0 0
        %1307 = vmatmul.mubr.bf16.gmra.mrb[0].mxu0 %v1183
        %v1308 = vpop.f32.mrb[0].mxu0
        %v1309 = vadd.f32 0.0, %v1308
        %v1310 = vpop.f32.mrb[0].mxu0
        %v1311 = vpop.f32.mrb[0].mxu0
        %v1312 = vadd.f32 0.0, %v1311
        %v1313 = vpop.f32.mrb[0].mxu0
        %1314 = vmatprep.mubr.bf16.mxu0 0
        %1315 = vmatmul.mubr.bf16.gmra.mrb[0].mxu0 %v1186
        %v1316 = vpop.f32.mrb[0].mxu0
        %v1317 = vadd.f32 0.0, %v1316
        %v1318 = vpop.f32.mrb[0].mxu0
        %v1319 = vpop.f32.mrb[0].mxu0
        %v1320 = vadd.f32 0.0, %v1319
        %v1321 = vpop.f32.mrb[0].mxu0
        %1322 = vmatprep.mubr.bf16.mxu0 0
        %1323 = vmatmul.mubr.bf16.gmra.mrb[0].mxu0 %v1189
        %v1324 = vpop.f32.mrb[0].mxu0
        %v1325 = vadd.f32 0.0, %v1324
        %v1326 = vpop.f32.mrb[0].mxu0
        %v1327 = vpop.f32.mrb[0].mxu0
        %v1328 = vadd.f32 0.0, %v1327
        %v1329 = vpop.f32.mrb[0].mxu0
        %1330 = vmatprep.mubr.bf16.mxu0 0
        %1331 = vmatmul.mubr.bf16.gmra.mrb[0].mxu0 %v1192
        %v1332 = vpop.f32.mrb[0].mxu0
        %v1333 = vadd.f32 0.0, %v1332
        %v1334 = vpop.f32.mrb[0].mxu0
        %v1335 = vpop.f32.mrb[0].mxu0
        %v1336 = vadd.f32 0.0, %v1335
        %v1337 = vpop.f32.mrb[0].mxu0
        %1338 = vmatprep.mubr.bf16.mxu0 0
        %1339 = vmatmul.mubr.bf16.gmra.mrb[0].mxu0 %v1195
        %v1340 = vpop.f32.mrb[0].mxu0
        %v1341 = vadd.f32 0.0, %v1340
        %v1342 = vpop.f32.mrb[0].mxu0
        %v1343 = vpop.f32.mrb[0].mxu0
        %v1344 = vadd.f32 0.0, %v1343
        %v1345 = vpop.f32.mrb[0].mxu0
        %1346 = vmatprep.mubr.bf16.mxu0 0
        %1347 = vmatmul.mubr.bf16.gmra.mrb[0].mxu0 %v1198
        %v1348 = vpop.f32.mrb[0].mxu0
        %v1349 = vadd.f32 0.0, %v1348
        %v1350 = vpop.f32.mrb[0].mxu0
        %v1351 = vpop.f32.mrb[0].mxu0
        %v1352 = vadd.f32 0.0, %v1351
        %v1353 = vpop.f32.mrb[0].mxu0
        %1354 = vmatprep.mubr.bf16.mxu0 0
        %1355 = vmatmul.mubr.bf16.gmra.mrb[0].mxu0 %v1201
        %v1356 = vpop.f32.mrb[0].mxu0
        %v1357 = vadd.f32 0.0, %v1356
        %v1358 = vpop.f32.mrb[0].mxu0
        %v1359 = vpop.f32.mrb[0].mxu0
        %v1360 = vadd.f32 0.0, %v1359
        %v1361 = vpop.f32.mrb[0].mxu0
        %1362 = vmatprep.mubr.bf16.mxu0 0
        %1363 = vmatmul.mubr.bf16.gmra.mrb[0].mxu0 %v1204
        %v1364 = vpop.f32.mrb[0].mxu0
        %v1365 = vadd.f32 0.0, %v1364
        %v1366 = vpop.f32.mrb[0].mxu0
        %v1367 = vpop.f32.mrb[0].mxu0
        %v1368 = vadd.f32 0.0, %v1367
        %v1369 = vpop.f32.mrb[0].mxu0
        %1370 = vmatprep.mubr.bf16.mxu0 0
        %1371 = vmatmul.mubr.bf16.gmra.mrb[0].mxu0 %v1207
        %v1372 = vpop.f32.mrb[0].mxu0
        %v1373 = vadd.f32 0.0, %v1372
        %v1374 = vpop.f32.mrb[0].mxu0
        %v1375 = vpop.f32.mrb[0].mxu0
        %v1376 = vadd.f32 0.0, %v1375
        %v1377 = vpop.f32.mrb[0].mxu0
        %1378 = vmatprep.mubr.bf16.mxu0 0
        %1379 = vmatmul.mubr.bf16.gmra.mrb[0].mxu0 %v1210
        %v1380 = vpop.f32.mrb[0].mxu0
        %v1381 = vadd.f32 0.0, %v1380
        %v1382 = vpop.f32.mrb[0].mxu0
        %v1383 = vpop.f32.mrb[0].mxu0
        %v1384 = vadd.f32 0.0, %v1383
        %v1385 = vpop.f32.mrb[0].mxu0
        %1386 = vmatprep.mubr.bf16.mxu0 0
        %1387 = vmatmul.mubr.bf16.gmra.mrb[0].mxu0 %v1213
        %v1388 = vpop.f32.mrb[0].mxu0
        %v1389 = vadd.f32 0.0, %v1388
        %v1390 = vpop.f32.mrb[0].mxu0
        %v1391 = vpop.f32.mrb[0].mxu0
        %v1392 = vadd.f32 0.0, %v1391
        %v1393 = vpop.f32.mrb[0].mxu0
        %1394 = vdwg.mxu0
        %v1395 = vadd.f32 %v975, %v1253
        %v1396 = vadd.f32 %v978, %v1256
        %v1397 = vadd.f32 %v983, %v1261
        %v1398 = vadd.f32 %v986, %v1264
        %v1399 = vadd.f32 %v991, %v1269
        %v1400 = vadd.f32 %v994, %v1272
        %v1401 = vadd.f32 %v999, %v1277
        %v1402 = vadd.f32 %v1002, %v1280
        %v1403 = vadd.f32 %v1007, %v1285
        %v1404 = vadd.f32 %v1010, %v1288
        %v1405 = vadd.f32 %v1015, %v1293
        %v1406 = vadd.f32 %v1018, %v1296
        %v1407 = vadd.f32 %v1023, %v1301
        %v1408 = vadd.f32 %v1026, %v1304
        %v1409 = vadd.f32 %v1031, %v1309
        %v1410 = vadd.f32 %v1034, %v1312
        %v1411 = vadd.f32 %v1039, %v1317
        %v1412 = vadd.f32 %v1042, %v1320
        %v1413 = vadd.f32 %v1047, %v1325
        %v1414 = vadd.f32 %v1050, %v1328
        %v1415 = vadd.f32 %v1055, %v1333
        %v1416 = vadd.f32 %v1058, %v1336
        %v1417 = vadd.f32 %v1063, %v1341
        %v1418 = vadd.f32 %v1066, %v1344
        %v1419 = vadd.f32 %v1071, %v1349
        %v1420 = vadd.f32 %v1074, %v1352
        %v1421 = vadd.f32 %v1079, %v1357
        %v1422 = vadd.f32 %v1082, %v1360
        %v1423 = vadd.f32 %v1087, %v1365
        %v1424 = vadd.f32 %v1090, %v1368
        %v1425 = vadd.f32 %v1095, %v1373
        %v1426 = vadd.f32 %v1098, %v1376
        %v1427 = vadd.f32 %v1103, %v1381
        %v1428 = vadd.f32 %v1106, %v1384
        %v1429 = vadd.f32 %v1111, %v1389
        %v1430 = vadd.f32 %v1114, %v1392
        %v1431 = vld [vmem:[%s353 + $0x8] sm:$0xe]
        %v1432 = vld [vmem:[%s353 + $0xc] sm:$0xf]
        %v1433 = vld [vmem:[%s353 + $0x10] sm:$0xf]
        %v1434 = vld [vmem:[%s353 + $0x14] sm:$0xf]
        %v1435 = vld [vmem:[%s353 + $0x18] sm:$0xf]
        %v1436 = vld [vmem:[%s353 + $0x1c] sm:$0xf]
        %v1437 = vld [vmem:[%s353 + $0x20] sm:$0xf]
        %v1438 = vld [vmem:[%s353 + $0x24] sm:$0xf]
        %v1439 = vld [vmem:[%s353 + $0x28] sm:$0xf]
        %v1440 = vld [vmem:[%s353 + $0x2c] sm:$0xf]
        %v1441 = vld [vmem:[%s353 + $0x30] sm:$0xf]
        %v1442 = vld [vmem:[%s353 + $0x34] sm:$0xf]
        %v1443 = vld [vmem:[%s353 + $0x38] sm:$0xf]
        %v1444 = vld [vmem:[%s353 + $0x3c] sm:$0xf]
        %v1445 = vld [vmem:[%s353 + $0x40] sm:$0xf]
        %v1446 = vld [vmem:[%s353 + $0x44] sm:$0xf]
        %v1447 = vld [vmem:[%s353 + $0x48] sm:$0xf]
        %v1448 = vld [vmem:[%s353 + $0x4c] sm:$0xf]
        %v1449 = vld [vmem:[%s353 + $0x50] sm:$0xf]
        %v1450 = vld [vmem:[%s353 + $0x54] sm:$0xf]
        %v1451 = vld [vmem:[%s353 + $0x58] sm:$0xf]
        %v1452 = vld [vmem:[%s353 + $0x5c] sm:$0xf]
        %v1453 = vld [vmem:[%s353 + $0x60] sm:$0xf]
        %v1454 = vld [vmem:[%s353 + $0x64] sm:$0xf]
        %v1455 = vld [vmem:[%s353 + $0x68] sm:$0xf]
        %v1456 = vld [vmem:[%s353 + $0x6c] sm:$0xf]
        %v1457 = vld [vmem:[%s353 + $0x70] sm:$0xf]
        %v1458 = vld [vmem:[%s353 + $0x74] sm:$0xf]
        %v1459 = vld [vmem:[%s353 + $0x78] sm:$0xf]
        %v1460 = vld [vmem:[%s353 + $0x7c] sm:$0xf]
        %v1461 = vld [vmem:[%s353 + $0x80] sm:$0xf]
        %v1462 = vld [vmem:[%s353 + $0x84] sm:$0xf]
        %v1463 = vld [vmem:[%s353 + $0x88] sm:$0xf]
        %v1464 = vld [vmem:[%s353 + $0x8c] sm:$0xf]
        %v1465 = vld [vmem:[%s353 + $0x90] sm:$0xf]
        %v1466 = vld [vmem:[%s353 + $0x94] sm:$0xf]
        %v1467 = vld [vmem:[%s353 + $0x98] sm:$0x1]
        %s1468 = scalar_lea.vmem %s363, 6
        %v1469 = vld [vmem:[%s1468] sm:$0x3]
        %v1507 = vunpack.c.l.b16 %v1431
        %v1508 = vunpack.c.l.b16 %v1432
        %v1509 = vunpack.c.l.b16 %v1433
        %v1510 = vunpack.c.l.b16 %v1434
        %v1511 = vunpack.c.l.b16 %v1435
        %v1512 = vunpack.c.l.b16 %v1436
        %v1513 = vunpack.c.l.b16 %v1437
        %v1514 = vunpack.c.l.b16 %v1438
        %v1515 = vunpack.c.l.b16 %v1439
        %v1516 = vunpack.c.l.b16 %v1440
        %v1517 = vunpack.c.l.b16 %v1441
        %v1518 = vunpack.c.l.b16 %v1442
        %v1519 = vunpack.c.l.b16 %v1443
        %v1520 = vunpack.c.l.b16 %v1444
        %v1521 = vunpack.c.l.b16 %v1445
        %v1522 = vunpack.c.l.b16 %v1446
        %v1523 = vunpack.c.l.b16 %v1447
        %v1524 = vunpack.c.l.b16 %v1448
        %v1525 = vunpack.c.l.b16 %v1449
        %v1526 = vunpack.c.l.b16 %v1450
        %v1527 = vunpack.c.l.b16 %v1451
        %v1528 = vunpack.c.l.b16 %v1452
        %v1529 = vunpack.c.l.b16 %v1453
        %v1530 = vunpack.c.l.b16 %v1454
        %v1531 = vunpack.c.l.b16 %v1455
        %v1532 = vunpack.c.l.b16 %v1456
        %v1533 = vunpack.c.l.b16 %v1457
        %v1534 = vunpack.c.l.b16 %v1458
        %v1535 = vunpack.c.l.b16 %v1459
        %v1536 = vunpack.c.l.b16 %v1460
        %v1537 = vunpack.c.l.b16 %v1461
        %v1538 = vunpack.c.l.b16 %v1462
        %v1539 = vunpack.c.l.b16 %v1463
        %v1540 = vunpack.c.l.b16 %v1464
        %v1541 = vunpack.c.l.b16 %v1465
        %v1542 = vunpack.c.l.b16 %v1466
        %v1543 = vunpack.c.l.b16 %v1467
        %v1544 = vpack.c.b16 %v1508, %v1507
        %v1545 = vpack.c.b16 %v1510, %v1509
        %v1546 = vpack.c.b16 %v1512, %v1511
        %v1547 = vpack.c.b16 %v1514, %v1513
        %v1548 = vpack.c.b16 %v1516, %v1515
        %v1549 = vpack.c.b16 %v1518, %v1517
        %v1550 = vpack.c.b16 %v1520, %v1519
        %v1551 = vpack.c.b16 %v1522, %v1521
        %v1552 = vpack.c.b16 %v1524, %v1523
        %v1553 = vpack.c.b16 %v1526, %v1525
        %v1554 = vpack.c.b16 %v1528, %v1527
        %v1555 = vpack.c.b16 %v1530, %v1529
        %v1556 = vpack.c.b16 %v1532, %v1531
        %v1557 = vpack.c.b16 %v1534, %v1533
        %v1558 = vpack.c.b16 %v1536, %v1535
        %v1559 = vpack.c.b16 %v1538, %v1537
        %v1560 = vpack.c.b16 %v1540, %v1539
        %v1561 = vpack.c.b16 %v1542, %v1541
        %v1562 = vpack.c.b16 %v1543, %v1543
        %v1563 = vrot.slane %v1544, 1
        %v1564 = vrot.slane %v1545, 1
        %v1565 = vsel %vm1123, %v1563, %v1564
        %v1566 = vrot.slane %v1546, 1
        %v1567 = vsel %vm1123, %v1564, %v1566
        %v1568 = vrot.slane %v1547, 1
        %v1569 = vsel %vm1123, %v1566, %v1568
        %v1570 = vrot.slane %v1548, 1
        %v1571 = vsel %vm1123, %v1568, %v1570
        %v1572 = vrot.slane %v1549, 1
        %v1573 = vsel %vm1123, %v1570, %v1572
        %v1574 = vrot.slane %v1550, 1
        %v1575 = vsel %vm1123, %v1572, %v1574
        %v1576 = vrot.slane %v1551, 1
        %v1577 = vsel %vm1123, %v1574, %v1576
        %v1578 = vrot.slane %v1552, 1
        %v1579 = vsel %vm1123, %v1576, %v1578
        %v1580 = vrot.slane %v1553, 1
        %v1581 = vsel %vm1123, %v1578, %v1580
        %v1582 = vrot.slane %v1554, 1
        %v1583 = vsel %vm1123, %v1580, %v1582
        %v1584 = vrot.slane %v1555, 1
        %v1585 = vsel %vm1123, %v1582, %v1584
        %v1586 = vrot.slane %v1556, 1
        %v1587 = vsel %vm1123, %v1584, %v1586
        %v1588 = vrot.slane %v1557, 1
        %v1589 = vsel %vm1123, %v1586, %v1588
        %v1590 = vrot.slane %v1558, 1
        %v1591 = vsel %vm1123, %v1588, %v1590
        %v1592 = vrot.slane %v1559, 1
        %v1593 = vsel %vm1123, %v1590, %v1592
        %v1594 = vrot.slane %v1560, 1
        %v1595 = vsel %vm1123, %v1592, %v1594
        %v1596 = vrot.slane %v1561, 1
        %v1597 = vsel %vm1123, %v1594, %v1596
        %v1598 = vrot.slane %v1562, 1
        %v1599 = vsel %vm1123, %v1596, %v1598
        %v1601 = vsel %vm665, %v1565, 0
        %v1604 = vsel %vm665, %v1567, 0
        %v1607 = vsel %vm665, %v1569, 0
        %v1610 = vsel %vm665, %v1571, 0
        %v1613 = vsel %vm665, %v1573, 0
        %v1616 = vsel %vm665, %v1575, 0
        %v1619 = vsel %vm665, %v1577, 0
        %v1622 = vsel %vm665, %v1579, 0
        %v1625 = vsel %vm665, %v1581, 0
        %v1628 = vsel %vm665, %v1583, 0
        %v1631 = vsel %vm665, %v1585, 0
        %v1634 = vsel %vm665, %v1587, 0
        %v1637 = vsel %vm665, %v1589, 0
        %v1640 = vsel %vm665, %v1591, 0
        %v1643 = vsel %vm665, %v1593, 0
        %v1646 = vsel %vm665, %v1595, 0
        %v1649 = vsel %vm665, %v1597, 0
        %v1652 = vsel %vm665, %v1599, 0
        %v1655 = vsel %vm720, %v1469, 0
        %1657 = vmatprep.subr.bf16.mxu0 0
        %1658 = vmatpush1.bf16.msra.mxu0 %v1655
        %1659 = vmatprep.subr.bf16.mxu0 0
        %1660 = vmatpush1.bf16.msra.mxu0 0
        %1661 = vmatprep.subr.bf16.mxu0 0
        %1662 = vmatpush1.bf16.msra.mxu0 0
        %1663 = vmatprep.subr.bf16.mxu0 0
        %1664 = vmatpush1.bf16.msra.mxu0 0
        %1665 = vmatprep.subr.bf16.mxu0 0
        %1666 = vmatpush1.bf16.msra.mxu0 0
        %1667 = vmatprep.subr.bf16.mxu0 0
        %1668 = vmatpush1.bf16.msra.mxu0 0
        %1669 = vmatprep.subr.bf16.mxu0 0
        %1670 = vmatpush1.bf16.msra.mxu0 0
        %1671 = vmatprep.subr.bf16.mxu0 0
        %1672 = vmatpush1.bf16.msra.mxu0 0
        %1673 = vmatprep.subr.bf16.mxu0 0
        %1674 = vmatpush1.bf16.msra.mxu0 0
        %1675 = vmatprep.subr.bf16.mxu0 0
        %1676 = vmatpush1.bf16.msra.mxu0 0
        %1677 = vmatprep.subr.bf16.mxu0 0
        %1678 = vmatpush1.bf16.msra.mxu0 0
        %1679 = vmatprep.subr.bf16.mxu0 0
        %1680 = vmatpush1.bf16.msra.mxu0 0
        %1681 = vmatprep.subr.bf16.mxu0 0
        %1682 = vmatpush1.bf16.msra.mxu0 0
        %1683 = vmatprep.subr.bf16.mxu0 0
        %1684 = vmatpush1.bf16.msra.mxu0 0
        %1685 = vmatprep.subr.bf16.mxu0 0
        %1686 = vmatpush1.bf16.msra.mxu0 0
        %1687 = vmatprep.subr.bf16.mxu0 0
        %1688 = vmatpush1.bf16.msra.mxu0 0
        %1689 = vmatprep.mubr.bf16.mxu0 0
        %1690 = vmatmul.mubr.bf16.gmra.mrb[0].mxu0 %v1601
        %v1691 = vpop.f32.mrb[0].mxu0
        %v1692 = vadd.f32 0.0, %v1691
        %v1693 = vpop.f32.mrb[0].mxu0
        %v1694 = vpop.f32.mrb[0].mxu0
        %v1695 = vadd.f32 0.0, %v1694
        %v1696 = vpop.f32.mrb[0].mxu0
        %1697 = vmatprep.mubr.bf16.mxu0 0
        %1698 = vmatmul.mubr.bf16.gmra.mrb[0].mxu0 %v1604
        %v1699 = vpop.f32.mrb[0].mxu0
        %v1700 = vadd.f32 0.0, %v1699
        %v1701 = vpop.f32.mrb[0].mxu0
        %v1702 = vpop.f32.mrb[0].mxu0
        %v1703 = vadd.f32 0.0, %v1702
        %v1704 = vpop.f32.mrb[0].mxu0
        %1705 = vmatprep.mubr.bf16.mxu0 0
        %1706 = vmatmul.mubr.bf16.gmra.mrb[0].mxu0 %v1607
        %v1707 = vpop.f32.mrb[0].mxu0
        %v1708 = vadd.f32 0.0, %v1707
        %v1709 = vpop.f32.mrb[0].mxu0
        %v1710 = vpop.f32.mrb[0].mxu0
        %v1711 = vadd.f32 0.0, %v1710
        %v1712 = vpop.f32.mrb[0].mxu0
        %1713 = vmatprep.mubr.bf16.mxu0 0
        %1714 = vmatmul.mubr.bf16.gmra.mrb[0].mxu0 %v1610
        %v1715 = vpop.f32.mrb[0].mxu0
        %v1716 = vadd.f32 0.0, %v1715
        %v1717 = vpop.f32.mrb[0].mxu0
        %v1718 = vpop.f32.mrb[0].mxu0
        %v1719 = vadd.f32 0.0, %v1718
        %v1720 = vpop.f32.mrb[0].mxu0
        %1721 = vmatprep.mubr.bf16.mxu0 0
        %1722 = vmatmul.mubr.bf16.gmra.mrb[0].mxu0 %v1613
        %v1723 = vpop.f32.mrb[0].mxu0
        %v1724 = vadd.f32 0.0, %v1723
        %v1725 = vpop.f32.mrb[0].mxu0
        %v1726 = vpop.f32.mrb[0].mxu0
        %v1727 = vadd.f32 0.0, %v1726
        %v1728 = vpop.f32.mrb[0].mxu0
        %1729 = vmatprep.mubr.bf16.mxu0 0
        %1730 = vmatmul.mubr.bf16.gmra.mrb[0].mxu0 %v1616
        %v1731 = vpop.f32.mrb[0].mxu0
        %v1732 = vadd.f32 0.0, %v1731
        %v1733 = vpop.f32.mrb[0].mxu0
        %v1734 = vpop.f32.mrb[0].mxu0
        %v1735 = vadd.f32 0.0, %v1734
        %v1736 = vpop.f32.mrb[0].mxu0
        %1737 = vmatprep.mubr.bf16.mxu0 0
        %1738 = vmatmul.mubr.bf16.gmra.mrb[0].mxu0 %v1619
        %v1739 = vpop.f32.mrb[0].mxu0
        %v1740 = vadd.f32 0.0, %v1739
        %v1741 = vpop.f32.mrb[0].mxu0
        %v1742 = vpop.f32.mrb[0].mxu0
        %v1743 = vadd.f32 0.0, %v1742
        %v1744 = vpop.f32.mrb[0].mxu0
        %1745 = vmatprep.mubr.bf16.mxu0 0
        %1746 = vmatmul.mubr.bf16.gmra.mrb[0].mxu0 %v1622
        %v1747 = vpop.f32.mrb[0].mxu0
        %v1748 = vadd.f32 0.0, %v1747
        %v1749 = vpop.f32.mrb[0].mxu0
        %v1750 = vpop.f32.mrb[0].mxu0
        %v1751 = vadd.f32 0.0, %v1750
        %v1752 = vpop.f32.mrb[0].mxu0
        %1753 = vmatprep.mubr.bf16.mxu0 0
        %1754 = vmatmul.mubr.bf16.gmra.mrb[0].mxu0 %v1625
        %v1755 = vpop.f32.mrb[0].mxu0
        %v1756 = vadd.f32 0.0, %v1755
        %v1757 = vpop.f32.mrb[0].mxu0
        %v1758 = vpop.f32.mrb[0].mxu0
        %v1759 = vadd.f32 0.0, %v1758
        %v1760 = vpop.f32.mrb[0].mxu0
        %1761 = vmatprep.mubr.bf16.mxu0 0
        %1762 = vmatmul.mubr.bf16.gmra.mrb[0].mxu0 %v1628
        %v1763 = vpop.f32.mrb[0].mxu0
        %v1764 = vadd.f32 0.0, %v1763
        %v1765 = vpop.f32.mrb[0].mxu0
        %v1766 = vpop.f32.mrb[0].mxu0
        %v1767 = vadd.f32 0.0, %v1766
        %v1768 = vpop.f32.mrb[0].mxu0
        %1769 = vmatprep.mubr.bf16.mxu0 0
        %1770 = vmatmul.mubr.bf16.gmra.mrb[0].mxu0 %v1631
        %v1771 = vpop.f32.mrb[0].mxu0
        %v1772 = vadd.f32 0.0, %v1771
        %v1773 = vpop.f32.mrb[0].mxu0
        %v1774 = vpop.f32.mrb[0].mxu0
        %v1775 = vadd.f32 0.0, %v1774
        %v1776 = vpop.f32.mrb[0].mxu0
        %1777 = vmatprep.mubr.bf16.mxu0 0
        %1778 = vmatmul.mubr.bf16.gmra.mrb[0].mxu0 %v1634
        %v1779 = vpop.f32.mrb[0].mxu0
        %v1780 = vadd.f32 0.0, %v1779
        %v1781 = vpop.f32.mrb[0].mxu0
        %v1782 = vpop.f32.mrb[0].mxu0
        %v1783 = vadd.f32 0.0, %v1782
        %v1784 = vpop.f32.mrb[0].mxu0
        %1785 = vmatprep.mubr.bf16.mxu0 0
        %1786 = vmatmul.mubr.bf16.gmra.mrb[0].mxu0 %v1637
        %v1787 = vpop.f32.mrb[0].mxu0
        %v1788 = vadd.f32 0.0, %v1787
        %v1789 = vpop.f32.mrb[0].mxu0
        %v1790 = vpop.f32.mrb[0].mxu0
        %v1791 = vadd.f32 0.0, %v1790
        %v1792 = vpop.f32.mrb[0].mxu0
        %1793 = vmatprep.mubr.bf16.mxu0 0
        %1794 = vmatmul.mubr.bf16.gmra.mrb[0].mxu0 %v1640
        %v1795 = vpop.f32.mrb[0].mxu0
        %v1796 = vadd.f32 0.0, %v1795
        %v1797 = vpop.f32.mrb[0].mxu0
        %v1798 = vpop.f32.mrb[0].mxu0
        %v1799 = vadd.f32 0.0, %v1798
        %v1800 = vpop.f32.mrb[0].mxu0
        %1801 = vmatprep.mubr.bf16.mxu0 0
        %1802 = vmatmul.mubr.bf16.gmra.mrb[0].mxu0 %v1643
        %v1803 = vpop.f32.mrb[0].mxu0
        %v1804 = vadd.f32 0.0, %v1803
        %v1805 = vpop.f32.mrb[0].mxu0
        %v1806 = vpop.f32.mrb[0].mxu0
        %v1807 = vadd.f32 0.0, %v1806
        %v1808 = vpop.f32.mrb[0].mxu0
        %1809 = vmatprep.mubr.bf16.mxu0 0
        %1810 = vmatmul.mubr.bf16.gmra.mrb[0].mxu0 %v1646
        %v1811 = vpop.f32.mrb[0].mxu0
        %v1812 = vadd.f32 0.0, %v1811
        %v1813 = vpop.f32.mrb[0].mxu0
        %v1814 = vpop.f32.mrb[0].mxu0
        %v1815 = vadd.f32 0.0, %v1814
        %v1816 = vpop.f32.mrb[0].mxu0
        %1817 = vmatprep.mubr.bf16.mxu0 0
        %1818 = vmatmul.mubr.bf16.gmra.mrb[0].mxu0 %v1649
        %v1819 = vpop.f32.mrb[0].mxu0
        %v1820 = vadd.f32 0.0, %v1819
        %v1821 = vpop.f32.mrb[0].mxu0
        %v1822 = vpop.f32.mrb[0].mxu0
        %v1823 = vadd.f32 0.0, %v1822
        %v1824 = vpop.f32.mrb[0].mxu0
        %1825 = vmatprep.mubr.bf16.mxu0 0
        %1826 = vmatmul.mubr.bf16.gmra.mrb[0].mxu0 %v1652
        %v1827 = vpop.f32.mrb[0].mxu0
        %v1828 = vadd.f32 0.0, %v1827
        %v1829 = vpop.f32.mrb[0].mxu0
        %v1830 = vpop.f32.mrb[0].mxu0
        %v1831 = vadd.f32 0.0, %v1830
        %v1832 = vpop.f32.mrb[0].mxu0
        %1833 = vdwg.mxu0
        %v1834 = vadd.f32 %v1395, %v1692
        %v1835 = vadd.f32 %v1396, %v1695
        %v1836 = vadd.f32 %v1397, %v1700
        %v1837 = vadd.f32 %v1398, %v1703
        %v1838 = vadd.f32 %v1399, %v1708
        %v1839 = vadd.f32 %v1400, %v1711
        %v1840 = vadd.f32 %v1401, %v1716
        %v1841 = vadd.f32 %v1402, %v1719
        %v1842 = vadd.f32 %v1403, %v1724
        %v1843 = vadd.f32 %v1404, %v1727
        %v1844 = vadd.f32 %v1405, %v1732
        %v1845 = vadd.f32 %v1406, %v1735
        %v1846 = vadd.f32 %v1407, %v1740
        %v1847 = vadd.f32 %v1408, %v1743
        %v1848 = vadd.f32 %v1409, %v1748
        %v1849 = vadd.f32 %v1410, %v1751
        %v1850 = vadd.f32 %v1411, %v1756
        %v1851 = vadd.f32 %v1412, %v1759
        %v1852 = vadd.f32 %v1413, %v1764
        %v1853 = vadd.f32 %v1414, %v1767
        %v1854 = vadd.f32 %v1415, %v1772
        %v1855 = vadd.f32 %v1416, %v1775
        %v1856 = vadd.f32 %v1417, %v1780
        %v1857 = vadd.f32 %v1418, %v1783
        %v1858 = vadd.f32 %v1419, %v1788
        %v1859 = vadd.f32 %v1420, %v1791
        %v1860 = vadd.f32 %v1421, %v1796
        %v1861 = vadd.f32 %v1422, %v1799
        %v1862 = vadd.f32 %v1423, %v1804
        %v1863 = vadd.f32 %v1424, %v1807
        %v1864 = vadd.f32 %v1425, %v1812
        %v1865 = vadd.f32 %v1426, %v1815
        %v1866 = vadd.f32 %v1427, %v1820
        %v1867 = vadd.f32 %v1428, %v1823
        %v1868 = vadd.f32 %v1429, %v1828
        %v1869 = vadd.f32 %v1430, %v1831
        %v1870 = vld [vmem:[%s353 + $0x98] sm:$0x3]
        %s1871 = scalar_lea.vmem %s363, 8
        %v1872 = vld [vmem:[%s1871] sm:$0x3]
        %v1874 = vunpack.c.l.b16 %v1870
        %v1875 = vpack.c.b16 %v1874, %v1874
        %vm1876 = vsmask.f32 6400
        %v1878 = vshrl.u32 %v1544, 16
        %v1880 = vrot.slane %v1878, 1
        %v1881 = vshll.u32 %v1544, 16
        %v1883 = vrot.slane %v1881, 2
        %v1884 = vor.u32 %v1880, %v1883
        %v1886 = vshrl.u32 %v1545, 16
        %v1888 = vrot.slane %v1886, 1
        %v1889 = vshll.u32 %v1545, 16
        %v1891 = vrot.slane %v1889, 2
        %v1892 = vor.u32 %v1888, %v1891
        %v1893 = vsel %vm1876, %v1884, %v1892
        %v1895 = vshrl.u32 %v1546, 16
        %v1897 = vrot.slane %v1895, 1
        %v1898 = vshll.u32 %v1546, 16
        %v1900 = vrot.slane %v1898, 2
        %v1901 = vor.u32 %v1897, %v1900
        %v1902 = vsel %vm1876, %v1892, %v1901
        %v1904 = vshrl.u32 %v1547, 16
        %v1906 = vrot.slane %v1904, 1
        %v1907 = vshll.u32 %v1547, 16
        %v1909 = vrot.slane %v1907, 2
        %v1910 = vor.u32 %v1906, %v1909
        %v1911 = vsel %vm1876, %v1901, %v1910
        %v1913 = vshrl.u32 %v1548, 16
        %v1915 = vrot.slane %v1913, 1
        %v1916 = vshll.u32 %v1548, 16
        %v1918 = vrot.slane %v1916, 2
        %v1919 = vor.u32 %v1915, %v1918
        %v1920 = vsel %vm1876, %v1910, %v1919
        %v1922 = vshrl.u32 %v1549, 16
        %v1924 = vrot.slane %v1922, 1
        %v1925 = vshll.u32 %v1549, 16
        %v1927 = vrot.slane %v1925, 2
        %v1928 = vor.u32 %v1924, %v1927
        %v1929 = vsel %vm1876, %v1919, %v1928
        %v1931 = vshrl.u32 %v1550, 16
        %v1933 = vrot.slane %v1931, 1
        %v1934 = vshll.u32 %v1550, 16
        %v1936 = vrot.slane %v1934, 2
        %v1937 = vor.u32 %v1933, %v1936
        %v1938 = vsel %vm1876, %v1928, %v1937
        %v1940 = vshrl.u32 %v1551, 16
        %v1942 = vrot.slane %v1940, 1
        %v1943 = vshll.u32 %v1551, 16
        %v1945 = vrot.slane %v1943, 2
        %v1946 = vor.u32 %v1942, %v1945
        %v1947 = vsel %vm1876, %v1937, %v1946
        %v1949 = vshrl.u32 %v1552, 16
        %v1951 = vrot.slane %v1949, 1
        %v1952 = vshll.u32 %v1552, 16
        %v1954 = vrot.slane %v1952, 2
        %v1955 = vor.u32 %v1951, %v1954
        %v1956 = vsel %vm1876, %v1946, %v1955
        %v1958 = vshrl.u32 %v1553, 16
        %v1960 = vrot.slane %v1958, 1
        %v1961 = vshll.u32 %v1553, 16
        %v1963 = vrot.slane %v1961, 2
        %v1964 = vor.u32 %v1960, %v1963
        %v1965 = vsel %vm1876, %v1955, %v1964
        %v1967 = vshrl.u32 %v1554, 16
        %v1969 = vrot.slane %v1967, 1
        %v1970 = vshll.u32 %v1554, 16
        %v1972 = vrot.slane %v1970, 2
        %v1973 = vor.u32 %v1969, %v1972
        %v1974 = vsel %vm1876, %v1964, %v1973
        %v1976 = vshrl.u32 %v1555, 16
        %v1978 = vrot.slane %v1976, 1
        %v1979 = vshll.u32 %v1555, 16
        %v1981 = vrot.slane %v1979, 2
        %v1982 = vor.u32 %v1978, %v1981
        %v1983 = vsel %vm1876, %v1973, %v1982
        %v1985 = vshrl.u32 %v1556, 16
        %v1987 = vrot.slane %v1985, 1
        %v1988 = vshll.u32 %v1556, 16
        %v1990 = vrot.slane %v1988, 2
        %v1991 = vor.u32 %v1987, %v1990
        %v1992 = vsel %vm1876, %v1982, %v1991
        %v1994 = vshrl.u32 %v1557, 16
        %v1996 = vrot.slane %v1994, 1
        %v1997 = vshll.u32 %v1557, 16
        %v1999 = vrot.slane %v1997, 2
        %v2000 = vor.u32 %v1996, %v1999
        %v2001 = vsel %vm1876, %v1991, %v2000
        %v2003 = vshrl.u32 %v1558, 16
        %v2005 = vrot.slane %v2003, 1
        %v2006 = vshll.u32 %v1558, 16
        %v2008 = vrot.slane %v2006, 2
        %v2009 = vor.u32 %v2005, %v2008
        %v2010 = vsel %vm1876, %v2000, %v2009
        %v2012 = vshrl.u32 %v1559, 16
        %v2014 = vrot.slane %v2012, 1
        %v2015 = vshll.u32 %v1559, 16
        %v2017 = vrot.slane %v2015, 2
        %v2018 = vor.u32 %v2014, %v2017
        %v2019 = vsel %vm1876, %v2009, %v2018
        %v2021 = vshrl.u32 %v1560, 16
        %v2023 = vrot.slane %v2021, 1
        %v2024 = vshll.u32 %v1560, 16
        %v2026 = vrot.slane %v2024, 2
        %v2027 = vor.u32 %v2023, %v2026
        %v2028 = vsel %vm1876, %v2018, %v2027
        %v2030 = vshrl.u32 %v1561, 16
        %v2032 = vrot.slane %v2030, 1
        %v2033 = vshll.u32 %v1561, 16
        %v2035 = vrot.slane %v2033, 2
        %v2036 = vor.u32 %v2032, %v2035
        %v2037 = vsel %vm1876, %v2027, %v2036
        %v2039 = vshrl.u32 %v1875, 16
        %v2041 = vrot.slane %v2039, 1
        %v2042 = vshll.u32 %v1875, 16
        %v2044 = vrot.slane %v2042, 2
        %v2045 = vor.u32 %v2041, %v2044
        %v2046 = vsel %vm1876, %v2036, %v2045
        %v2048 = vsel %vm665, %v1893, 0
        %v2051 = vsel %vm665, %v1902, 0
        %v2054 = vsel %vm665, %v1911, 0
        %v2057 = vsel %vm665, %v1920, 0
        %v2060 = vsel %vm665, %v1929, 0
        %v2063 = vsel %vm665, %v1938, 0
        %v2066 = vsel %vm665, %v1947, 0
        %v2069 = vsel %vm665, %v1956, 0
        %v2072 = vsel %vm665, %v1965, 0
        %v2075 = vsel %vm665, %v1974, 0
        %v2078 = vsel %vm665, %v1983, 0
        %v2081 = vsel %vm665, %v1992, 0
        %v2084 = vsel %vm665, %v2001, 0
        %v2087 = vsel %vm665, %v2010, 0
        %v2090 = vsel %vm665, %v2019, 0
        %v2093 = vsel %vm665, %v2028, 0
        %v2096 = vsel %vm665, %v2037, 0
        %v2099 = vsel %vm665, %v2046, 0
        %v2102 = vsel %vm720, %v1872, 0
        %2104 = vmatprep.subr.bf16.mxu0 0
        %2105 = vmatpush1.bf16.msra.mxu0 %v2102
        %2106 = vmatprep.subr.bf16.mxu0 0
        %2107 = vmatpush1.bf16.msra.mxu0 0
        %2108 = vmatprep.subr.bf16.mxu0 0
        %2109 = vmatpush1.bf16.msra.mxu0 0
        %2110 = vmatprep.subr.bf16.mxu0 0
        %2111 = vmatpush1.bf16.msra.mxu0 0
        %2112 = vmatprep.subr.bf16.mxu0 0
        %2113 = vmatpush1.bf16.msra.mxu0 0
        %2114 = vmatprep.subr.bf16.mxu0 0
        %2115 = vmatpush1.bf16.msra.mxu0 0
        %2116 = vmatprep.subr.bf16.mxu0 0
        %2117 = vmatpush1.bf16.msra.mxu0 0
        %2118 = vmatprep.subr.bf16.mxu0 0
        %2119 = vmatpush1.bf16.msra.mxu0 0
        %2120 = vmatprep.subr.bf16.mxu0 0
        %2121 = vmatpush1.bf16.msra.mxu0 0
        %2122 = vmatprep.subr.bf16.mxu0 0
        %2123 = vmatpush1.bf16.msra.mxu0 0
        %2124 = vmatprep.subr.bf16.mxu0 0
        %2125 = vmatpush1.bf16.msra.mxu0 0
        %2126 = vmatprep.subr.bf16.mxu0 0
        %2127 = vmatpush1.bf16.msra.mxu0 0
        %2128 = vmatprep.subr.bf16.mxu0 0
        %2129 = vmatpush1.bf16.msra.mxu0 0
        %2130 = vmatprep.subr.bf16.mxu0 0
        %2131 = vmatpush1.bf16.msra.mxu0 0
        %2132 = vmatprep.subr.bf16.mxu0 0
        %2133 = vmatpush1.bf16.msra.mxu0 0
        %2134 = vmatprep.subr.bf16.mxu0 0
        %2135 = vmatpush1.bf16.msra.mxu0 0
        %2136 = vmatprep.mubr.bf16.mxu0 0
        %2137 = vmatmul.mubr.bf16.gmra.mrb[0].mxu0 %v2048
        %v2138 = vpop.f32.mrb[0].mxu0
        %v2139 = vadd.f32 0.0, %v2138
        %v2140 = vpop.f32.mrb[0].mxu0
        %v2141 = vpop.f32.mrb[0].mxu0
        %v2142 = vadd.f32 0.0, %v2141
        %v2143 = vpop.f32.mrb[0].mxu0
        %2144 = vmatprep.mubr.bf16.mxu0 0
        %2145 = vmatmul.mubr.bf16.gmra.mrb[0].mxu0 %v2051
        %v2146 = vpop.f32.mrb[0].mxu0
        %v2147 = vadd.f32 0.0, %v2146
        %v2148 = vpop.f32.mrb[0].mxu0
        %v2149 = vpop.f32.mrb[0].mxu0
        %v2150 = vadd.f32 0.0, %v2149
        %v2151 = vpop.f32.mrb[0].mxu0
        %2152 = vmatprep.mubr.bf16.mxu0 0
        %2153 = vmatmul.mubr.bf16.gmra.mrb[0].mxu0 %v2054
        %v2154 = vpop.f32.mrb[0].mxu0
        %v2155 = vadd.f32 0.0, %v2154
        %v2156 = vpop.f32.mrb[0].mxu0
        %v2157 = vpop.f32.mrb[0].mxu0
        %v2158 = vadd.f32 0.0, %v2157
        %v2159 = vpop.f32.mrb[0].mxu0
        %2160 = vmatprep.mubr.bf16.mxu0 0
        %2161 = vmatmul.mubr.bf16.gmra.mrb[0].mxu0 %v2057
        %v2162 = vpop.f32.mrb[0].mxu0
        %v2163 = vadd.f32 0.0, %v2162
        %v2164 = vpop.f32.mrb[0].mxu0
        %v2165 = vpop.f32.mrb[0].mxu0
        %v2166 = vadd.f32 0.0, %v2165
        %v2167 = vpop.f32.mrb[0].mxu0
        %2168 = vmatprep.mubr.bf16.mxu0 0
        %2169 = vmatmul.mubr.bf16.gmra.mrb[0].mxu0 %v2060
        %v2170 = vpop.f32.mrb[0].mxu0
        %v2171 = vadd.f32 0.0, %v2170
        %v2172 = vpop.f32.mrb[0].mxu0
        %v2173 = vpop.f32.mrb[0].mxu0
        %v2174 = vadd.f32 0.0, %v2173
        %v2175 = vpop.f32.mrb[0].mxu0
        %2176 = vmatprep.mubr.bf16.mxu0 0
        %2177 = vmatmul.mubr.bf16.gmra.mrb[0].mxu0 %v2063
        %v2178 = vpop.f32.mrb[0].mxu0
        %v2179 = vadd.f32 0.0, %v2178
        %v2180 = vpop.f32.mrb[0].mxu0
        %v2181 = vpop.f32.mrb[0].mxu0
        %v2182 = vadd.f32 0.0, %v2181
        %v2183 = vpop.f32.mrb[0].mxu0
        %2184 = vmatprep.mubr.bf16.mxu0 0
        %2185 = vmatmul.mubr.bf16.gmra.mrb[0].mxu0 %v2066
        %v2186 = vpop.f32.mrb[0].mxu0
        %v2187 = vadd.f32 0.0, %v2186
        %v2188 = vpop.f32.mrb[0].mxu0
        %v2189 = vpop.f32.mrb[0].mxu0
        %v2190 = vadd.f32 0.0, %v2189
        %v2191 = vpop.f32.mrb[0].mxu0
        %2192 = vmatprep.mubr.bf16.mxu0 0
        %2193 = vmatmul.mubr.bf16.gmra.mrb[0].mxu0 %v2069
        %v2194 = vpop.f32.mrb[0].mxu0
        %v2195 = vadd.f32 0.0, %v2194
        %v2196 = vpop.f32.mrb[0].mxu0
        %v2197 = vpop.f32.mrb[0].mxu0
        %v2198 = vadd.f32 0.0, %v2197
        %v2199 = vpop.f32.mrb[0].mxu0
        %2200 = vmatprep.mubr.bf16.mxu0 0
        %2201 = vmatmul.mubr.bf16.gmra.mrb[0].mxu0 %v2072
        %v2202 = vpop.f32.mrb[0].mxu0
        %v2203 = vadd.f32 0.0, %v2202
        %v2204 = vpop.f32.mrb[0].mxu0
        %v2205 = vpop.f32.mrb[0].mxu0
        %v2206 = vadd.f32 0.0, %v2205
        %v2207 = vpop.f32.mrb[0].mxu0
        %2208 = vmatprep.mubr.bf16.mxu0 0
        %2209 = vmatmul.mubr.bf16.gmra.mrb[0].mxu0 %v2075
        %v2210 = vpop.f32.mrb[0].mxu0
        %v2211 = vadd.f32 0.0, %v2210
        %v2212 = vpop.f32.mrb[0].mxu0
        %v2213 = vpop.f32.mrb[0].mxu0
        %v2214 = vadd.f32 0.0, %v2213
        %v2215 = vpop.f32.mrb[0].mxu0
        %2216 = vmatprep.mubr.bf16.mxu0 0
        %2217 = vmatmul.mubr.bf16.gmra.mrb[0].mxu0 %v2078
        %v2218 = vpop.f32.mrb[0].mxu0
        %v2219 = vadd.f32 0.0, %v2218
        %v2220 = vpop.f32.mrb[0].mxu0
        %v2221 = vpop.f32.mrb[0].mxu0
        %v2222 = vadd.f32 0.0, %v2221
        %v2223 = vpop.f32.mrb[0].mxu0
        %2224 = vmatprep.mubr.bf16.mxu0 0
        %2225 = vmatmul.mubr.bf16.gmra.mrb[0].mxu0 %v2081
        %v2226 = vpop.f32.mrb[0].mxu0
        %v2227 = vadd.f32 0.0, %v2226
        %v2228 = vpop.f32.mrb[0].mxu0
        %v2229 = vpop.f32.mrb[0].mxu0
        %v2230 = vadd.f32 0.0, %v2229
        %v2231 = vpop.f32.mrb[0].mxu0
        %2232 = vmatprep.mubr.bf16.mxu0 0
        %2233 = vmatmul.mubr.bf16.gmra.mrb[0].mxu0 %v2084
        %v2234 = vpop.f32.mrb[0].mxu0
        %v2235 = vadd.f32 0.0, %v2234
        %v2236 = vpop.f32.mrb[0].mxu0
        %v2237 = vpop.f32.mrb[0].mxu0
        %v2238 = vadd.f32 0.0, %v2237
        %v2239 = vpop.f32.mrb[0].mxu0
        %2240 = vmatprep.mubr.bf16.mxu0 0
        %2241 = vmatmul.mubr.bf16.gmra.mrb[0].mxu0 %v2087
        %v2242 = vpop.f32.mrb[0].mxu0
        %v2243 = vadd.f32 0.0, %v2242
        %v2244 = vpop.f32.mrb[0].mxu0
        %v2245 = vpop.f32.mrb[0].mxu0
        %v2246 = vadd.f32 0.0, %v2245
        %v2247 = vpop.f32.mrb[0].mxu0
        %2248 = vmatprep.mubr.bf16.mxu0 0
        %2249 = vmatmul.mubr.bf16.gmra.mrb[0].mxu0 %v2090
        %v2250 = vpop.f32.mrb[0].mxu0
        %v2251 = vadd.f32 0.0, %v2250
        %v2252 = vpop.f32.mrb[0].mxu0
        %v2253 = vpop.f32.mrb[0].mxu0
        %v2254 = vadd.f32 0.0, %v2253
        %v2255 = vpop.f32.mrb[0].mxu0
        %2256 = vmatprep.mubr.bf16.mxu0 0
        %2257 = vmatmul.mubr.bf16.gmra.mrb[0].mxu0 %v2093
        %v2258 = vpop.f32.mrb[0].mxu0
        %v2259 = vadd.f32 0.0, %v2258
        %v2260 = vpop.f32.mrb[0].mxu0
        %v2261 = vpop.f32.mrb[0].mxu0
        %v2262 = vadd.f32 0.0, %v2261
        %v2263 = vpop.f32.mrb[0].mxu0
        %2264 = vmatprep.mubr.bf16.mxu0 0
        %2265 = vmatmul.mubr.bf16.gmra.mrb[0].mxu0 %v2096
        %v2266 = vpop.f32.mrb[0].mxu0
        %v2267 = vadd.f32 0.0, %v2266
        %v2268 = vpop.f32.mrb[0].mxu0
        %v2269 = vpop.f32.mrb[0].mxu0
        %v2270 = vadd.f32 0.0, %v2269
        %v2271 = vpop.f32.mrb[0].mxu0
        %2272 = vmatprep.mubr.bf16.mxu0 0
        %2273 = vmatmul.mubr.bf16.gmra.mrb[0].mxu0 %v2099
        %v2274 = vpop.f32.mrb[0].mxu0
        %v2275 = vadd.f32 0.0, %v2274
        %v2276 = vpop.f32.mrb[0].mxu0
        %v2277 = vpop.f32.mrb[0].mxu0
        %v2278 = vadd.f32 0.0, %v2277
        %v2279 = vpop.f32.mrb[0].mxu0
        %2280 = vdwg.mxu0
        %v2281 = vadd.f32 %v1834, %v2139
        %v2282 = vadd.f32 %v1835, %v2142
        %v2283 = vadd.f32 %v1836, %v2147
        %v2284 = vadd.f32 %v1837, %v2150
        %v2285 = vadd.f32 %v1838, %v2155
        %v2286 = vadd.f32 %v1839, %v2158
        %v2287 = vadd.f32 %v1840, %v2163
        %v2288 = vadd.f32 %v1841, %v2166
        %v2289 = vadd.f32 %v1842, %v2171
        %v2290 = vadd.f32 %v1843, %v2174
        %v2291 = vadd.f32 %v1844, %v2179
        %v2292 = vadd.f32 %v1845, %v2182
        %v2293 = vadd.f32 %v1846, %v2187
        %v2294 = vadd.f32 %v1847, %v2190
        %v2295 = vadd.f32 %v1848, %v2195
        %v2296 = vadd.f32 %v1849, %v2198
        %v2297 = vadd.f32 %v1850, %v2203
        %v2298 = vadd.f32 %v1851, %v2206
        %v2299 = vadd.f32 %v1852, %v2211
        %v2300 = vadd.f32 %v1853, %v2214
        %v2301 = vadd.f32 %v1854, %v2219
        %v2302 = vadd.f32 %v1855, %v2222
        %v2303 = vadd.f32 %v1856, %v2227
        %v2304 = vadd.f32 %v1857, %v2230
        %v2305 = vadd.f32 %v1858, %v2235
        %v2306 = vadd.f32 %v1859, %v2238
        %v2307 = vadd.f32 %v1860, %v2243
        %v2308 = vadd.f32 %v1861, %v2246
        %v2309 = vadd.f32 %v1862, %v2251
        %v2310 = vadd.f32 %v1863, %v2254
        %v2311 = vadd.f32 %v1864, %v2259
        %v2312 = vadd.f32 %v1865, %v2262
        %v2313 = vadd.f32 %v1866, %v2267
        %v2314 = vadd.f32 %v1867, %v2270
        %v2315 = vadd.f32 %v1868, %v2275
        %v2316 = vadd.f32 %v1869, %v2278
        %v2317 = vld [vmem:[%s353 + $0x8] sm:$0xc]
        %s2318 = scalar_lea.vmem %s363, 10
        %v2319 = vld [vmem:[%s2318] sm:$0x3]
        %v2321 = vunpack.c.l.b16 %v2317
        %v2322 = vpack.c.b16 %v1508, %v2321
        %vm2323 = vcmask 1045504
        %v2324 = vrot.slane %v2322, 2
        %v2325 = vrot.slane %v1545, 2
        %v2326 = vsel %vm2323, %v2324, %v2325
        %v2327 = vrot.slane %v1546, 2
        %v2328 = vsel %vm2323, %v2325, %v2327
        %v2329 = vrot.slane %v1547, 2
        %v2330 = vsel %vm2323, %v2327, %v2329
        %v2331 = vrot.slane %v1548, 2
        %v2332 = vsel %vm2323, %v2329, %v2331
        %v2333 = vrot.slane %v1549, 2
        %v2334 = vsel %vm2323, %v2331, %v2333
        %v2335 = vrot.slane %v1550, 2
        %v2336 = vsel %vm2323, %v2333, %v2335
        %v2337 = vrot.slane %v1551, 2
        %v2338 = vsel %vm2323, %v2335, %v2337
        %v2339 = vrot.slane %v1552, 2
        %v2340 = vsel %vm2323, %v2337, %v2339
        %v2341 = vrot.slane %v1553, 2
        %v2342 = vsel %vm2323, %v2339, %v2341
        %v2343 = vrot.slane %v1554, 2
        %v2344 = vsel %vm2323, %v2341, %v2343
        %v2345 = vrot.slane %v1555, 2
        %v2346 = vsel %vm2323, %v2343, %v2345
        %v2347 = vrot.slane %v1556, 2
        %v2348 = vsel %vm2323, %v2345, %v2347
        %v2349 = vrot.slane %v1557, 2
        %v2350 = vsel %vm2323, %v2347, %v2349
        %v2351 = vrot.slane %v1558, 2
        %v2352 = vsel %vm2323, %v2349, %v2351
        %v2353 = vrot.slane %v1559, 2
        %v2354 = vsel %vm2323, %v2351, %v2353
        %v2355 = vrot.slane %v1560, 2
        %v2356 = vsel %vm2323, %v2353, %v2355
        %v2357 = vrot.slane %v1561, 2
        %v2358 = vsel %vm2323, %v2355, %v2357
        %v2359 = vrot.slane %v1875, 2
        %v2360 = vsel %vm2323, %v2357, %v2359
        %v2362 = vsel %vm665, %v2326, 0
        %v2365 = vsel %vm665, %v2328, 0
        %v2368 = vsel %vm665, %v2330, 0
        %v2371 = vsel %vm665, %v2332, 0
        %v2374 = vsel %vm665, %v2334, 0
        %v2377 = vsel %vm665, %v2336, 0
        %v2380 = vsel %vm665, %v2338, 0
        %v2383 = vsel %vm665, %v2340, 0
        %v2386 = vsel %vm665, %v2342, 0
        %v2389 = vsel %vm665, %v2344, 0
        %v2392 = vsel %vm665, %v2346, 0
        %v2395 = vsel %vm665, %v2348, 0
        %v2398 = vsel %vm665, %v2350, 0
        %v2401 = vsel %vm665, %v2352, 0
        %v2404 = vsel %vm665, %v2354, 0
        %v2407 = vsel %vm665, %v2356, 0
        %v2410 = vsel %vm665, %v2358, 0
        %v2413 = vsel %vm665, %v2360, 0
        %v2416 = vsel %vm720, %v2319, 0
        %2418 = vmatprep.subr.bf16.mxu0 0
        %2419 = vmatpush1.bf16.msra.mxu0 %v2416
        %2420 = vmatprep.subr.bf16.mxu0 0
        %2421 = vmatpush1.bf16.msra.mxu0 0
        %2422 = vmatprep.subr.bf16.mxu0 0
        %2423 = vmatpush1.bf16.msra.mxu0 0
        %2424 = vmatprep.subr.bf16.mxu0 0
        %2425 = vmatpush1.bf16.msra.mxu0 0
        %2426 = vmatprep.subr.bf16.mxu0 0
        %2427 = vmatpush1.bf16.msra.mxu0 0
        %2428 = vmatprep.subr.bf16.mxu0 0
        %2429 = vmatpush1.bf16.msra.mxu0 0
        %2430 = vmatprep.subr.bf16.mxu0 0
        %2431 = vmatpush1.bf16.msra.mxu0 0
        %2432 = vmatprep.subr.bf16.mxu0 0
        %2433 = vmatpush1.bf16.msra.mxu0 0
        %2434 = vmatprep.subr.bf16.mxu0 0
        %2435 = vmatpush1.bf16.msra.mxu0 0
        %2436 = vmatprep.subr.bf16.mxu0 0
        %2437 = vmatpush1.bf16.msra.mxu0 0
        %2438 = vmatprep.subr.bf16.mxu0 0
        %2439 = vmatpush1.bf16.msra.mxu0 0
        %2440 = vmatprep.subr.bf16.mxu0 0
        %2441 = vmatpush1.bf16.msra.mxu0 0
        %2442 = vmatprep.subr.bf16.mxu0 0
        %2443 = vmatpush1.bf16.msra.mxu0 0
        %2444 = vmatprep.subr.bf16.mxu0 0
        %2445 = vmatpush1.bf16.msra.mxu0 0
        %2446 = vmatprep.subr.bf16.mxu0 0
        %2447 = vmatpush1.bf16.msra.mxu0 0
        %2448 = vmatprep.subr.bf16.mxu0 0
        %2449 = vmatpush1.bf16.msra.mxu0 0
        %2450 = vmatprep.mubr.bf16.mxu0 0
        %2451 = vmatmul.mubr.bf16.gmra.mrb[0].mxu0 %v2362
        %v2452 = vpop.f32.mrb[0].mxu0
        %v2453 = vadd.f32 0.0, %v2452
        %v2454 = vpop.f32.mrb[0].mxu0
        %v2455 = vpop.f32.mrb[0].mxu0
        %v2456 = vadd.f32 0.0, %v2455
        %v2457 = vpop.f32.mrb[0].mxu0
        %2458 = vmatprep.mubr.bf16.mxu0 0
        %2459 = vmatmul.mubr.bf16.gmra.mrb[0].mxu0 %v2365
        %v2460 = vpop.f32.mrb[0].mxu0
        %v2461 = vadd.f32 0.0, %v2460
        %v2462 = vpop.f32.mrb[0].mxu0
        %v2463 = vpop.f32.mrb[0].mxu0
        %v2464 = vadd.f32 0.0, %v2463
        %v2465 = vpop.f32.mrb[0].mxu0
        %2466 = vmatprep.mubr.bf16.mxu0 0
        %2467 = vmatmul.mubr.bf16.gmra.mrb[0].mxu0 %v2368
        %v2468 = vpop.f32.mrb[0].mxu0
        %v2469 = vadd.f32 0.0, %v2468
        %v2470 = vpop.f32.mrb[0].mxu0
        %v2471 = vpop.f32.mrb[0].mxu0
        %v2472 = vadd.f32 0.0, %v2471
        %v2473 = vpop.f32.mrb[0].mxu0
        %2474 = vmatprep.mubr.bf16.mxu0 0
        %2475 = vmatmul.mubr.bf16.gmra.mrb[0].mxu0 %v2371
        %v2476 = vpop.f32.mrb[0].mxu0
        %v2477 = vadd.f32 0.0, %v2476
        %v2478 = vpop.f32.mrb[0].mxu0
        %v2479 = vpop.f32.mrb[0].mxu0
        %v2480 = vadd.f32 0.0, %v2479
        %v2481 = vpop.f32.mrb[0].mxu0
        %2482 = vmatprep.mubr.bf16.mxu0 0
        %2483 = vmatmul.mubr.bf16.gmra.mrb[0].mxu0 %v2374
        %v2484 = vpop.f32.mrb[0].mxu0
        %v2485 = vadd.f32 0.0, %v2484
        %v2486 = vpop.f32.mrb[0].mxu0
        %v2487 = vpop.f32.mrb[0].mxu0
        %v2488 = vadd.f32 0.0, %v2487
        %v2489 = vpop.f32.mrb[0].mxu0
        %2490 = vmatprep.mubr.bf16.mxu0 0
        %2491 = vmatmul.mubr.bf16.gmra.mrb[0].mxu0 %v2377
        %v2492 = vpop.f32.mrb[0].mxu0
        %v2493 = vadd.f32 0.0, %v2492
        %v2494 = vpop.f32.mrb[0].mxu0
        %v2495 = vpop.f32.mrb[0].mxu0
        %v2496 = vadd.f32 0.0, %v2495
        %v2497 = vpop.f32.mrb[0].mxu0
        %2498 = vmatprep.mubr.bf16.mxu0 0
        %2499 = vmatmul.mubr.bf16.gmra.mrb[0].mxu0 %v2380
        %v2500 = vpop.f32.mrb[0].mxu0
        %v2501 = vadd.f32 0.0, %v2500
        %v2502 = vpop.f32.mrb[0].mxu0
        %v2503 = vpop.f32.mrb[0].mxu0
        %v2504 = vadd.f32 0.0, %v2503
        %v2505 = vpop.f32.mrb[0].mxu0
        %2506 = vmatprep.mubr.bf16.mxu0 0
        %2507 = vmatmul.mubr.bf16.gmra.mrb[0].mxu0 %v2383
        %v2508 = vpop.f32.mrb[0].mxu0
        %v2509 = vadd.f32 0.0, %v2508
        %v2510 = vpop.f32.mrb[0].mxu0
        %v2511 = vpop.f32.mrb[0].mxu0
        %v2512 = vadd.f32 0.0, %v2511
        %v2513 = vpop.f32.mrb[0].mxu0
        %2514 = vmatprep.mubr.bf16.mxu0 0
        %2515 = vmatmul.mubr.bf16.gmra.mrb[0].mxu0 %v2386
        %v2516 = vpop.f32.mrb[0].mxu0
        %v2517 = vadd.f32 0.0, %v2516
        %v2518 = vpop.f32.mrb[0].mxu0
        %v2519 = vpop.f32.mrb[0].mxu0
        %v2520 = vadd.f32 0.0, %v2519
        %v2521 = vpop.f32.mrb[0].mxu0
        %2522 = vmatprep.mubr.bf16.mxu0 0
        %2523 = vmatmul.mubr.bf16.gmra.mrb[0].mxu0 %v2389
        %v2524 = vpop.f32.mrb[0].mxu0
        %v2525 = vadd.f32 0.0, %v2524
        %v2526 = vpop.f32.mrb[0].mxu0
        %v2527 = vpop.f32.mrb[0].mxu0
        %v2528 = vadd.f32 0.0, %v2527
        %v2529 = vpop.f32.mrb[0].mxu0
        %2530 = vmatprep.mubr.bf16.mxu0 0
        %2531 = vmatmul.mubr.bf16.gmra.mrb[0].mxu0 %v2392
        %v2532 = vpop.f32.mrb[0].mxu0
        %v2533 = vadd.f32 0.0, %v2532
        %v2534 = vpop.f32.mrb[0].mxu0
        %v2535 = vpop.f32.mrb[0].mxu0
        %v2536 = vadd.f32 0.0, %v2535
        %v2537 = vpop.f32.mrb[0].mxu0
        %2538 = vmatprep.mubr.bf16.mxu0 0
        %2539 = vmatmul.mubr.bf16.gmra.mrb[0].mxu0 %v2395
        %v2540 = vpop.f32.mrb[0].mxu0
        %v2541 = vadd.f32 0.0, %v2540
        %v2542 = vpop.f32.mrb[0].mxu0
        %v2543 = vpop.f32.mrb[0].mxu0
        %v2544 = vadd.f32 0.0, %v2543
        %v2545 = vpop.f32.mrb[0].mxu0
        %2546 = vmatprep.mubr.bf16.mxu0 0
        %2547 = vmatmul.mubr.bf16.gmra.mrb[0].mxu0 %v2398
        %v2548 = vpop.f32.mrb[0].mxu0
        %v2549 = vadd.f32 0.0, %v2548
        %v2550 = vpop.f32.mrb[0].mxu0
        %v2551 = vpop.f32.mrb[0].mxu0
        %v2552 = vadd.f32 0.0, %v2551
        %v2553 = vpop.f32.mrb[0].mxu0
        %2554 = vmatprep.mubr.bf16.mxu0 0
        %2555 = vmatmul.mubr.bf16.gmra.mrb[0].mxu0 %v2401
        %v2556 = vpop.f32.mrb[0].mxu0
        %v2557 = vadd.f32 0.0, %v2556
        %v2558 = vpop.f32.mrb[0].mxu0
        %v2559 = vpop.f32.mrb[0].mxu0
        %v2560 = vadd.f32 0.0, %v2559
        %v2561 = vpop.f32.mrb[0].mxu0
        %2562 = vmatprep.mubr.bf16.mxu0 0
        %2563 = vmatmul.mubr.bf16.gmra.mrb[0].mxu0 %v2404
        %v2564 = vpop.f32.mrb[0].mxu0
        %v2565 = vadd.f32 0.0, %v2564
        %v2566 = vpop.f32.mrb[0].mxu0
        %v2567 = vpop.f32.mrb[0].mxu0
        %v2568 = vadd.f32 0.0, %v2567
        %v2569 = vpop.f32.mrb[0].mxu0
        %2570 = vmatprep.mubr.bf16.mxu0 0
        %2571 = vmatmul.mubr.bf16.gmra.mrb[0].mxu0 %v2407
        %v2572 = vpop.f32.mrb[0].mxu0
        %v2573 = vadd.f32 0.0, %v2572
        %v2574 = vpop.f32.mrb[0].mxu0
        %v2575 = vpop.f32.mrb[0].mxu0
        %v2576 = vadd.f32 0.0, %v2575
        %v2577 = vpop.f32.mrb[0].mxu0
        %2578 = vmatprep.mubr.bf16.mxu0 0
        %2579 = vmatmul.mubr.bf16.gmra.mrb[0].mxu0 %v2410
        %v2580 = vpop.f32.mrb[0].mxu0
        %v2581 = vadd.f32 0.0, %v2580
        %v2582 = vpop.f32.mrb[0].mxu0
        %v2583 = vpop.f32.mrb[0].mxu0
        %v2584 = vadd.f32 0.0, %v2583
        %v2585 = vpop.f32.mrb[0].mxu0
        %2586 = vmatprep.mubr.bf16.mxu0 0
        %2587 = vmatmul.mubr.bf16.gmra.mrb[0].mxu0 %v2413
        %v2588 = vpop.f32.mrb[0].mxu0
        %v2589 = vadd.f32 0.0, %v2588
        %v2590 = vpop.f32.mrb[0].mxu0
        %v2591 = vpop.f32.mrb[0].mxu0
        %v2592 = vadd.f32 0.0, %v2591
        %v2593 = vpop.f32.mrb[0].mxu0
        %2594 = vdwg.mxu0
        %v2595 = vadd.f32 %v2281, %v2453
        %v2596 = vadd.f32 %v2282, %v2456
        %v2597 = vadd.f32 %v2283, %v2461
        %v2598 = vadd.f32 %v2284, %v2464
        %v2599 = vadd.f32 %v2285, %v2469
        %v2600 = vadd.f32 %v2286, %v2472
        %v2601 = vadd.f32 %v2287, %v2477
        %v2602 = vadd.f32 %v2288, %v2480
        %v2603 = vadd.f32 %v2289, %v2485
        %v2604 = vadd.f32 %v2290, %v2488
        %v2605 = vadd.f32 %v2291, %v2493
        %v2606 = vadd.f32 %v2292, %v2496
        %v2607 = vadd.f32 %v2293, %v2501
        %v2608 = vadd.f32 %v2294, %v2504
        %v2609 = vadd.f32 %v2295, %v2509
        %v2610 = vadd.f32 %v2296, %v2512
        %v2611 = vadd.f32 %v2297, %v2517
        %v2612 = vadd.f32 %v2298, %v2520
        %v2613 = vadd.f32 %v2299, %v2525
        %v2614 = vadd.f32 %v2300, %v2528
        %v2615 = vadd.f32 %v2301, %v2533
        %v2616 = vadd.f32 %v2302, %v2536
        %v2617 = vadd.f32 %v2303, %v2541
        %v2618 = vadd.f32 %v2304, %v2544
        %v2619 = vadd.f32 %v2305, %v2549
        %v2620 = vadd.f32 %v2306, %v2552
        %v2621 = vadd.f32 %v2307, %v2557
        %v2622 = vadd.f32 %v2308, %v2560
        %v2623 = vadd.f32 %v2309, %v2565
        %v2624 = vadd.f32 %v2310, %v2568
        %v2625 = vadd.f32 %v2311, %v2573
        %v2626 = vadd.f32 %v2312, %v2576
        %v2627 = vadd.f32 %v2313, %v2581
        %v2628 = vadd.f32 %v2314, %v2584
        %v2629 = vadd.f32 %v2315, %v2589
        %v2630 = vadd.f32 %v2316, %v2592
        %v2631 = vld [vmem:[%s353 + $0x10] sm:$0xc]
        %v2632 = vld [vmem:[%s353 + $0x14] sm:$0xf]
        %v2633 = vld [vmem:[%s353 + $0x18] sm:$0xf]
        %v2634 = vld [vmem:[%s353 + $0x1c] sm:$0xf]
        %v2635 = vld [vmem:[%s353 + $0x20] sm:$0xf]
        %v2636 = vld [vmem:[%s353 + $0x24] sm:$0xf]
        %v2637 = vld [vmem:[%s353 + $0x28] sm:$0xf]
        %v2638 = vld [vmem:[%s353 + $0x2c] sm:$0xf]
        %v2639 = vld [vmem:[%s353 + $0x30] sm:$0xf]
        %v2640 = vld [vmem:[%s353 + $0x34] sm:$0xf]
        %v2641 = vld [vmem:[%s353 + $0x38] sm:$0xf]
        %v2642 = vld [vmem:[%s353 + $0x3c] sm:$0xf]
        %v2643 = vld [vmem:[%s353 + $0x40] sm:$0xf]
        %v2644 = vld [vmem:[%s353 + $0x44] sm:$0xf]
        %v2645 = vld [vmem:[%s353 + $0x48] sm:$0xf]
        %v2646 = vld [vmem:[%s353 + $0x4c] sm:$0xf]
        %v2647 = vld [vmem:[%s353 + $0x50] sm:$0xf]
        %v2648 = vld [vmem:[%s353 + $0x54] sm:$0xf]
        %v2649 = vld [vmem:[%s353 + $0x58] sm:$0xf]
        %v2650 = vld [vmem:[%s353 + $0x5c] sm:$0xf]
        %v2651 = vld [vmem:[%s353 + $0x60] sm:$0xf]
        %v2652 = vld [vmem:[%s353 + $0x64] sm:$0xf]
        %v2653 = vld [vmem:[%s353 + $0x68] sm:$0xf]
        %v2654 = vld [vmem:[%s353 + $0x6c] sm:$0xf]
        %v2655 = vld [vmem:[%s353 + $0x70] sm:$0xf]
        %v2656 = vld [vmem:[%s353 + $0x74] sm:$0xf]
        %v2657 = vld [vmem:[%s353 + $0x78] sm:$0xf]
        %v2658 = vld [vmem:[%s353 + $0x7c] sm:$0xf]
        %v2659 = vld [vmem:[%s353 + $0x80] sm:$0xf]
        %v2660 = vld [vmem:[%s353 + $0x84] sm:$0xf]
        %v2661 = vld [vmem:[%s353 + $0x88] sm:$0xf]
        %v2662 = vld [vmem:[%s353 + $0x8c] sm:$0xf]
        %v2663 = vld [vmem:[%s353 + $0x90] sm:$0xf]
        %v2664 = vld [vmem:[%s353 + $0x94] sm:$0xf]
        %v2665 = vld [vmem:[%s353 + $0x98] sm:$0xf]
        %v2666 = vld [vmem:[%s353 + $0x9c] sm:$0xf]
        %v2667 = vld [vmem:[%s353 + $0xa0] sm:$0x3]
        %s2668 = scalar_lea.vmem %s363, 12
        %v2669 = vld [vmem:[%s2668] sm:$0x3]
        %v2707 = vunpack.c.l.b16 %v2631
        %v2708 = vunpack.c.l.b16 %v2632
        %v2709 = vunpack.c.l.b16 %v2633
        %v2710 = vunpack.c.l.b16 %v2634
        %v2711 = vunpack.c.l.b16 %v2635
        %v2712 = vunpack.c.l.b16 %v2636
        %v2713 = vunpack.c.l.b16 %v2637
        %v2714 = vunpack.c.l.b16 %v2638
        %v2715 = vunpack.c.l.b16 %v2639
        %v2716 = vunpack.c.l.b16 %v2640
        %v2717 = vunpack.c.l.b16 %v2641
        %v2718 = vunpack.c.l.b16 %v2642
        %v2719 = vunpack.c.l.b16 %v2643
        %v2720 = vunpack.c.l.b16 %v2644
        %v2721 = vunpack.c.l.b16 %v2645
        %v2722 = vunpack.c.l.b16 %v2646
        %v2723 = vunpack.c.l.b16 %v2647
        %v2724 = vunpack.c.l.b16 %v2648
        %v2725 = vunpack.c.l.b16 %v2649
        %v2726 = vunpack.c.l.b16 %v2650
        %v2727 = vunpack.c.l.b16 %v2651
        %v2728 = vunpack.c.l.b16 %v2652
        %v2729 = vunpack.c.l.b16 %v2653
        %v2730 = vunpack.c.l.b16 %v2654
        %v2731 = vunpack.c.l.b16 %v2655
        %v2732 = vunpack.c.l.b16 %v2656
        %v2733 = vunpack.c.l.b16 %v2657
        %v2734 = vunpack.c.l.b16 %v2658
        %v2735 = vunpack.c.l.b16 %v2659
        %v2736 = vunpack.c.l.b16 %v2660
        %v2737 = vunpack.c.l.b16 %v2661
        %v2738 = vunpack.c.l.b16 %v2662
        %v2739 = vunpack.c.l.b16 %v2663
        %v2740 = vunpack.c.l.b16 %v2664
        %v2741 = vunpack.c.l.b16 %v2665
        %v2742 = vunpack.c.l.b16 %v2666
        %v2743 = vunpack.c.l.b16 %v2667
        %v2744 = vpack.c.b16 %v2708, %v2707
        %v2745 = vpack.c.b16 %v2710, %v2709
        %v2746 = vpack.c.b16 %v2712, %v2711
        %v2747 = vpack.c.b16 %v2714, %v2713
        %v2748 = vpack.c.b16 %v2716, %v2715
        %v2749 = vpack.c.b16 %v2718, %v2717
        %v2750 = vpack.c.b16 %v2720, %v2719
        %v2751 = vpack.c.b16 %v2722, %v2721
        %v2752 = vpack.c.b16 %v2724, %v2723
        %v2753 = vpack.c.b16 %v2726, %v2725
        %v2754 = vpack.c.b16 %v2728, %v2727
        %v2755 = vpack.c.b16 %v2730, %v2729
        %v2756 = vpack.c.b16 %v2732, %v2731
        %v2757 = vpack.c.b16 %v2734, %v2733
        %v2758 = vpack.c.b16 %v2736, %v2735
        %v2759 = vpack.c.b16 %v2738, %v2737
        %v2760 = vpack.c.b16 %v2740, %v2739
        %v2761 = vpack.c.b16 %v2742, %v2741
        %v2762 = vpack.c.b16 %v2743, %v2743
        %v2763 = vrot.slane %v2744, 2
        %v2764 = vrot.slane %v2745, 2
        %v2765 = vsel %vm2323, %v2763, %v2764
        %v2766 = vrot.slane %v2746, 2
        %v2767 = vsel %vm2323, %v2764, %v2766
        %v2768 = vrot.slane %v2747, 2
        %v2769 = vsel %vm2323, %v2766, %v2768
        %v2770 = vrot.slane %v2748, 2
        %v2771 = vsel %vm2323, %v2768, %v2770
        %v2772 = vrot.slane %v2749, 2
        %v2773 = vsel %vm2323, %v2770, %v2772
        %v2774 = vrot.slane %v2750, 2
        %v2775 = vsel %vm2323, %v2772, %v2774
        %v2776 = vrot.slane %v2751, 2
        %v2777 = vsel %vm2323, %v2774, %v2776
        %v2778 = vrot.slane %v2752, 2
        %v2779 = vsel %vm2323, %v2776, %v2778
        %v2780 = vrot.slane %v2753, 2
        %v2781 = vsel %vm2323, %v2778, %v2780
        %v2782 = vrot.slane %v2754, 2
        %v2783 = vsel %vm2323, %v2780, %v2782
        %v2784 = vrot.slane %v2755, 2
        %v2785 = vsel %vm2323, %v2782, %v2784
        %v2786 = vrot.slane %v2756, 2
        %v2787 = vsel %vm2323, %v2784, %v2786
        %v2788 = vrot.slane %v2757, 2
        %v2789 = vsel %vm2323, %v2786, %v2788
        %v2790 = vrot.slane %v2758, 2
        %v2791 = vsel %vm2323, %v2788, %v2790
        %v2792 = vrot.slane %v2759, 2
        %v2793 = vsel %vm2323, %v2790, %v2792
        %v2794 = vrot.slane %v2760, 2
        %v2795 = vsel %vm2323, %v2792, %v2794
        %v2796 = vrot.slane %v2761, 2
        %v2797 = vsel %vm2323, %v2794, %v2796
        %v2798 = vrot.slane %v2762, 2
        %v2799 = vsel %vm2323, %v2796, %v2798
        %v2801 = vsel %vm665, %v2765, 0
        %v2804 = vsel %vm665, %v2767, 0
        %v2807 = vsel %vm665, %v2769, 0
        %v2810 = vsel %vm665, %v2771, 0
        %v2813 = vsel %vm665, %v2773, 0
        %v2816 = vsel %vm665, %v2775, 0
        %v2819 = vsel %vm665, %v2777, 0
        %v2822 = vsel %vm665, %v2779, 0
        %v2825 = vsel %vm665, %v2781, 0
        %v2828 = vsel %vm665, %v2783, 0
        %v2831 = vsel %vm665, %v2785, 0
        %v2834 = vsel %vm665, %v2787, 0
        %v2837 = vsel %vm665, %v2789, 0
        %v2840 = vsel %vm665, %v2791, 0
        %v2843 = vsel %vm665, %v2793, 0
        %v2846 = vsel %vm665, %v2795, 0
        %v2849 = vsel %vm665, %v2797, 0
        %v2852 = vsel %vm665, %v2799, 0
        %v2855 = vsel %vm720, %v2669, 0
        %2857 = vmatprep.subr.bf16.mxu0 0
        %2858 = vmatpush1.bf16.msra.mxu0 %v2855
        %2859 = vmatprep.subr.bf16.mxu0 0
        %2860 = vmatpush1.bf16.msra.mxu0 0
        %2861 = vmatprep.subr.bf16.mxu0 0
        %2862 = vmatpush1.bf16.msra.mxu0 0
        %2863 = vmatprep.subr.bf16.mxu0 0
        %2864 = vmatpush1.bf16.msra.mxu0 0
        %2865 = vmatprep.subr.bf16.mxu0 0
        %2866 = vmatpush1.bf16.msra.mxu0 0
        %2867 = vmatprep.subr.bf16.mxu0 0
        %2868 = vmatpush1.bf16.msra.mxu0 0
        %2869 = vmatprep.subr.bf16.mxu0 0
        %2870 = vmatpush1.bf16.msra.mxu0 0
        %2871 = vmatprep.subr.bf16.mxu0 0
        %2872 = vmatpush1.bf16.msra.mxu0 0
        %2873 = vmatprep.subr.bf16.mxu0 0
        %2874 = vmatpush1.bf16.msra.mxu0 0
        %2875 = vmatprep.subr.bf16.mxu0 0
        %2876 = vmatpush1.bf16.msra.mxu0 0
        %2877 = vmatprep.subr.bf16.mxu0 0
        %2878 = vmatpush1.bf16.msra.mxu0 0
        %2879 = vmatprep.subr.bf16.mxu0 0
        %2880 = vmatpush1.bf16.msra.mxu0 0
        %2881 = vmatprep.subr.bf16.mxu0 0
        %2882 = vmatpush1.bf16.msra.mxu0 0
        %2883 = vmatprep.subr.bf16.mxu0 0
        %2884 = vmatpush1.bf16.msra.mxu0 0
        %2885 = vmatprep.subr.bf16.mxu0 0
        %2886 = vmatpush1.bf16.msra.mxu0 0
        %2887 = vmatprep.subr.bf16.mxu0 0
        %2888 = vmatpush1.bf16.msra.mxu0 0
        %2889 = vmatprep.mubr.bf16.mxu0 0
        %2890 = vmatmul.mubr.bf16.gmra.mrb[0].mxu0 %v2801
        %v2891 = vpop.f32.mrb[0].mxu0
        %v2892 = vadd.f32 0.0, %v2891
        %v2893 = vpop.f32.mrb[0].mxu0
        %v2894 = vpop.f32.mrb[0].mxu0
        %v2895 = vadd.f32 0.0, %v2894
        %v2896 = vpop.f32.mrb[0].mxu0
        %2897 = vmatprep.mubr.bf16.mxu0 0
        %2898 = vmatmul.mubr.bf16.gmra.mrb[0].mxu0 %v2804
        %v2899 = vpop.f32.mrb[0].mxu0
        %v2900 = vadd.f32 0.0, %v2899
        %v2901 = vpop.f32.mrb[0].mxu0
        %v2902 = vpop.f32.mrb[0].mxu0
        %v2903 = vadd.f32 0.0, %v2902
        %v2904 = vpop.f32.mrb[0].mxu0
        %2905 = vmatprep.mubr.bf16.mxu0 0
        %2906 = vmatmul.mubr.bf16.gmra.mrb[0].mxu0 %v2807
        %v2907 = vpop.f32.mrb[0].mxu0
        %v2908 = vadd.f32 0.0, %v2907
        %v2909 = vpop.f32.mrb[0].mxu0
        %v2910 = vpop.f32.mrb[0].mxu0
        %v2911 = vadd.f32 0.0, %v2910
        %v2912 = vpop.f32.mrb[0].mxu0
        %2913 = vmatprep.mubr.bf16.mxu0 0
        %2914 = vmatmul.mubr.bf16.gmra.mrb[0].mxu0 %v2810
        %v2915 = vpop.f32.mrb[0].mxu0
        %v2916 = vadd.f32 0.0, %v2915
        %v2917 = vpop.f32.mrb[0].mxu0
        %v2918 = vpop.f32.mrb[0].mxu0
        %v2919 = vadd.f32 0.0, %v2918
        %v2920 = vpop.f32.mrb[0].mxu0
        %2921 = vmatprep.mubr.bf16.mxu0 0
        %2922 = vmatmul.mubr.bf16.gmra.mrb[0].mxu0 %v2813
        %v2923 = vpop.f32.mrb[0].mxu0
        %v2924 = vadd.f32 0.0, %v2923
        %v2925 = vpop.f32.mrb[0].mxu0
        %v2926 = vpop.f32.mrb[0].mxu0
        %v2927 = vadd.f32 0.0, %v2926
        %v2928 = vpop.f32.mrb[0].mxu0
        %2929 = vmatprep.mubr.bf16.mxu0 0
        %2930 = vmatmul.mubr.bf16.gmra.mrb[0].mxu0 %v2816
        %v2931 = vpop.f32.mrb[0].mxu0
        %v2932 = vadd.f32 0.0, %v2931
        %v2933 = vpop.f32.mrb[0].mxu0
        %v2934 = vpop.f32.mrb[0].mxu0
        %v2935 = vadd.f32 0.0, %v2934
        %v2936 = vpop.f32.mrb[0].mxu0
        %2937 = vmatprep.mubr.bf16.mxu0 0
        %2938 = vmatmul.mubr.bf16.gmra.mrb[0].mxu0 %v2819
        %v2939 = vpop.f32.mrb[0].mxu0
        %v2940 = vadd.f32 0.0, %v2939
        %v2941 = vpop.f32.mrb[0].mxu0
        %v2942 = vpop.f32.mrb[0].mxu0
        %v2943 = vadd.f32 0.0, %v2942
        %v2944 = vpop.f32.mrb[0].mxu0
        %2945 = vmatprep.mubr.bf16.mxu0 0
        %2946 = vmatmul.mubr.bf16.gmra.mrb[0].mxu0 %v2822
        %v2947 = vpop.f32.mrb[0].mxu0
        %v2948 = vadd.f32 0.0, %v2947
        %v2949 = vpop.f32.mrb[0].mxu0
        %v2950 = vpop.f32.mrb[0].mxu0
        %v2951 = vadd.f32 0.0, %v2950
        %v2952 = vpop.f32.mrb[0].mxu0
        %2953 = vmatprep.mubr.bf16.mxu0 0
        %2954 = vmatmul.mubr.bf16.gmra.mrb[0].mxu0 %v2825
        %v2955 = vpop.f32.mrb[0].mxu0
        %v2956 = vadd.f32 0.0, %v2955
        %v2957 = vpop.f32.mrb[0].mxu0
        %v2958 = vpop.f32.mrb[0].mxu0
        %v2959 = vadd.f32 0.0, %v2958
        %v2960 = vpop.f32.mrb[0].mxu0
        %2961 = vmatprep.mubr.bf16.mxu0 0
        %2962 = vmatmul.mubr.bf16.gmra.mrb[0].mxu0 %v2828
        %v2963 = vpop.f32.mrb[0].mxu0
        %v2964 = vadd.f32 0.0, %v2963
        %v2965 = vpop.f32.mrb[0].mxu0
        %v2966 = vpop.f32.mrb[0].mxu0
        %v2967 = vadd.f32 0.0, %v2966
        %v2968 = vpop.f32.mrb[0].mxu0
        %2969 = vmatprep.mubr.bf16.mxu0 0
        %2970 = vmatmul.mubr.bf16.gmra.mrb[0].mxu0 %v2831
        %v2971 = vpop.f32.mrb[0].mxu0
        %v2972 = vadd.f32 0.0, %v2971
        %v2973 = vpop.f32.mrb[0].mxu0
        %v2974 = vpop.f32.mrb[0].mxu0
        %v2975 = vadd.f32 0.0, %v2974
        %v2976 = vpop.f32.mrb[0].mxu0
        %2977 = vmatprep.mubr.bf16.mxu0 0
        %2978 = vmatmul.mubr.bf16.gmra.mrb[0].mxu0 %v2834
        %v2979 = vpop.f32.mrb[0].mxu0
        %v2980 = vadd.f32 0.0, %v2979
        %v2981 = vpop.f32.mrb[0].mxu0
        %v2982 = vpop.f32.mrb[0].mxu0
        %v2983 = vadd.f32 0.0, %v2982
        %v2984 = vpop.f32.mrb[0].mxu0
        %2985 = vmatprep.mubr.bf16.mxu0 0
        %2986 = vmatmul.mubr.bf16.gmra.mrb[0].mxu0 %v2837
        %v2987 = vpop.f32.mrb[0].mxu0
        %v2988 = vadd.f32 0.0, %v2987
        %v2989 = vpop.f32.mrb[0].mxu0
        %v2990 = vpop.f32.mrb[0].mxu0
        %v2991 = vadd.f32 0.0, %v2990
        %v2992 = vpop.f32.mrb[0].mxu0
        %2993 = vmatprep.mubr.bf16.mxu0 0
        %2994 = vmatmul.mubr.bf16.gmra.mrb[0].mxu0 %v2840
        %v2995 = vpop.f32.mrb[0].mxu0
        %v2996 = vadd.f32 0.0, %v2995
        %v2997 = vpop.f32.mrb[0].mxu0
        %v2998 = vpop.f32.mrb[0].mxu0
        %v2999 = vadd.f32 0.0, %v2998
        %v3000 = vpop.f32.mrb[0].mxu0
        %3001 = vmatprep.mubr.bf16.mxu0 0
        %3002 = vmatmul.mubr.bf16.gmra.mrb[0].mxu0 %v2843
        %v3003 = vpop.f32.mrb[0].mxu0
        %v3004 = vadd.f32 0.0, %v3003
        %v3005 = vpop.f32.mrb[0].mxu0
        %v3006 = vpop.f32.mrb[0].mxu0
        %v3007 = vadd.f32 0.0, %v3006
        %v3008 = vpop.f32.mrb[0].mxu0
        %3009 = vmatprep.mubr.bf16.mxu0 0
        %3010 = vmatmul.mubr.bf16.gmra.mrb[0].mxu0 %v2846
        %v3011 = vpop.f32.mrb[0].mxu0
        %v3012 = vadd.f32 0.0, %v3011
        %v3013 = vpop.f32.mrb[0].mxu0
        %v3014 = vpop.f32.mrb[0].mxu0
        %v3015 = vadd.f32 0.0, %v3014
        %v3016 = vpop.f32.mrb[0].mxu0
        %3017 = vmatprep.mubr.bf16.mxu0 0
        %3018 = vmatmul.mubr.bf16.gmra.mrb[0].mxu0 %v2849
        %v3019 = vpop.f32.mrb[0].mxu0
        %v3020 = vadd.f32 0.0, %v3019
        %v3021 = vpop.f32.mrb[0].mxu0
        %v3022 = vpop.f32.mrb[0].mxu0
        %v3023 = vadd.f32 0.0, %v3022
        %v3024 = vpop.f32.mrb[0].mxu0
        %3025 = vmatprep.mubr.bf16.mxu0 0
        %3026 = vmatmul.mubr.bf16.gmra.mrb[0].mxu0 %v2852
        %v3027 = vpop.f32.mrb[0].mxu0
        %v3028 = vadd.f32 0.0, %v3027
        %v3029 = vpop.f32.mrb[0].mxu0
        %v3030 = vpop.f32.mrb[0].mxu0
        %v3031 = vadd.f32 0.0, %v3030
        %v3032 = vpop.f32.mrb[0].mxu0
        %3033 = vdwg.mxu0
        %v3034 = vadd.f32 %v2595, %v2892
        %v3035 = vadd.f32 %v2596, %v2895
        %v3036 = vadd.f32 %v2597, %v2900
        %v3037 = vadd.f32 %v2598, %v2903
        %v3038 = vadd.f32 %v2599, %v2908
        %v3039 = vadd.f32 %v2600, %v2911
        %v3040 = vadd.f32 %v2601, %v2916
        %v3041 = vadd.f32 %v2602, %v2919
        %v3042 = vadd.f32 %v2603, %v2924
        %v3043 = vadd.f32 %v2604, %v2927
        %v3044 = vadd.f32 %v2605, %v2932
        %v3045 = vadd.f32 %v2606, %v2935
        %v3046 = vadd.f32 %v2607, %v2940
        %v3047 = vadd.f32 %v2608, %v2943
        %v3048 = vadd.f32 %v2609, %v2948
        %v3049 = vadd.f32 %v2610, %v2951
        %v3050 = vadd.f32 %v2611, %v2956
        %v3051 = vadd.f32 %v2612, %v2959
        %v3052 = vadd.f32 %v2613, %v2964
        %v3053 = vadd.f32 %v2614, %v2967
        %v3054 = vadd.f32 %v2615, %v2972
        %v3055 = vadd.f32 %v2616, %v2975
        %v3056 = vadd.f32 %v2617, %v2980
        %v3057 = vadd.f32 %v2618, %v2983
        %v3058 = vadd.f32 %v2619, %v2988
        %v3059 = vadd.f32 %v2620, %v2991
        %v3060 = vadd.f32 %v2621, %v2996
        %v3061 = vadd.f32 %v2622, %v2999
        %v3062 = vadd.f32 %v2623, %v3004
        %v3063 = vadd.f32 %v2624, %v3007
        %v3064 = vadd.f32 %v2625, %v3012
        %v3065 = vadd.f32 %v2626, %v3015
        %v3066 = vadd.f32 %v2627, %v3020
        %v3067 = vadd.f32 %v2628, %v3023
        %v3068 = vadd.f32 %v2629, %v3028
        %v3069 = vadd.f32 %v2630, %v3031
        %v3070 = vld [vmem:[%s353 + $0xa0] sm:$0x7]
        %s3071 = scalar_lea.vmem %s363, 14
        %v3072 = vld [vmem:[%s3071] sm:$0x3]
        %v3074 = vunpack.c.l.b16 %v3070
        %v3075 = vpack.c.b16 %v3074, %v3074
        %vm3076 = vsmask.f32 5376
        %v3078 = vshrl.u32 %v2744, 16
        %v3080 = vrot.slane %v3078, 2
        %v3081 = vshll.u32 %v2744, 16
        %v3083 = vrot.slane %v3081, 3
        %v3084 = vor.u32 %v3080, %v3083
        %v3086 = vshrl.u32 %v2745, 16
        %v3088 = vrot.slane %v3086, 2
        %v3089 = vshll.u32 %v2745, 16
        %v3091 = vrot.slane %v3089, 3
        %v3092 = vor.u32 %v3088, %v3091
        %v3093 = vsel %vm3076, %v3084, %v3092
        %v3095 = vshrl.u32 %v2746, 16
        %v3097 = vrot.slane %v3095, 2
        %v3098 = vshll.u32 %v2746, 16
        %v3100 = vrot.slane %v3098, 3
        %v3101 = vor.u32 %v3097, %v3100
        %v3102 = vsel %vm3076, %v3092, %v3101
        %v3104 = vshrl.u32 %v2747, 16
        %v3106 = vrot.slane %v3104, 2
        %v3107 = vshll.u32 %v2747, 16
        %v3109 = vrot.slane %v3107, 3
        %v3110 = vor.u32 %v3106, %v3109
        %v3111 = vsel %vm3076, %v3101, %v3110
        %v3113 = vshrl.u32 %v2748, 16
        %v3115 = vrot.slane %v3113, 2
        %v3116 = vshll.u32 %v2748, 16
        %v3118 = vrot.slane %v3116, 3
        %v3119 = vor.u32 %v3115, %v3118
        %v3120 = vsel %vm3076, %v3110, %v3119
        %v3122 = vshrl.u32 %v2749, 16
        %v3124 = vrot.slane %v3122, 2
        %v3125 = vshll.u32 %v2749, 16
        %v3127 = vrot.slane %v3125, 3
        %v3128 = vor.u32 %v3124, %v3127
        %v3129 = vsel %vm3076, %v3119, %v3128
        %v3131 = vshrl.u32 %v2750, 16
        %v3133 = vrot.slane %v3131, 2
        %v3134 = vshll.u32 %v2750, 16
        %v3136 = vrot.slane %v3134, 3
        %v3137 = vor.u32 %v3133, %v3136
        %v3138 = vsel %vm3076, %v3128, %v3137
        %v3140 = vshrl.u32 %v2751, 16
        %v3142 = vrot.slane %v3140, 2
        %v3143 = vshll.u32 %v2751, 16
        %v3145 = vrot.slane %v3143, 3
        %v3146 = vor.u32 %v3142, %v3145
        %v3147 = vsel %vm3076, %v3137, %v3146
        %v3149 = vshrl.u32 %v2752, 16
        %v3151 = vrot.slane %v3149, 2
        %v3152 = vshll.u32 %v2752, 16
        %v3154 = vrot.slane %v3152, 3
        %v3155 = vor.u32 %v3151, %v3154
        %v3156 = vsel %vm3076, %v3146, %v3155
        %v3158 = vshrl.u32 %v2753, 16
        %v3160 = vrot.slane %v3158, 2
        %v3161 = vshll.u32 %v2753, 16
        %v3163 = vrot.slane %v3161, 3
        %v3164 = vor.u32 %v3160, %v3163
        %v3165 = vsel %vm3076, %v3155, %v3164
        %v3167 = vshrl.u32 %v2754, 16
        %v3169 = vrot.slane %v3167, 2
        %v3170 = vshll.u32 %v2754, 16
        %v3172 = vrot.slane %v3170, 3
        %v3173 = vor.u32 %v3169, %v3172
        %v3174 = vsel %vm3076, %v3164, %v3173
        %v3176 = vshrl.u32 %v2755, 16
        %v3178 = vrot.slane %v3176, 2
        %v3179 = vshll.u32 %v2755, 16
        %v3181 = vrot.slane %v3179, 3
        %v3182 = vor.u32 %v3178, %v3181
        %v3183 = vsel %vm3076, %v3173, %v3182
        %v3185 = vshrl.u32 %v2756, 16
        %v3187 = vrot.slane %v3185, 2
        %v3188 = vshll.u32 %v2756, 16
        %v3190 = vrot.slane %v3188, 3
        %v3191 = vor.u32 %v3187, %v3190
        %v3192 = vsel %vm3076, %v3182, %v3191
        %v3194 = vshrl.u32 %v2757, 16
        %v3196 = vrot.slane %v3194, 2
        %v3197 = vshll.u32 %v2757, 16
        %v3199 = vrot.slane %v3197, 3
        %v3200 = vor.u32 %v3196, %v3199
        %v3201 = vsel %vm3076, %v3191, %v3200
        %v3203 = vshrl.u32 %v2758, 16
        %v3205 = vrot.slane %v3203, 2
        %v3206 = vshll.u32 %v2758, 16
        %v3208 = vrot.slane %v3206, 3
        %v3209 = vor.u32 %v3205, %v3208
        %v3210 = vsel %vm3076, %v3200, %v3209
        %v3212 = vshrl.u32 %v2759, 16
        %v3214 = vrot.slane %v3212, 2
        %v3215 = vshll.u32 %v2759, 16
        %v3217 = vrot.slane %v3215, 3
        %v3218 = vor.u32 %v3214, %v3217
        %v3219 = vsel %vm3076, %v3209, %v3218
        %v3221 = vshrl.u32 %v2760, 16
        %v3223 = vrot.slane %v3221, 2
        %v3224 = vshll.u32 %v2760, 16
        %v3226 = vrot.slane %v3224, 3
        %v3227 = vor.u32 %v3223, %v3226
        %v3228 = vsel %vm3076, %v3218, %v3227
        %v3230 = vshrl.u32 %v2761, 16
        %v3232 = vrot.slane %v3230, 2
        %v3233 = vshll.u32 %v2761, 16
        %v3235 = vrot.slane %v3233, 3
        %v3236 = vor.u32 %v3232, %v3235
        %v3237 = vsel %vm3076, %v3227, %v3236
        %v3239 = vshrl.u32 %v3075, 16
        %v3241 = vrot.slane %v3239, 2
        %v3242 = vshll.u32 %v3075, 16
        %v3244 = vrot.slane %v3242, 3
        %v3245 = vor.u32 %v3241, %v3244
        %v3246 = vsel %vm3076, %v3236, %v3245
        %v3248 = vsel %vm665, %v3093, 0
        %v3251 = vsel %vm665, %v3102, 0
        %v3254 = vsel %vm665, %v3111, 0
        %v3257 = vsel %vm665, %v3120, 0
        %v3260 = vsel %vm665, %v3129, 0
        %v3263 = vsel %vm665, %v3138, 0
        %v3266 = vsel %vm665, %v3147, 0
        %v3269 = vsel %vm665, %v3156, 0
        %v3272 = vsel %vm665, %v3165, 0
        %v3275 = vsel %vm665, %v3174, 0
        %v3278 = vsel %vm665, %v3183, 0
        %v3281 = vsel %vm665, %v3192, 0
        %v3284 = vsel %vm665, %v3201, 0
        %v3287 = vsel %vm665, %v3210, 0
        %v3290 = vsel %vm665, %v3219, 0
        %v3293 = vsel %vm665, %v3228, 0
        %v3296 = vsel %vm665, %v3237, 0
        %v3299 = vsel %vm665, %v3246, 0
        %v3302 = vsel %vm720, %v3072, 0
        %3304 = vmatprep.subr.bf16.mxu0 0
        %3305 = vmatpush1.bf16.msra.mxu0 %v3302
        %3306 = vmatprep.subr.bf16.mxu0 0
        %3307 = vmatpush1.bf16.msra.mxu0 0
        %3308 = vmatprep.subr.bf16.mxu0 0
        %3309 = vmatpush1.bf16.msra.mxu0 0
        %3310 = vmatprep.subr.bf16.mxu0 0
        %3311 = vmatpush1.bf16.msra.mxu0 0
        %3312 = vmatprep.subr.bf16.mxu0 0
        %3313 = vmatpush1.bf16.msra.mxu0 0
        %3314 = vmatprep.subr.bf16.mxu0 0
        %3315 = vmatpush1.bf16.msra.mxu0 0
        %3316 = vmatprep.subr.bf16.mxu0 0
        %3317 = vmatpush1.bf16.msra.mxu0 0
        %3318 = vmatprep.subr.bf16.mxu0 0
        %3319 = vmatpush1.bf16.msra.mxu0 0
        %3320 = vmatprep.subr.bf16.mxu0 0
        %3321 = vmatpush1.bf16.msra.mxu0 0
        %3322 = vmatprep.subr.bf16.mxu0 0
        %3323 = vmatpush1.bf16.msra.mxu0 0
        %3324 = vmatprep.subr.bf16.mxu0 0
        %3325 = vmatpush1.bf16.msra.mxu0 0
        %3326 = vmatprep.subr.bf16.mxu0 0
        %3327 = vmatpush1.bf16.msra.mxu0 0
        %3328 = vmatprep.subr.bf16.mxu0 0
        %3329 = vmatpush1.bf16.msra.mxu0 0
        %3330 = vmatprep.subr.bf16.mxu0 0
        %3331 = vmatpush1.bf16.msra.mxu0 0
        %3332 = vmatprep.subr.bf16.mxu0 0
        %3333 = vmatpush1.bf16.msra.mxu0 0
        %3334 = vmatprep.subr.bf16.mxu0 0
        %3335 = vmatpush1.bf16.msra.mxu0 0
        %3336 = vmatprep.mubr.bf16.mxu0 0
        %3337 = vmatmul.mubr.bf16.gmra.mrb[0].mxu0 %v3248
        %v3338 = vpop.f32.mrb[0].mxu0
        %v3339 = vadd.f32 0.0, %v3338
        %v3340 = vpop.f32.mrb[0].mxu0
        %v3341 = vpop.f32.mrb[0].mxu0
        %v3342 = vadd.f32 0.0, %v3341
        %v3343 = vpop.f32.mrb[0].mxu0
        %3344 = vmatprep.mubr.bf16.mxu0 0
        %3345 = vmatmul.mubr.bf16.gmra.mrb[0].mxu0 %v3251
        %v3346 = vpop.f32.mrb[0].mxu0
        %v3347 = vadd.f32 0.0, %v3346
        %v3348 = vpop.f32.mrb[0].mxu0
        %v3349 = vpop.f32.mrb[0].mxu0
        %v3350 = vadd.f32 0.0, %v3349
        %v3351 = vpop.f32.mrb[0].mxu0
        %3352 = vmatprep.mubr.bf16.mxu0 0
        %3353 = vmatmul.mubr.bf16.gmra.mrb[0].mxu0 %v3254
        %v3354 = vpop.f32.mrb[0].mxu0
        %v3355 = vadd.f32 0.0, %v3354
        %v3356 = vpop.f32.mrb[0].mxu0
        %v3357 = vpop.f32.mrb[0].mxu0
        %v3358 = vadd.f32 0.0, %v3357
        %v3359 = vpop.f32.mrb[0].mxu0
        %3360 = vmatprep.mubr.bf16.mxu0 0
        %3361 = vmatmul.mubr.bf16.gmra.mrb[0].mxu0 %v3257
        %v3362 = vpop.f32.mrb[0].mxu0
        %v3363 = vadd.f32 0.0, %v3362
        %v3364 = vpop.f32.mrb[0].mxu0
        %v3365 = vpop.f32.mrb[0].mxu0
        %v3366 = vadd.f32 0.0, %v3365
        %v3367 = vpop.f32.mrb[0].mxu0
        %3368 = vmatprep.mubr.bf16.mxu0 0
        %3369 = vmatmul.mubr.bf16.gmra.mrb[0].mxu0 %v3260
        %v3370 = vpop.f32.mrb[0].mxu0
        %v3371 = vadd.f32 0.0, %v3370
        %v3372 = vpop.f32.mrb[0].mxu0
        %v3373 = vpop.f32.mrb[0].mxu0
        %v3374 = vadd.f32 0.0, %v3373
        %v3375 = vpop.f32.mrb[0].mxu0
        %3376 = vmatprep.mubr.bf16.mxu0 0
        %3377 = vmatmul.mubr.bf16.gmra.mrb[0].mxu0 %v3263
        %v3378 = vpop.f32.mrb[0].mxu0
        %v3379 = vadd.f32 0.0, %v3378
        %v3380 = vpop.f32.mrb[0].mxu0
        %v3381 = vpop.f32.mrb[0].mxu0
        %v3382 = vadd.f32 0.0, %v3381
        %v3383 = vpop.f32.mrb[0].mxu0
        %3384 = vmatprep.mubr.bf16.mxu0 0
        %3385 = vmatmul.mubr.bf16.gmra.mrb[0].mxu0 %v3266
        %v3386 = vpop.f32.mrb[0].mxu0
        %v3387 = vadd.f32 0.0, %v3386
        %v3388 = vpop.f32.mrb[0].mxu0
        %v3389 = vpop.f32.mrb[0].mxu0
        %v3390 = vadd.f32 0.0, %v3389
        %v3391 = vpop.f32.mrb[0].mxu0
        %3392 = vmatprep.mubr.bf16.mxu0 0
        %3393 = vmatmul.mubr.bf16.gmra.mrb[0].mxu0 %v3269
        %v3394 = vpop.f32.mrb[0].mxu0
        %v3395 = vadd.f32 0.0, %v3394
        %v3396 = vpop.f32.mrb[0].mxu0
        %v3397 = vpop.f32.mrb[0].mxu0
        %v3398 = vadd.f32 0.0, %v3397
        %v3399 = vpop.f32.mrb[0].mxu0
        %3400 = vmatprep.mubr.bf16.mxu0 0
        %3401 = vmatmul.mubr.bf16.gmra.mrb[0].mxu0 %v3272
        %v3402 = vpop.f32.mrb[0].mxu0
        %v3403 = vadd.f32 0.0, %v3402
        %v3404 = vpop.f32.mrb[0].mxu0
        %v3405 = vpop.f32.mrb[0].mxu0
        %v3406 = vadd.f32 0.0, %v3405
        %v3407 = vpop.f32.mrb[0].mxu0
        %3408 = vmatprep.mubr.bf16.mxu0 0
        %3409 = vmatmul.mubr.bf16.gmra.mrb[0].mxu0 %v3275
        %v3410 = vpop.f32.mrb[0].mxu0
        %v3411 = vadd.f32 0.0, %v3410
        %v3412 = vpop.f32.mrb[0].mxu0
        %v3413 = vpop.f32.mrb[0].mxu0
        %v3414 = vadd.f32 0.0, %v3413
        %v3415 = vpop.f32.mrb[0].mxu0
        %3416 = vmatprep.mubr.bf16.mxu0 0
        %3417 = vmatmul.mubr.bf16.gmra.mrb[0].mxu0 %v3278
        %v3418 = vpop.f32.mrb[0].mxu0
        %v3419 = vadd.f32 0.0, %v3418
        %v3420 = vpop.f32.mrb[0].mxu0
        %v3421 = vpop.f32.mrb[0].mxu0
        %v3422 = vadd.f32 0.0, %v3421
        %v3423 = vpop.f32.mrb[0].mxu0
        %3424 = vmatprep.mubr.bf16.mxu0 0
        %3425 = vmatmul.mubr.bf16.gmra.mrb[0].mxu0 %v3281
        %v3426 = vpop.f32.mrb[0].mxu0
        %v3427 = vadd.f32 0.0, %v3426
        %v3428 = vpop.f32.mrb[0].mxu0
        %v3429 = vpop.f32.mrb[0].mxu0
        %v3430 = vadd.f32 0.0, %v3429
        %v3431 = vpop.f32.mrb[0].mxu0
        %3432 = vmatprep.mubr.bf16.mxu0 0
        %3433 = vmatmul.mubr.bf16.gmra.mrb[0].mxu0 %v3284
        %v3434 = vpop.f32.mrb[0].mxu0
        %v3435 = vadd.f32 0.0, %v3434
        %v3436 = vpop.f32.mrb[0].mxu0
        %v3437 = vpop.f32.mrb[0].mxu0
        %v3438 = vadd.f32 0.0, %v3437
        %v3439 = vpop.f32.mrb[0].mxu0
        %3440 = vmatprep.mubr.bf16.mxu0 0
        %3441 = vmatmul.mubr.bf16.gmra.mrb[0].mxu0 %v3287
        %v3442 = vpop.f32.mrb[0].mxu0
        %v3443 = vadd.f32 0.0, %v3442
        %v3444 = vpop.f32.mrb[0].mxu0
        %v3445 = vpop.f32.mrb[0].mxu0
        %v3446 = vadd.f32 0.0, %v3445
        %v3447 = vpop.f32.mrb[0].mxu0
        %3448 = vmatprep.mubr.bf16.mxu0 0
        %3449 = vmatmul.mubr.bf16.gmra.mrb[0].mxu0 %v3290
        %v3450 = vpop.f32.mrb[0].mxu0
        %v3451 = vadd.f32 0.0, %v3450
        %v3452 = vpop.f32.mrb[0].mxu0
        %v3453 = vpop.f32.mrb[0].mxu0
        %v3454 = vadd.f32 0.0, %v3453
        %v3455 = vpop.f32.mrb[0].mxu0
        %3456 = vmatprep.mubr.bf16.mxu0 0
        %3457 = vmatmul.mubr.bf16.gmra.mrb[0].mxu0 %v3293
        %v3458 = vpop.f32.mrb[0].mxu0
        %v3459 = vadd.f32 0.0, %v3458
        %v3460 = vpop.f32.mrb[0].mxu0
        %v3461 = vpop.f32.mrb[0].mxu0
        %v3462 = vadd.f32 0.0, %v3461
        %v3463 = vpop.f32.mrb[0].mxu0
        %3464 = vmatprep.mubr.bf16.mxu0 0
        %3465 = vmatmul.mubr.bf16.gmra.mrb[0].mxu0 %v3296
        %v3466 = vpop.f32.mrb[0].mxu0
        %v3467 = vadd.f32 0.0, %v3466
        %v3468 = vpop.f32.mrb[0].mxu0
        %v3469 = vpop.f32.mrb[0].mxu0
        %v3470 = vadd.f32 0.0, %v3469
        %v3471 = vpop.f32.mrb[0].mxu0
        %3472 = vmatprep.mubr.bf16.mxu0 0
        %3473 = vmatmul.mubr.bf16.gmra.mrb[0].mxu0 %v3299
        %v3474 = vpop.f32.mrb[0].mxu0
        %v3475 = vadd.f32 0.0, %v3474
        %v3476 = vpop.f32.mrb[0].mxu0
        %v3477 = vpop.f32.mrb[0].mxu0
        %v3478 = vadd.f32 0.0, %v3477
        %v3479 = vpop.f32.mrb[0].mxu0
        %3480 = vdwg.mxu0
        %v3481 = vadd.f32 %v3034, %v3339
        %v3482 = vadd.f32 %v3035, %v3342
        %v3483 = vadd.f32 %v3036, %v3347
        %v3484 = vadd.f32 %v3037, %v3350
        %v3485 = vadd.f32 %v3038, %v3355
        %v3486 = vadd.f32 %v3039, %v3358
        %v3487 = vadd.f32 %v3040, %v3363
        %v3488 = vadd.f32 %v3041, %v3366
        %v3489 = vadd.f32 %v3042, %v3371
        %v3490 = vadd.f32 %v3043, %v3374
        %v3491 = vadd.f32 %v3044, %v3379
        %v3492 = vadd.f32 %v3045, %v3382
        %v3493 = vadd.f32 %v3046, %v3387
        %v3494 = vadd.f32 %v3047, %v3390
        %v3495 = vadd.f32 %v3048, %v3395
        %v3496 = vadd.f32 %v3049, %v3398
        %v3497 = vadd.f32 %v3050, %v3403
        %v3498 = vadd.f32 %v3051, %v3406
        %v3499 = vadd.f32 %v3052, %v3411
        %v3500 = vadd.f32 %v3053, %v3414
        %v3501 = vadd.f32 %v3054, %v3419
        %v3502 = vadd.f32 %v3055, %v3422
        %v3503 = vadd.f32 %v3056, %v3427
        %v3504 = vadd.f32 %v3057, %v3430
        %v3505 = vadd.f32 %v3058, %v3435
        %v3506 = vadd.f32 %v3059, %v3438
        %v3507 = vadd.f32 %v3060, %v3443
        %v3508 = vadd.f32 %v3061, %v3446
        %v3509 = vadd.f32 %v3062, %v3451
        %v3510 = vadd.f32 %v3063, %v3454
        %v3511 = vadd.f32 %v3064, %v3459
        %v3512 = vadd.f32 %v3065, %v3462
        %v3513 = vadd.f32 %v3066, %v3467
        %v3514 = vadd.f32 %v3067, %v3470
        %v3515 = vadd.f32 %v3068, %v3475
        %v3516 = vadd.f32 %v3069, %v3478
        %v3517 = vld [vmem:[%s353 + $0x10] sm:$0x8]
        %s3518 = scalar_lea.vmem %s363, 16
        %v3519 = vld [vmem:[%s3518] sm:$0x3]
        %v3521 = vunpack.c.l.b16 %v3517
        %v3522 = vpack.c.b16 %v2708, %v3521
        %vm3523 = vcmask 1044480
        %v3524 = vrot.slane %v3522, 3
        %v3525 = vrot.slane %v2745, 3
        %v3526 = vsel %vm3523, %v3524, %v3525
        %v3527 = vrot.slane %v2746, 3
        %v3528 = vsel %vm3523, %v3525, %v3527
        %v3529 = vrot.slane %v2747, 3
        %v3530 = vsel %vm3523, %v3527, %v3529
        %v3531 = vrot.slane %v2748, 3
        %v3532 = vsel %vm3523, %v3529, %v3531
        %v3533 = vrot.slane %v2749, 3
        %v3534 = vsel %vm3523, %v3531, %v3533
        %v3535 = vrot.slane %v2750, 3
        %v3536 = vsel %vm3523, %v3533, %v3535
        %v3537 = vrot.slane %v2751, 3
        %v3538 = vsel %vm3523, %v3535, %v3537
        %v3539 = vrot.slane %v2752, 3
        %v3540 = vsel %vm3523, %v3537, %v3539
        %v3541 = vrot.slane %v2753, 3
        %v3542 = vsel %vm3523, %v3539, %v3541
        %v3543 = vrot.slane %v2754, 3
        %v3544 = vsel %vm3523, %v3541, %v3543
        %v3545 = vrot.slane %v2755, 3
        %v3546 = vsel %vm3523, %v3543, %v3545
        %v3547 = vrot.slane %v2756, 3
        %v3548 = vsel %vm3523, %v3545, %v3547
        %v3549 = vrot.slane %v2757, 3
        %v3550 = vsel %vm3523, %v3547, %v3549
        %v3551 = vrot.slane %v2758, 3
        %v3552 = vsel %vm3523, %v3549, %v3551
        %v3553 = vrot.slane %v2759, 3
        %v3554 = vsel %vm3523, %v3551, %v3553
        %v3555 = vrot.slane %v2760, 3
        %v3556 = vsel %vm3523, %v3553, %v3555
        %v3557 = vrot.slane %v2761, 3
        %v3558 = vsel %vm3523, %v3555, %v3557
        %v3559 = vrot.slane %v3075, 3
        %v3560 = vsel %vm3523, %v3557, %v3559
        %v3562 = vsel %vm665, %v3526, 0
        %v3565 = vsel %vm665, %v3528, 0
        %v3568 = vsel %vm665, %v3530, 0
        %v3571 = vsel %vm665, %v3532, 0
        %v3574 = vsel %vm665, %v3534, 0
        %v3577 = vsel %vm665, %v3536, 0
        %v3580 = vsel %vm665, %v3538, 0
        %v3583 = vsel %vm665, %v3540, 0
        %v3586 = vsel %vm665, %v3542, 0
        %v3589 = vsel %vm665, %v3544, 0
        %v3592 = vsel %vm665, %v3546, 0
        %v3595 = vsel %vm665, %v3548, 0
        %v3598 = vsel %vm665, %v3550, 0
        %v3601 = vsel %vm665, %v3552, 0
        %v3604 = vsel %vm665, %v3554, 0
        %v3607 = vsel %vm665, %v3556, 0
        %v3610 = vsel %vm665, %v3558, 0
        %v3613 = vsel %vm665, %v3560, 0
        %v3616 = vsel %vm720, %v3519, 0
        %3618 = vmatprep.subr.bf16.mxu0 0
        %3619 = vmatpush1.bf16.msra.mxu0 %v3616
        %3620 = vmatprep.subr.bf16.mxu0 0
        %3621 = vmatpush1.bf16.msra.mxu0 0
        %3622 = vmatprep.subr.bf16.mxu0 0
        %3623 = vmatpush1.bf16.msra.mxu0 0
        %3624 = vmatprep.subr.bf16.mxu0 0
        %3625 = vmatpush1.bf16.msra.mxu0 0
        %3626 = vmatprep.subr.bf16.mxu0 0
        %3627 = vmatpush1.bf16.msra.mxu0 0
        %3628 = vmatprep.subr.bf16.mxu0 0
        %3629 = vmatpush1.bf16.msra.mxu0 0
        %3630 = vmatprep.subr.bf16.mxu0 0
        %3631 = vmatpush1.bf16.msra.mxu0 0
        %3632 = vmatprep.subr.bf16.mxu0 0
        %3633 = vmatpush1.bf16.msra.mxu0 0
        %3634 = vmatprep.subr.bf16.mxu0 0
        %3635 = vmatpush1.bf16.msra.mxu0 0
        %3636 = vmatprep.subr.bf16.mxu0 0
        %3637 = vmatpush1.bf16.msra.mxu0 0
        %3638 = vmatprep.subr.bf16.mxu0 0
        %3639 = vmatpush1.bf16.msra.mxu0 0
        %3640 = vmatprep.subr.bf16.mxu0 0
        %3641 = vmatpush1.bf16.msra.mxu0 0
        %3642 = vmatprep.subr.bf16.mxu0 0
        %3643 = vmatpush1.bf16.msra.mxu0 0
        %3644 = vmatprep.subr.bf16.mxu0 0
        %3645 = vmatpush1.bf16.msra.mxu0 0
        %3646 = vmatprep.subr.bf16.mxu0 0
        %3647 = vmatpush1.bf16.msra.mxu0 0
        %3648 = vmatprep.subr.bf16.mxu0 0
        %3649 = vmatpush1.bf16.msra.mxu0 0
        %3650 = vmatprep.mubr.bf16.mxu0 0
        %3651 = vmatmul.mubr.bf16.gmra.mrb[0].mxu0 %v3562
        %v3652 = vpop.f32.mrb[0].mxu0
        %v3653 = vadd.f32 0.0, %v3652
        %v3654 = vpop.f32.mrb[0].mxu0
        %v3655 = vpop.f32.mrb[0].mxu0
        %v3656 = vadd.f32 0.0, %v3655
        %v3657 = vpop.f32.mrb[0].mxu0
        %3658 = vmatprep.mubr.bf16.mxu0 0
        %3659 = vmatmul.mubr.bf16.gmra.mrb[0].mxu0 %v3565
        %v3660 = vpop.f32.mrb[0].mxu0
        %v3661 = vadd.f32 0.0, %v3660
        %v3662 = vpop.f32.mrb[0].mxu0
        %v3663 = vpop.f32.mrb[0].mxu0
        %v3664 = vadd.f32 0.0, %v3663
        %v3665 = vpop.f32.mrb[0].mxu0
        %3666 = vmatprep.mubr.bf16.mxu0 0
        %3667 = vmatmul.mubr.bf16.gmra.mrb[0].mxu0 %v3568
        %v3668 = vpop.f32.mrb[0].mxu0
        %v3669 = vadd.f32 0.0, %v3668
        %v3670 = vpop.f32.mrb[0].mxu0
        %v3671 = vpop.f32.mrb[0].mxu0
        %v3672 = vadd.f32 0.0, %v3671
        %v3673 = vpop.f32.mrb[0].mxu0
        %3674 = vmatprep.mubr.bf16.mxu0 0
        %3675 = vmatmul.mubr.bf16.gmra.mrb[0].mxu0 %v3571
        %v3676 = vpop.f32.mrb[0].mxu0
        %v3677 = vadd.f32 0.0, %v3676
        %v3678 = vpop.f32.mrb[0].mxu0
        %v3679 = vpop.f32.mrb[0].mxu0
        %v3680 = vadd.f32 0.0, %v3679
        %v3681 = vpop.f32.mrb[0].mxu0
        %3682 = vmatprep.mubr.bf16.mxu0 0
        %3683 = vmatmul.mubr.bf16.gmra.mrb[0].mxu0 %v3574
        %v3684 = vpop.f32.mrb[0].mxu0
        %v3685 = vadd.f32 0.0, %v3684
        %v3686 = vpop.f32.mrb[0].mxu0
        %v3687 = vpop.f32.mrb[0].mxu0
        %v3688 = vadd.f32 0.0, %v3687
        %v3689 = vpop.f32.mrb[0].mxu0
        %3690 = vmatprep.mubr.bf16.mxu0 0
        %3691 = vmatmul.mubr.bf16.gmra.mrb[0].mxu0 %v3577
        %v3692 = vpop.f32.mrb[0].mxu0
        %v3693 = vadd.f32 0.0, %v3692
        %v3694 = vpop.f32.mrb[0].mxu0
        %v3695 = vpop.f32.mrb[0].mxu0
        %v3696 = vadd.f32 0.0, %v3695
        %v3697 = vpop.f32.mrb[0].mxu0
        %3698 = vmatprep.mubr.bf16.mxu0 0
        %3699 = vmatmul.mubr.bf16.gmra.mrb[0].mxu0 %v3580
        %v3700 = vpop.f32.mrb[0].mxu0
        %v3701 = vadd.f32 0.0, %v3700
        %v3702 = vpop.f32.mrb[0].mxu0
        %v3703 = vpop.f32.mrb[0].mxu0
        %v3704 = vadd.f32 0.0, %v3703
        %v3705 = vpop.f32.mrb[0].mxu0
        %3706 = vmatprep.mubr.bf16.mxu0 0
        %3707 = vmatmul.mubr.bf16.gmra.mrb[0].mxu0 %v3583
        %v3708 = vpop.f32.mrb[0].mxu0
        %v3709 = vadd.f32 0.0, %v3708
        %v3710 = vpop.f32.mrb[0].mxu0
        %v3711 = vpop.f32.mrb[0].mxu0
        %v3712 = vadd.f32 0.0, %v3711
        %v3713 = vpop.f32.mrb[0].mxu0
        %3714 = vmatprep.mubr.bf16.mxu0 0
        %3715 = vmatmul.mubr.bf16.gmra.mrb[0].mxu0 %v3586
        %v3716 = vpop.f32.mrb[0].mxu0
        %v3717 = vadd.f32 0.0, %v3716
        %v3718 = vpop.f32.mrb[0].mxu0
        %v3719 = vpop.f32.mrb[0].mxu0
        %v3720 = vadd.f32 0.0, %v3719
        %v3721 = vpop.f32.mrb[0].mxu0
        %3722 = vmatprep.mubr.bf16.mxu0 0
        %3723 = vmatmul.mubr.bf16.gmra.mrb[0].mxu0 %v3589
        %v3724 = vpop.f32.mrb[0].mxu0
        %v3725 = vadd.f32 0.0, %v3724
        %v3726 = vpop.f32.mrb[0].mxu0
        %v3727 = vpop.f32.mrb[0].mxu0
        %v3728 = vadd.f32 0.0, %v3727
        %v3729 = vpop.f32.mrb[0].mxu0
        %3730 = vmatprep.mubr.bf16.mxu0 0
        %3731 = vmatmul.mubr.bf16.gmra.mrb[0].mxu0 %v3592
        %v3732 = vpop.f32.mrb[0].mxu0
        %v3733 = vadd.f32 0.0, %v3732
        %v3734 = vpop.f32.mrb[0].mxu0
        %v3735 = vpop.f32.mrb[0].mxu0
        %v3736 = vadd.f32 0.0, %v3735
        %v3737 = vpop.f32.mrb[0].mxu0
        %3738 = vmatprep.mubr.bf16.mxu0 0
        %3739 = vmatmul.mubr.bf16.gmra.mrb[0].mxu0 %v3595
        %v3740 = vpop.f32.mrb[0].mxu0
        %v3741 = vadd.f32 0.0, %v3740
        %v3742 = vpop.f32.mrb[0].mxu0
        %v3743 = vpop.f32.mrb[0].mxu0
        %v3744 = vadd.f32 0.0, %v3743
        %v3745 = vpop.f32.mrb[0].mxu0
        %3746 = vmatprep.mubr.bf16.mxu0 0
        %3747 = vmatmul.mubr.bf16.gmra.mrb[0].mxu0 %v3598
        %v3748 = vpop.f32.mrb[0].mxu0
        %v3749 = vadd.f32 0.0, %v3748
        %v3750 = vpop.f32.mrb[0].mxu0
        %v3751 = vpop.f32.mrb[0].mxu0
        %v3752 = vadd.f32 0.0, %v3751
        %v3753 = vpop.f32.mrb[0].mxu0
        %3754 = vmatprep.mubr.bf16.mxu0 0
        %3755 = vmatmul.mubr.bf16.gmra.mrb[0].mxu0 %v3601
        %v3756 = vpop.f32.mrb[0].mxu0
        %v3757 = vadd.f32 0.0, %v3756
        %v3758 = vpop.f32.mrb[0].mxu0
        %v3759 = vpop.f32.mrb[0].mxu0
        %v3760 = vadd.f32 0.0, %v3759
        %v3761 = vpop.f32.mrb[0].mxu0
        %3762 = vmatprep.mubr.bf16.mxu0 0
        %3763 = vmatmul.mubr.bf16.gmra.mrb[0].mxu0 %v3604
        %v3764 = vpop.f32.mrb[0].mxu0
        %v3765 = vadd.f32 0.0, %v3764
        %v3766 = vpop.f32.mrb[0].mxu0
        %v3767 = vpop.f32.mrb[0].mxu0
        %v3768 = vadd.f32 0.0, %v3767
        %v3769 = vpop.f32.mrb[0].mxu0
        %3770 = vmatprep.mubr.bf16.mxu0 0
        %3771 = vmatmul.mubr.bf16.gmra.mrb[0].mxu0 %v3607
        %v3772 = vpop.f32.mrb[0].mxu0
        %v3773 = vadd.f32 0.0, %v3772
        %v3774 = vpop.f32.mrb[0].mxu0
        %v3775 = vpop.f32.mrb[0].mxu0
        %v3776 = vadd.f32 0.0, %v3775
        %v3777 = vpop.f32.mrb[0].mxu0
        %3778 = vmatprep.mubr.bf16.mxu0 0
        %3779 = vmatmul.mubr.bf16.gmra.mrb[0].mxu0 %v3610
        %v3780 = vpop.f32.mrb[0].mxu0
        %v3781 = vadd.f32 0.0, %v3780
        %v3782 = vpop.f32.mrb[0].mxu0
        %v3783 = vpop.f32.mrb[0].mxu0
        %v3784 = vadd.f32 0.0, %v3783
        %v3785 = vpop.f32.mrb[0].mxu0
        %3786 = vmatprep.mubr.bf16.mxu0 0
        %3787 = vmatmul.mubr.bf16.gmra.mrb[0].mxu0 %v3613
        %v3788 = vpop.f32.mrb[0].mxu0
        %v3789 = vadd.f32 0.0, %v3788
        %v3790 = vpop.f32.mrb[0].mxu0
        %v3791 = vpop.f32.mrb[0].mxu0
        %v3792 = vadd.f32 0.0, %v3791
        %v3793 = vpop.f32.mrb[0].mxu0
        %3794 = vdwg.mxu0
        %v3795 = vadd.f32 %v3481, %v3653
        %v3796 = vadd.f32 %v3482, %v3656
        %v3797 = vadd.f32 %v3483, %v3661
        %v3798 = vadd.f32 %v3484, %v3664
        %v3799 = vadd.f32 %v3485, %v3669
        %v3800 = vadd.f32 %v3486, %v3672
        %v3801 = vadd.f32 %v3487, %v3677
        %v3802 = vadd.f32 %v3488, %v3680
        %v3803 = vadd.f32 %v3489, %v3685
        %v3804 = vadd.f32 %v3490, %v3688
        %v3805 = vadd.f32 %v3491, %v3693
        %v3806 = vadd.f32 %v3492, %v3696
        %v3807 = vadd.f32 %v3493, %v3701
        %v3808 = vadd.f32 %v3494, %v3704
        %v3809 = vadd.f32 %v3495, %v3709
        %v3810 = vadd.f32 %v3496, %v3712
        %v3811 = vadd.f32 %v3497, %v3717
        %v3812 = vadd.f32 %v3498, %v3720
        %v3813 = vadd.f32 %v3499, %v3725
        %v3814 = vadd.f32 %v3500, %v3728
        %v3815 = vadd.f32 %v3501, %v3733
        %v3816 = vadd.f32 %v3502, %v3736
        %v3817 = vadd.f32 %v3503, %v3741
        %v3818 = vadd.f32 %v3504, %v3744
        %v3819 = vadd.f32 %v3505, %v3749
        %v3820 = vadd.f32 %v3506, %v3752
        %v3821 = vadd.f32 %v3507, %v3757
        %v3822 = vadd.f32 %v3508, %v3760
        %v3823 = vadd.f32 %v3509, %v3765
        %v3824 = vadd.f32 %v3510, %v3768
        %v3825 = vadd.f32 %v3511, %v3773
        %v3826 = vadd.f32 %v3512, %v3776
        %v3827 = vadd.f32 %v3513, %v3781
        %v3828 = vadd.f32 %v3514, %v3784
        %v3829 = vadd.f32 %v3515, %v3789
        %v3830 = vadd.f32 %v3516, %v3792
        %v3831 = vld [vmem:[%s366] sm:$0x1]
        %v3833 = vlaneseq
        %v3834 = vshrl.u32 %v3833, 7
        %v3835 = vsub.s32 0, %v3834
        %v3836 = vrot.slane %v3831, %v3835
        %v3838 = vadd.f32 %v3795, %v3836
        %v3839 = vadd.f32 %v3796, %v3836
        %v3840 = vadd.f32 %v3797, %v3836
        %v3841 = vadd.f32 %v3798, %v3836
        %v3842 = vadd.f32 %v3799, %v3836
        %v3843 = vadd.f32 %v3800, %v3836
        %v3844 = vadd.f32 %v3801, %v3836
        %v3845 = vadd.f32 %v3802, %v3836
        %v3846 = vadd.f32 %v3803, %v3836
        %v3847 = vadd.f32 %v3804, %v3836
        %v3848 = vadd.f32 %v3805, %v3836
        %v3849 = vadd.f32 %v3806, %v3836
        %v3850 = vadd.f32 %v3807, %v3836
        %v3851 = vadd.f32 %v3808, %v3836
        %v3852 = vadd.f32 %v3809, %v3836
        %v3853 = vadd.f32 %v3810, %v3836
        %v3854 = vadd.f32 %v3811, %v3836
        %v3855 = vadd.f32 %v3812, %v3836
        %v3856 = vadd.f32 %v3813, %v3836
        %v3857 = vadd.f32 %v3814, %v3836
        %v3858 = vadd.f32 %v3815, %v3836
        %v3859 = vadd.f32 %v3816, %v3836
        %v3860 = vadd.f32 %v3817, %v3836
        %v3861 = vadd.f32 %v3818, %v3836
        %v3862 = vadd.f32 %v3819, %v3836
        %v3863 = vadd.f32 %v3820, %v3836
        %v3864 = vadd.f32 %v3821, %v3836
        %v3865 = vadd.f32 %v3822, %v3836
        %v3866 = vadd.f32 %v3823, %v3836
        %v3867 = vadd.f32 %v3824, %v3836
        %v3868 = vadd.f32 %v3825, %v3836
        %v3869 = vadd.f32 %v3826, %v3836
        %v3870 = vadd.f32 %v3827, %v3836
        %v3871 = vadd.f32 %v3828, %v3836
        %v3872 = vadd.f32 %v3829, %v3836
        %v3873 = vadd.f32 %v3830, %v3836
        %v3874 = vmax.f32 %v3838, 0.0
        %v3875 = vmax.f32 %v3839, 0.0
        %v3876 = vmax.f32 %v3840, 0.0
        %v3877 = vmax.f32 %v3841, 0.0
        %v3878 = vmax.f32 %v3842, 0.0
        %v3879 = vmax.f32 %v3843, 0.0
        %v3880 = vmax.f32 %v3844, 0.0
        %v3881 = vmax.f32 %v3845, 0.0
        %v3882 = vmax.f32 %v3846, 0.0
        %v3883 = vmax.f32 %v3847, 0.0
        %v3884 = vmax.f32 %v3848, 0.0
        %v3885 = vmax.f32 %v3849, 0.0
        %v3886 = vmax.f32 %v3850, 0.0
        %v3887 = vmax.f32 %v3851, 0.0
        %v3888 = vmax.f32 %v3852, 0.0
        %v3889 = vmax.f32 %v3853, 0.0
        %v3890 = vmax.f32 %v3854, 0.0
        %v3891 = vmax.f32 %v3855, 0.0
        %v3892 = vmax.f32 %v3856, 0.0
        %v3893 = vmax.f32 %v3857, 0.0
        %v3894 = vmax.f32 %v3858, 0.0
        %v3895 = vmax.f32 %v3859, 0.0
        %v3896 = vmax.f32 %v3860, 0.0
        %v3897 = vmax.f32 %v3861, 0.0
        %v3898 = vmax.f32 %v3862, 0.0
        %v3899 = vmax.f32 %v3863, 0.0
        %v3900 = vmax.f32 %v3864, 0.0
        %v3901 = vmax.f32 %v3865, 0.0
        %v3902 = vmax.f32 %v3866, 0.0
        %v3903 = vmax.f32 %v3867, 0.0
        %v3904 = vmax.f32 %v3868, 0.0
        %v3905 = vmax.f32 %v3869, 0.0
        %v3906 = vmax.f32 %v3870, 0.0
        %v3907 = vmax.f32 %v3871, 0.0
        %v3908 = vmax.f32 %v3872, 0.0
        %v3909 = vmax.f32 %v3873, 0.0
        %v3910 = vld [vmem:[%s358] sm:$0x7]
        %v3912 = vlaneseq
        %v3913 = vshrl.u32 %v3912, 7
        %v3914 = vsub.s32 0, %v3913
        %v3915 = vrot.slane %v3910, %v3914
        %v3916 = vlaneseq
        %v3917 = vshrl.u32 %v3916, 7
        %v3918 = vsub.s32 1, %v3917
        %v3919 = vrot.slane %v3910, %v3918
        %v3920 = vlaneseq
        %v3921 = vshrl.u32 %v3920, 7
        %v3922 = vsub.s32 2, %v3921
        %v3923 = vrot.slane %v3910, %v3922
        %vm3926 = vcmask 261120
        %v3927 = vsel %vm3926, %v3923, 0
        %3929 = vmatprep.subr.mxu0 0.0
        %3930 = vmatpush1.msra.mxu0 %v3874
        %3931 = vmatprep.subr.mxu0 0.0
        %3932 = vmatpush1.msra.mxu0 %v3875
        %3933 = vmatprep.subr.mxu0 0.0
        %3934 = vmatpush1.msra.mxu0 %v3876
        %3935 = vmatprep.subr.mxu0 0.0
        %3936 = vmatpush1.msra.mxu0 %v3877
        %3937 = vmatprep.subr.mxu0 0.0
        %3938 = vmatpush1.msra.mxu0 %v3878
        %3939 = vmatprep.subr.mxu0 0.0
        %3940 = vmatpush1.msra.mxu0 %v3879
        %3941 = vmatprep.subr.mxu0 0.0
        %3942 = vmatpush1.msra.mxu0 %v3880
        %3943 = vmatprep.subr.mxu0 0.0
        %3944 = vmatpush1.msra.mxu0 %v3881
        %3945 = vmatprep.subr.mxu0 0.0
        %3946 = vmatpush1.msra.mxu0 %v3882
        %3947 = vmatprep.subr.mxu0 0.0
        %3948 = vmatpush1.msra.mxu0 %v3883
        %3949 = vmatprep.subr.mxu0 0.0
        %3950 = vmatpush1.msra.mxu0 %v3884
        %3951 = vmatprep.subr.mxu0 0.0
        %3952 = vmatpush1.msra.mxu0 %v3885
        %3953 = vmatprep.subr.mxu0 0.0
        %3954 = vmatpush1.msra.mxu0 %v3886
        %3955 = vmatprep.subr.mxu0 0.0
        %3956 = vmatpush1.msra.mxu0 %v3887
        %3957 = vmatprep.subr.mxu0 0.0
        %3958 = vmatpush1.msra.mxu0 %v3888
        %3959 = vmatprep.subr.mxu0 0.0
        %3960 = vmatpush1.msra.mxu0 %v3889
        %3961 = vmatprep.subr.mxu0 0.0
        %3962 = vmatpush1.msra.mxu0 %v3890
        %3963 = vmatprep.subr.mxu0 0.0
        %3964 = vmatpush1.msra.mxu0 %v3891
        %3965 = vmatprep.subr.mxu0 0.0
        %3966 = vmatpush1.msra.mxu0 %v3892
        %3967 = vmatprep.subr.mxu0 0.0
        %3968 = vmatpush1.msra.mxu0 %v3893
        %3969 = vmatprep.subr.mxu0 0.0
        %3970 = vmatpush1.msra.mxu0 %v3894
        %3971 = vmatprep.subr.mxu0 0.0
        %3972 = vmatpush1.msra.mxu0 %v3895
        %3973 = vmatprep.subr.mxu0 0.0
        %3974 = vmatpush1.msra.mxu0 %v3896
        %3975 = vmatprep.subr.mxu0 0.0
        %3976 = vmatpush1.msra.mxu0 %v3897
        %3977 = vmatprep.subr.mxu0 0.0
        %3978 = vmatpush1.msra.mxu0 %v3898
        %3979 = vmatprep.subr.mxu0 0.0
        %3980 = vmatpush1.msra.mxu0 %v3899
        %3981 = vmatprep.subr.mxu0 0.0
        %3982 = vmatpush1.msra.mxu0 %v3900
        %3983 = vmatprep.subr.mxu0 0.0
        %3984 = vmatpush1.msra.mxu0 %v3901
        %3985 = vmatprep.subr.mxu0 0.0
        %3986 = vmatpush1.msra.mxu0 %v3902
        %3987 = vmatprep.subr.mxu0 0.0
        %3988 = vmatpush1.msra.mxu0 %v3903
        %3989 = vmatprep.subr.mxu0 0.0
        %3990 = vmatpush1.msra.mxu0 %v3904
        %3991 = vmatprep.subr.mxu0 0.0
        %3992 = vmatpush1.msra.mxu0 %v3905
        %3993 = vmatprep.mubr.f32.mxu0 %v3919
        %3994 = vmatmul.mubr.f32.gmra.mrb[0].mxu0 %v3915
        %v3995 = vpop.f32.mrb[0].mxu0
        %v3996 = vadd.f32 0.0, %v3995
        %v3997 = vpop.f32.mrb[0].mxu0
        %3998 = vdwg.mxu0
        %3999 = vmatprep.subr.mxu0 0.0
        %4000 = vmatpush1.msra.mxu0 %v3906
        %4001 = vmatprep.subr.mxu0 0.0
        %4002 = vmatpush1.msra.mxu0 %v3907
        %4003 = vmatprep.subr.mxu0 0.0
        %4004 = vmatpush1.msra.mxu0 %v3908
        %4005 = vmatprep.subr.mxu0 0.0
        %4006 = vmatpush1.msra.mxu0 %v3909
        %4007 = vmatprep.subr.mxu0 0.0
        %4008 = vmatpush1.msra.mxu0 0.0
        %4009 = vmatprep.subr.mxu0 0.0
        %4010 = vmatpush1.msra.mxu0 0.0
        %4011 = vmatprep.subr.mxu0 0.0
        %4012 = vmatpush1.msra.mxu0 0.0
        %4013 = vmatprep.subr.mxu0 0.0
        %4014 = vmatpush1.msra.mxu0 0.0
        %4015 = vmatprep.subr.mxu0 0.0
        %4016 = vmatpush1.msra.mxu0 0.0
        %4017 = vmatprep.subr.mxu0 0.0
        %4018 = vmatpush1.msra.mxu0 0.0
        %4019 = vmatprep.subr.mxu0 0.0
        %4020 = vmatpush1.msra.mxu0 0.0
        %4021 = vmatprep.subr.mxu0 0.0
        %4022 = vmatpush1.msra.mxu0 0.0
        %4023 = vmatprep.subr.mxu0 0.0
        %4024 = vmatpush1.msra.mxu0 0.0
        %4025 = vmatprep.subr.mxu0 0.0
        %4026 = vmatpush1.msra.mxu0 0.0
        %4027 = vmatprep.subr.mxu0 0.0
        %4028 = vmatpush1.msra.mxu0 0.0
        %4029 = vmatprep.subr.mxu0 0.0
        %4030 = vmatpush1.msra.mxu0 0.0
        %4031 = vmatprep.subr.mxu0 0.0
        %4032 = vmatpush1.msra.mxu0 0.0
        %4033 = vmatprep.subr.mxu0 0.0
        %4034 = vmatpush1.msra.mxu0 0.0
        %4035 = vmatprep.subr.mxu0 0.0
        %4036 = vmatpush1.msra.mxu0 0.0
        %4037 = vmatprep.subr.mxu0 0.0
        %4038 = vmatpush1.msra.mxu0 0.0
        %4039 = vmatprep.subr.mxu0 0.0
        %4040 = vmatpush1.msra.mxu0 0.0
        %4041 = vmatprep.subr.mxu0 0.0
        %4042 = vmatpush1.msra.mxu0 0.0
        %4043 = vmatprep.subr.mxu0 0.0
        %4044 = vmatpush1.msra.mxu0 0.0
        %4045 = vmatprep.subr.mxu0 0.0
        %4046 = vmatpush1.msra.mxu0 0.0
        %4047 = vmatprep.subr.mxu0 0.0
        %4048 = vmatpush1.msra.mxu0 0.0
        %4049 = vmatprep.subr.mxu0 0.0
        %4050 = vmatpush1.msra.mxu0 0.0
        %4051 = vmatprep.subr.mxu0 0.0
        %4052 = vmatpush1.msra.mxu0 0.0
        %4053 = vmatprep.subr.mxu0 0.0
        %4054 = vmatpush1.msra.mxu0 0.0
        %4055 = vmatprep.subr.mxu0 0.0
        %4056 = vmatpush1.msra.mxu0 0.0
        %4057 = vmatprep.subr.mxu0 0.0
        %4058 = vmatpush1.msra.mxu0 0.0
        %4059 = vmatprep.subr.mxu0 0.0
        %4060 = vmatpush1.msra.mxu0 0.0
        %4061 = vmatprep.subr.mxu0 0.0
        %4062 = vmatpush1.msra.mxu0 0.0
        %4063 = vmatprep.mubr.f32.mxu0 0.0
        %4064 = vmatmul.mubr.f32.gmra.mrb[0].mxu0 %v3927
        %v4065 = vpop.f32.mrb[0].mxu0
        %v4066 = vadd.f32 %v3996, %v4065
        %v4067 = vpop.f32.mrb[0].mxu0
        %4068 = vdwg.mxu0
        %s4069 = scalar_lea.vmem [#allocation2], %s27
        %v4070 = vld [vmem:[%s4069] sm:$0x1]
        %v4071 = vadd.f32 %v4070, %v4066
        %4072 = vst [vmem:[%s4069] sm:$0x1] %v4071
        %p4073 = scmp.eq.s32.totalorder %s27, 1
        %p4074 = pnand %p376, %p4073
        %p4075 = pneg %p4074
        // Predicated region
        $region49: #{tpu_custom_call.1} parent=43 // pred_check
          _
        $region50: #{tpu_custom_call.1} parent=43 // pred_check_branch
          %4077 = sbr.rel (%p4074) target = $region52
        $region51: #{tpu_custom_call.1} parent=43 // pred_region
          %v4078 = vld [vmem:[#allocation2] sm:$0x3]
          %v4079 = vmul.f32 %v4078, 0.00390625
          %v4080 = vld [vmem:[%s371] sm:$0xff]
          %v4081 = vld [vmem:[%s371 + $0x8] sm:$0xff]
          %v4082 = vld [vmem:[%s371 + $0x10] sm:$0xff]
          %v4083 = vld [vmem:[%s371 + $0x18] sm:$0xff]
          %v4084 = vld [vmem:[%s371 + $0x20] sm:$0xff]
          %v4085 = vld [vmem:[%s371 + $0x28] sm:$0xff]
          %v4086 = vld [vmem:[%s371 + $0x30] sm:$0xff]
          %v4087 = vld [vmem:[%s371 + $0x38] sm:$0xff]
          %v4088 = vld [vmem:[%s371 + $0x40] sm:$0xff]
          %v4089 = vld [vmem:[%s371 + $0x48] sm:$0xff]
          %v4090 = vld [vmem:[%s371 + $0x50] sm:$0xff]
          %v4091 = vld [vmem:[%s371 + $0x58] sm:$0xff]
          %v4092 = vld [vmem:[%s371 + $0x60] sm:$0xff]
          %v4093 = vld [vmem:[%s371 + $0x68] sm:$0xff]
          %v4094 = vld [vmem:[%s371 + $0x70] sm:$0xff]
          %v4095 = vld [vmem:[%s371 + $0x78] sm:$0xff]
          %v4096 = vld [vmem:[%s374] sm:$0x1]
          %v4098 = vlaneseq
          %v4099 = vshrl.u32 %v4098, 7
          %v4100 = vsub.s32 0, %v4099
          %v4101 = vrot.slane %v4096, %v4100
          %4103 = vmatprep.subr.mxu0 0.0
          %4104 = vmatpush1.msra.mxu0 %v4080
          %4105 = vmatprep.subr.mxu0 0.0
          %4106 = vmatpush1.msra.mxu0 %v4081
          %4107 = vmatprep.subr.mxu0 0.0
          %4108 = vmatpush1.msra.mxu0 %v4082
          %4109 = vmatprep.subr.mxu0 0.0
          %4110 = vmatpush1.msra.mxu0 %v4083
          %4111 = vmatprep.subr.mxu0 0.0
          %4112 = vmatpush1.msra.mxu0 %v4084
          %4113 = vmatprep.subr.mxu0 0.0
          %4114 = vmatpush1.msra.mxu0 %v4085
          %4115 = vmatprep.subr.mxu0 0.0
          %4116 = vmatpush1.msra.mxu0 %v4086
          %4117 = vmatprep.subr.mxu0 0.0
          %4118 = vmatpush1.msra.mxu0 %v4087
          %4119 = vmatprep.subr.mxu0 0.0
          %4120 = vmatpush1.msra.mxu0 %v4088
          %4121 = vmatprep.subr.mxu0 0.0
          %4122 = vmatpush1.msra.mxu0 %v4089
          %4123 = vmatprep.subr.mxu0 0.0
          %4124 = vmatpush1.msra.mxu0 %v4090
          %4125 = vmatprep.subr.mxu0 0.0
          %4126 = vmatpush1.msra.mxu0 %v4091
          %4127 = vmatprep.subr.mxu0 0.0
          %4128 = vmatpush1.msra.mxu0 %v4092
          %4129 = vmatprep.subr.mxu0 0.0
          %4130 = vmatpush1.msra.mxu0 %v4093
          %4131 = vmatprep.subr.mxu0 0.0
          %4132 = vmatpush1.msra.mxu0 %v4094
          %4133 = vmatprep.subr.mxu0 0.0
          %4134 = vmatpush1.msra.mxu0 %v4095
          %4135 = vmatprep.subr.mxu0 0.0
          %4136 = vmatpush1.msra.mxu0 0.0
          %4137 = vmatprep.subr.mxu0 0.0
          %4138 = vmatpush1.msra.mxu0 0.0
          %4139 = vmatprep.subr.mxu0 0.0
          %4140 = vmatpush1.msra.mxu0 0.0
          %4141 = vmatprep.subr.mxu0 0.0
          %4142 = vmatpush1.msra.mxu0 0.0
          %4143 = vmatprep.subr.mxu0 0.0
          %4144 = vmatpush1.msra.mxu0 0.0
          %4145 = vmatprep.subr.mxu0 0.0
          %4146 = vmatpush1.msra.mxu0 0.0
          %4147 = vmatprep.subr.mxu0 0.0
          %4148 = vmatpush1.msra.mxu0 0.0
          %4149 = vmatprep.subr.mxu0 0.0
          %4150 = vmatpush1.msra.mxu0 0.0
          %4151 = vmatprep.subr.mxu0 0.0
          %4152 = vmatpush1.msra.mxu0 0.0
          %4153 = vmatprep.subr.mxu0 0.0
          %4154 = vmatpush1.msra.mxu0 0.0
          %4155 = vmatprep.subr.mxu0 0.0
          %4156 = vmatpush1.msra.mxu0 0.0
          %4157 = vmatprep.subr.mxu0 0.0
          %4158 = vmatpush1.msra.mxu0 0.0
          %4159 = vmatprep.subr.mxu0 0.0
          %4160 = vmatpush1.msra.mxu0 0.0
          %4161 = vmatprep.subr.mxu0 0.0
          %4162 = vmatpush1.msra.mxu0 0.0
          %4163 = vmatprep.subr.mxu0 0.0
          %4164 = vmatpush1.msra.mxu0 0.0
          %4165 = vmatprep.subr.mxu0 0.0
          %4166 = vmatpush1.msra.mxu0 0.0
          %4167 = vmatprep.mubr.f32.mxu0 0.0
          %4168 = vmatmul.mubr.f32.gmra.mrb[0].mxu0 %v4079
          %v4169 = vpop.f32.mrb[0].mxu0
          %v4170 = vadd.f32 %v4101, %v4169
          %v4171 = vpop.f32.mrb[0].mxu0
          %4172 = vdwg.mxu0
          %v4173 = vsel %vm720, %v4170, -inf
          %4174 = vmax.xlane.f32.xlu0 %v4173
          %v4175 = vpop.xlane.xlu0 %4174
          %v4176 = vsub.f32 %v4170, %v4175
          %v4177 = vmul.f32 %v4176, 1.442695
          %v4178 = vpow.pop %v4177
          %v4179 = vsel %vm720, %v4178, 0.0
          %4180 = vadd.xlane.f32.xlu0 %v4179
          %v4181 = vpop.xlane.xlu0 %4180
          %v4182 = vrcp.pop %v4181
          %v4183 = vmul.f32 %v4178, %v4182
          %4184 = vst [vmem:[%s343] sm:$0x3] %v4183
        $region52: #{tpu_custom_call.1} parent=43 // pred_fallthru
          _
        %s4185 = sand.u32 %s207, 1
        %s4186 = scalar_lea.sflag [#allocation4], %s4185
        %s4187 = sand.u32 %s207, 1
        %s4188 = smul.addr %s4187, 2
        %s4189 = scalar_lea.vmem [#allocation3], %s4188
        // Predicated region
        $region53: #{tpu_custom_call.1} parent=43 // pred_check
          %p4190 = pneg %p217
        $region54: #{tpu_custom_call.1} parent=43 // pred_check_branch
          %4192 = sbr.rel (%p4190) target = $region56
        $region55: #{tpu_custom_call.1} parent=43 // pred_region
          %s4194 = ssub.s32 32, 32
          %4195 = vsyncadd %s4186, %s4194
          %s4196 = smul.addr %s25, 32
          %s4197 = scalar_lea.hbm %s6, %s4196
          %s4199 = sshll.u32 %s4189, 4
          %s4200 = int_to_ptr.vmem [resolvable:$true] %s4199
          %4202 = dma.vmem_to_hbm [thread:$0]  %s4200, 32, %s4197, %s4186
        $region56: #{tpu_custom_call.1} parent=43 // pred_fallthru
          _
      $region44: #{tpu_custom_call.1} parent=5 // pred_fallthru
        _
      %p4203 = scmp.le.s32.totalorder 2, %s15
      // Predicated region
      $region57: #{tpu_custom_call.1} parent=5 // pred_check
        %p4204 = pneg %p4203
      $region58: #{tpu_custom_call.1} parent=5 // pred_check_branch
        %4206 = sbr.rel (%p4204) target = $region60
      $region59: #{tpu_custom_call.1} parent=5 // pred_region
        %s4207 = ssub.s32 %s15, 2
        // Predicated region
        $region61: #{tpu_custom_call.1} parent=59 // pred_check
          %p4208 = pneg %p223
        $region62: #{tpu_custom_call.1} parent=59 // pred_check_branch
          %4210 = sbr.rel (%p4208) target = $region64
        $region63: #{tpu_custom_call.1} parent=59 // pred_region
          %s4211 = sand.u32 %s208, 1
          %s4212 = scalar_lea.sflag [#allocation4], %s4211
          %s4213 = sand.u32 %s208, 1
          %s4214 = smul.addr %s4213, 2
          %s4215 = scalar_lea.vmem [#allocation3], %s4214
          %4216 = dma.done %s4212, 32
        $region64: #{tpu_custom_call.1} parent=59 // pred_fallthru
          _
      $region60: #{tpu_custom_call.1} parent=5 // pred_fallthru
        _
    $region6: #{tpu_custom_call.1} parent=1 // loop_footer
      %s19 = sadd.s32 1, %s15
    $region7: #{tpu_custom_call.1} parent=1 // loop_footer_branch
      %14 = sbr.rel target = $region3
    $region8: #{tpu_custom_call.1} parent=1 // loop_exit
      _
    %4217 = vsyncpa [#allocation4], 1
    %s4218 = scalar_lea.sflag [#allocation4], 1
    %4219 = vsyncpa %s4218, 1

</llo_original>
